<compile_context>
chip_gen: v7x
topology: tpu7x:2x2x1
jax: 0.10.0
libtpu: 0.0.40
codegen_flags: <defaults>
</compile_context>

<pallas_src>
import functools
import math

import jax
import jax.numpy as jnp
from jax.experimental import pallas as pl
from jax.experimental.pallas import tpu as pltpu


def _sigmoid(x):
    return 1.0 / (1.0 + jnp.exp(-x))


def _softplus(x):
    return jnp.maximum(x, 0.0) + jnp.log(1.0 + jnp.exp(-jnp.abs(x)))


def _mamba2_kernel(u_ref, pos_ref, wzxbc_ref, wdt_ref, convw_ref, convb_ref,
                   dtb_ref, a_ref, drep_ref, rmsw_ref, o_ref, y_scr, *,
                   nheads, headdim, d_state, d_conv, seq_len, batch_block, eps):
    f32 = jnp.float32
    bf16 = jnp.bfloat16
    HI = jax.lax.Precision.HIGHEST
    L = seq_len
    d_ssm = nheads * headdim
    d_inner = d_ssm

    u = u_ref[...].astype(f32)                       # (rows, d_model), rows = batch_block*L
    pos_in = pos_ref[...]                            # (rows, 1) int32: position within its sequence

    # ---- fused in_proj: ONE bf16 MXU matmul for the z|x|B|C columns ----
    zxbc = jnp.dot(u.astype(bf16), wzxbc_ref[...],
                   preferred_element_type=f32)       # (rows, d_inner + conv_dim)
    # dt projection stays f32/HIGHEST: tiny (N = nheads) and its error is
    # amplified through exp(cumsum(dt * A)).
    dt_raw = jnp.dot(u, wdt_ref[...], preferred_element_type=f32,
                     precision=HI)                   # (rows, nheads)

    z = zxbc[:, :d_inner]                            # (rows, d_ssm)
    xBC = zxbc[:, d_inner:]                          # (rows, conv_dim)

    # ---- depthwise causal conv + bias + SiLU on the batch-flattened rows ----
    # tap with shift k reads row r-k of the SAME sequence; the (pos_in >= k)
    # mask zeroes reads that would cross a sequence boundary (== zero padding).
    # TODO(synk): swap jnp.roll (slices+concat) for pltpu.roll(axis=0) to push
    # these shifts onto the otherwise idle XLU slot at production L.
    w = convw_ref[...]                               # (d_conv, conv_dim)
    acc = xBC * w[d_conv - 1:d_conv, :]              # shift-0 tap
    for k in range(1, d_conv):
        shifted = jnp.where(pos_in >= k, jnp.roll(xBC, k, axis=0), 0.0)
        acc = acc + shifted * w[d_conv - 1 - k:d_conv - k, :]
    acc = acc + convb_ref[...]
    xBC_a = acc * _sigmoid(acc)                      # SiLU

    x_part = xBC_a[:, :d_ssm]                        # (rows, d_ssm)
    B_part = xBC_a[:, d_ssm:d_ssm + d_state]         # (rows, d_state)
    C_part = xBC_a[:, d_ssm + d_state:]              # (rows, d_state)

    # ---- dt = softplus(dt + dt_bias);  A = -exp(A_log) precomputed in wrapper ----
    dt_sp = _softplus(dt_raw + dtb_ref[...])         # (rows, nheads)
    dtA = dt_sp * a_ref[...]                         # (rows, nheads)

    # ---- exact-f32 segmented cumulative decay: log-step scan (VPU shift+add),
    # sequences stay independent via the same in-sequence-position mask ----
    cum = dtA
    shift = 1
    while shift < L:
        cum = cum + jnp.where(pos_in >= shift, jnp.roll(cum, shift, axis=0), 0.0)
        shift *= 2

    # (nheads, rows) orientation of cum, derived once.  A tiny exact identity
    # contraction on the MXU (same 'id,rd->ir' pattern as the G matmul); this
    # is the robust-lowering equivalent of jnp.transpose(cum) on the XLU.
    eyeH = (jax.lax.broadcasted_iota(jnp.int32, (nheads, nheads), 0) ==
            jax.lax.broadcasted_iota(jnp.int32, (nheads, nheads), 1)).astype(f32)
    cumT = jax.lax.dot_general(eyeH, cum, (((1,), (1,)), ((), ())),
                               preferred_element_type=f32, precision=HI)

    # ---- causal mask, built once per grid step ----
    ti = jax.lax.broadcasted_iota(jnp.int32, (L, L), 0)
    tj = jax.lax.broadcasted_iota(jnp.int32, (L, L), 1)
    causal = tj <= ti                                # [t, s]: s <= t

    # ---- SSD single-chunk quadratic form, per sequence / per head ----
    # TODO(synk): for seqlen > chunk_size add a second ("arbitrary") grid axis
    # with an inter-chunk state carry; at production nheads (32-80) convert the
    # head loop to lax.fori_loop over a head-major scratch (or a head grid
    # axis, which also feeds v7x's second TensorCore) so the (L,L) temps have
    # bounded live ranges.
    for b in range(batch_block):
        r0 = b * L
        B_b = B_part[r0:r0 + L, :]
        C_b = C_part[r0:r0 + L, :]
        # G[t, s] = C_t . B_s, shared across heads (ngroups == 1)
        G = jax.lax.dot_general(C_b.astype(bf16), B_b.astype(bf16),
                                (((1,), (1,)), ((), ())),
                                preferred_element_type=f32)      # (L, L)
        for h in range(nheads):
            col = cum[r0:r0 + L, h:h + 1]                        # (L, 1)
            row = cumT[h:h + 1, r0:r0 + L]                       # (1, L)
            logdecay = jnp.where(causal, col - row, -1e30)       # subtract-then-exp (stable)
            M = G * jnp.exp(logdecay)                            # (L, L), zero above diagonal
            x_h = x_part[r0:r0 + L, h * headdim:(h + 1) * headdim]
            xdt_h = x_h * dt_sp[r0:r0 + L, h:h + 1]
            y_scr[r0:r0 + L, h * headdim:(h + 1) * headdim] = jnp.dot(
                M.astype(bf16), xdt_h.astype(bf16), preferred_element_type=f32)

    # ---- D skip + gated RMSNorm (norm_before_gate=False), one dense store ----
    y = y_scr[...] + x_part * drep_ref[...]          # D repeated per head in wrapper
    yg = y * (z * _sigmoid(z))                       # y * silu(z)
    var = jnp.mean(yg * yg, axis=1, keepdims=True)
    o_ref[...] = (yg * jax.lax.rsqrt(var + eps) * rmsw_ref[...]).astype(o_ref.dtype)


def mixer_mamba2_forward(u, W_in, conv_w, conv_b, dt_bias, A_log, D, rms_w,
                         *, d_inner, d_ssm, d_state, ngroups, nheads, headdim,
                         d_conv, eps=1e-5, batch_block=None):
    Bsz, L, d_model = u.shape
    assert d_ssm == d_inner and ngroups == 1
    conv_dim = d_ssm + 2 * ngroups * d_state
    f32, bf16 = jnp.float32, jnp.bfloat16

    if batch_block is None:
        # Fold several sequences into the MXU M dimension (~256 rows for the
        # v6e/v7x 256-deep MXU; v5e already saturates at 128).
        batch_block = 1
        for cand in range(1, Bsz + 1):
            if Bsz % cand == 0 and cand * L <= max(L, 256):
                batch_block = cand
    assert Bsz % batch_block == 0
    rows = batch_block * L

    # Merged z|x|B|C in_proj columns as one bf16 MXU operand; the tiny dt block
    # stays f32 (fed to a HIGHEST matmul in-kernel).
    W_zxbc = W_in[:, :d_inner + conv_dim].astype(bf16)           # (d_model, d_inner+conv_dim)
    W_dt = W_in[:, d_inner + conv_dim:].astype(f32)              # (d_model, nheads)
    A = -jnp.exp(A_log.astype(f32))                              # (1, nheads), precomputed
    D_rep = jnp.repeat(D[0].astype(f32), headdim)[None, :]       # (1, d_ssm), precomputed
    pos_in = (jnp.arange(rows, dtype=jnp.int32) % L).reshape(rows, 1)

    u_flat = u.reshape(Bsz * L, d_model)
    params = (pos_in, W_zxbc, W_dt, conv_w.astype(f32), conv_b.astype(f32),
              dt_bias.astype(f32), A, D_rep, rms_w.astype(f32))

    kernel = functools.partial(
        _mamba2_kernel, nheads=nheads, headdim=headdim, d_state=d_state,
        d_conv=d_conv, seq_len=L, batch_block=batch_block, eps=eps)

    def const2d(p):
        # Constant-index params: DMA'd once.
        # TODO(synk): at production d_model, K-tile the in_proj weight over an
        # "arbitrary" grid axis (or pipeline_mode=pl.Buffered(1)) and set
        # vmem_limit_bytes against the v7x 64 MiB per-core VMEM budget.
        return pl.BlockSpec(p.shape, lambda g: (0, 0))

    out_flat = pl.pallas_call(
        kernel,
        out_shape=jax.ShapeDtypeStruct((Bsz * L, d_ssm), jnp.float32),
        grid=(Bsz // batch_block,),
        in_specs=[pl.BlockSpec((rows, d_model), lambda g: (g, 0))]
                 + [const2d(p) for p in params],
        out_specs=pl.BlockSpec((rows, d_ssm), lambda g: (g, 0)),
        scratch_shapes=[pltpu.VMEM((rows, d_ssm), jnp.float32)],
        compiler_params=pltpu.CompilerParams(dimension_semantics=("parallel",)),
    )(u_flat, *params)
    return out_flat.reshape(Bsz, L, d_ssm)


def mamba2_reference(u, W_in, conv_w, conv_b, dt_bias, A_log, D, rms_w,
                     *, d_inner, d_ssm, d_state, ngroups, nheads, headdim,
                     d_conv, eps=1e-5):
    """Pure-JAX f32 reference: sequential selective-state-space recurrence."""
    Bsz, L, _ = u.shape
    conv_dim = d_ssm + 2 * ngroups * d_state
    zxbcdt = jnp.einsum("bld,de->ble", u, W_in, precision="highest")
    z = zxbcdt[..., :d_inner]
    xBC = zxbcdt[..., d_inner:d_inner + conv_dim]
    dt = zxbcdt[..., d_inner + conv_dim:]
    xp = jnp.pad(xBC, ((0, 0), (d_conv - 1, 0), (0, 0)))
    conv_out = sum(xp[:, k:k + L, :] * conv_w[k][None, None, :] for k in range(d_conv))
    conv_out = conv_out + conv_b[0][None, None, :]
    xBC_a = jax.nn.silu(conv_out)
    x = xBC_a[..., :d_ssm]
    Bm = xBC_a[..., d_ssm:d_ssm + d_state]
    Cm = xBC_a[..., d_ssm + d_state:]
    dt_sp = jax.nn.softplus(dt + dt_bias[0])
    A = -jnp.exp(A_log[0])                                  # (nheads,)
    xh = x.reshape(Bsz, L, nheads, headdim)

    def step(state, inp):
        x_t, B_t, C_t, dt_t = inp
        dA = jnp.exp(dt_t * A)                              # (Bsz, nheads)
        state = (state * dA[..., None, None]
                 + (dt_t[..., None] * x_t)[..., None] * B_t[:, None, None, :])
        y_t = jnp.sum(state * C_t[:, None, None, :], axis=-1)
        return state, y_t

    init = jnp.zeros((Bsz, nheads, headdim, d_state), jnp.float32)
    xs = (jnp.swapaxes(xh, 0, 1), jnp.swapaxes(Bm, 0, 1),
          jnp.swapaxes(Cm, 0, 1), jnp.swapaxes(dt_sp, 0, 1))
    _, ys = jax.lax.scan(step, init, xs)
    ys = jnp.swapaxes(ys, 0, 1).reshape(Bsz, L, d_ssm)
    y = ys + x * jnp.repeat(D[0], headdim)[None, None, :]
    yg = y * jax.nn.silu(z)
    var = jnp.mean(yg * yg, axis=-1, keepdims=True)
    return yg * jax.lax.rsqrt(var + eps) * rms_w[0]


if __name__ == "__main__":
    # NanoConfig-equivalent small configuration.
    d_model, d_state, d_conv, expand, headdim, ngroups = 32, 16, 4, 2, 16, 1
    d_inner = expand * d_model            # 64
    d_ssm = d_inner
    nheads = d_ssm // headdim             # 4
    conv_dim = d_ssm + 2 * ngroups * d_state      # 96
    d_in_proj = 2 * d_inner + 2 * ngroups * d_state + nheads   # 164
    Bsz, L = 2, 16
    dt_min, dt_max, dt_init_floor = 0.001, 0.1, 1e-4

    key = jax.random.PRNGKey(0)
    k_u, k_w, k_cw, k_cb, k_dt, k_a = jax.random.split(key, 6)

    u = jax.random.normal(k_u, (Bsz, L, d_model), dtype=jnp.float32)

    # Deterministic parameter init (shapes follow the module's __init__).
    W_in = (jax.random.normal(k_w, (d_model, d_in_proj), jnp.float32) * 0.02)   # in_proj.weight.T
    conv_w = (jax.random.normal(k_cw, (d_conv, conv_dim), jnp.float32)
              * (1.0 / math.sqrt(d_conv)))                                       # conv1d.weight (d,1,w) -> (w,d)
    conv_b = jax.random.normal(k_cb, (1, conv_dim), jnp.float32) * 0.01          # conv1d.bias
    dt = jnp.exp(jax.random.uniform(k_dt, (nheads,), jnp.float32)
                 * (math.log(dt_max) - math.log(dt_min)) + math.log(dt_min))
    dt = jnp.maximum(dt, dt_init_floor)
    dt_bias = (dt + jnp.log(-jnp.expm1(-dt))).reshape(1, nheads)                 # inv softplus
    A_init = jax.random.uniform(k_a, (nheads,), jnp.float32, minval=1.0, maxval=16.0)
    A_log = jnp.log(A_init).reshape(1, nheads)
    D = jnp.ones((1, nheads), jnp.float32)
    rms_w = jnp.ones((1, d_ssm), jnp.float32)                                    # RMSNormGated weight

    cfg = dict(d_inner=d_inner, d_ssm=d_ssm, d_state=d_state, ngroups=ngroups,
               nheads=nheads, headdim=headdim, d_conv=d_conv, eps=1e-5)

    out = mixer_mamba2_forward(u, W_in, conv_w, conv_b, dt_bias, A_log, D, rms_w, **cfg)
    out = jax.block_until_ready(out)

    ref = mamba2_reference(u, W_in, conv_w, conv_b, dt_bias, A_log, D, rms_w, **cfg)
    assert out.shape == (Bsz, L, d_ssm), out.shape
    # bf16 MXU operands (f32 accumulation) vs an exact f32 reference -> ~1-2%
    # relative error on the unit-scale normalized output.
    err = float(jnp.max(jnp.abs(out - ref)))
    if not jnp.allclose(out, ref, atol=5e-2, rtol=5e-2):
        raise SystemExit(f"mismatch vs reference, max abs err = {err}")
    print("KERNEL_OK")
</pallas_src>

<mosaic_0001>
module attributes {stable_mosaic.version = 11 : i64} {
  func.func @_mamba2_kernel(%arg0: i32, %arg1: memref<32x32xf32, #tpu.memory_space<vmem>>, %arg2: memref<32x1xi32, #tpu.memory_space<vmem>>, %arg3: memref<32x160xbf16, #tpu.memory_space<vmem>>, %arg4: memref<32x4xf32, #tpu.memory_space<vmem>>, %arg5: memref<4x96xf32, #tpu.memory_space<vmem>>, %arg6: memref<1x96xf32, #tpu.memory_space<vmem>>, %arg7: memref<1x4xf32, #tpu.memory_space<vmem>>, %arg8: memref<1x4xf32, #tpu.memory_space<vmem>>, %arg9: memref<1x64xf32, #tpu.memory_space<vmem>>, %arg10: memref<1x64xf32, #tpu.memory_space<vmem>>, %arg11: memref<32x64xf32, #tpu.memory_space<vmem>>, %arg12: memref<32x64xf32, #tpu.memory_space<vmem>>) attributes {dimension_semantics = [#tpu.dimension_semantics<parallel>], iteration_bounds = array<i64: 1>, scalar_prefetch = 0 : i64, scratch_operands = 1 : i64, tpu.core_type = #tpu.core_type<tc>, window_params = [{transform_indices = @transform_0, window_bounds = array<i64: 32, 32>}, {pipeline_mode = #tpu.pipeline_mode<synchronous>, transform_indices = @transform_1, window_bounds = array<i64: 32, 1>}, {pipeline_mode = #tpu.pipeline_mode<synchronous>, transform_indices = @transform_2, window_bounds = array<i64: 32, 160>}, {pipeline_mode = #tpu.pipeline_mode<synchronous>, transform_indices = @transform_3, window_bounds = array<i64: 32, 4>}, {pipeline_mode = #tpu.pipeline_mode<synchronous>, transform_indices = @transform_4, window_bounds = array<i64: 4, 96>}, {pipeline_mode = #tpu.pipeline_mode<synchronous>, transform_indices = @transform_5, window_bounds = array<i64: 1, 96>}, {pipeline_mode = #tpu.pipeline_mode<synchronous>, transform_indices = @transform_6, window_bounds = array<i64: 1, 4>}, {pipeline_mode = #tpu.pipeline_mode<synchronous>, transform_indices = @transform_7, window_bounds = array<i64: 1, 4>}, {pipeline_mode = #tpu.pipeline_mode<synchronous>, transform_indices = @transform_8, window_bounds = array<i64: 1, 64>}, {pipeline_mode = #tpu.pipeline_mode<synchronous>, transform_indices = @transform_9, window_bounds = array<i64: 1, 64>}, {transform_indices = @transform_10, window_bounds = array<i64: 32, 64>}]} {
    %c0 = arith.constant 0 : index
    %c0_0 = arith.constant 0 : index
    %0 = vector.load %arg1[%c0, %c0_0] : memref<32x32xf32, #tpu.memory_space<vmem>>, vector<32x32xf32>
    %c0_1 = arith.constant 0 : index
    %c0_2 = arith.constant 0 : index
    %1 = vector.load %arg2[%c0_1, %c0_2] : memref<32x1xi32, #tpu.memory_space<vmem>>, vector<32x1xi32>
    %2 = arith.truncf %0 : vector<32x32xf32> to vector<32x32xbf16>
    %c0_3 = arith.constant 0 : index
    %c0_4 = arith.constant 0 : index
    %3 = vector.load %arg3[%c0_3, %c0_4] : memref<32x160xbf16, #tpu.memory_space<vmem>>, vector<32x160xbf16>
    %cst = arith.constant dense<0.000000e+00> : vector<32x160xf32>
    %4 = tpu.matmul %2, %3, %cst {dimension_numbers = #tpu.dot_dimension_numbers<[1], [0], [0], [1], [0, 0, 1, 1], [], []>} : vector<32x32xbf16>, vector<32x160xbf16>, vector<32x160xf32> -> vector<32x160xf32>
    %c0_5 = arith.constant 0 : index
    %c0_6 = arith.constant 0 : index
    %5 = vector.load %arg4[%c0_5, %c0_6] : memref<32x4xf32, #tpu.memory_space<vmem>>, vector<32x4xf32>
    %cst_7 = arith.constant dense<0.000000e+00> : vector<32x4xf32>
    %6 = tpu.matmul %0, %5, %cst_7 {dimension_numbers = #tpu.dot_dimension_numbers<[1], [0], [0], [1], [0, 0, 1, 1], [], []>, precision = #tpu.contract_precision<fp32>} : vector<32x32xf32>, vector<32x4xf32>, vector<32x4xf32> -> vector<32x4xf32>
    %7 = vector.extract_strided_slice %4 {offsets = [0, 0], sizes = [32, 64], strides = [1, 1]} : vector<32x160xf32> to vector<32x64xf32>
    %8 = vector.extract_strided_slice %4 {offsets = [0, 64], sizes = [32, 96], strides = [1, 1]} : vector<32x160xf32> to vector<32x96xf32>
    %c0_8 = arith.constant 0 : index
    %c0_9 = arith.constant 0 : index
    %9 = vector.load %arg5[%c0_8, %c0_9] : memref<4x96xf32, #tpu.memory_space<vmem>>, vector<4x96xf32>
    %10 = vector.extract_strided_slice %9 {offsets = [3, 0], sizes = [1, 96], strides = [1, 1]} : vector<4x96xf32> to vector<1x96xf32>
    %11 = vector.broadcast %10 : vector<1x96xf32> to vector<32x96xf32>
    %12 = arith.mulf %8, %11 : vector<32x96xf32>
    %c1_i32 = arith.constant 1 : i32
    %13 = vector.broadcast %c1_i32 : i32 to vector<32x1xi32>
    %14 = arith.cmpi sge, %1, %13 : vector<32x1xi32>
    %15 = vector.extract_strided_slice %8 {offsets = [31, 0], sizes = [1, 96], strides = [1, 1]} : vector<32x96xf32> to vector<1x96xf32>
    %16 = vector.extract_strided_slice %8 {offsets = [0, 0], sizes = [31, 96], strides = [1, 1]} : vector<32x96xf32> to vector<31x96xf32>
    %17 = tpu.concatenate %15, %16 in 0 : vector<1x96xf32>, vector<31x96xf32> -> vector<32x96xf32>
    %cst_10 = arith.constant 0.000000e+00 : f32
    %18 = vector.shape_cast %14 : vector<32x1xi1> to vector<32x1xi1>
    %19 = vector.broadcast %18 : vector<32x1xi1> to vector<32x96xi1>
    %20 = vector.broadcast %cst_10 : f32 to vector<32x96xf32>
    %21 = arith.select %19, %17, %20 : vector<32x96xi1>, vector<32x96xf32>
    %22 = vector.extract_strided_slice %9 {offsets = [2, 0], sizes = [1, 96], strides = [1, 1]} : vector<4x96xf32> to vector<1x96xf32>
    %23 = vector.broadcast %22 : vector<1x96xf32> to vector<32x96xf32>
    %24 = arith.mulf %21, %23 : vector<32x96xf32>
    %25 = arith.addf %12, %24 : vector<32x96xf32>
    %c2_i32 = arith.constant 2 : i32
    %26 = vector.broadcast %c2_i32 : i32 to vector<32x1xi32>
    %27 = arith.cmpi sge, %1, %26 : vector<32x1xi32>
    %28 = vector.extract_strided_slice %8 {offsets = [30, 0], sizes = [2, 96], strides = [1, 1]} : vector<32x96xf32> to vector<2x96xf32>
    %29 = vector.extract_strided_slice %8 {offsets = [0, 0], sizes = [30, 96], strides = [1, 1]} : vector<32x96xf32> to vector<30x96xf32>
    %30 = tpu.concatenate %28, %29 in 0 : vector<2x96xf32>, vector<30x96xf32> -> vector<32x96xf32>
    %cst_11 = arith.constant 0.000000e+00 : f32
    %31 = vector.shape_cast %27 : vector<32x1xi1> to vector<32x1xi1>
    %32 = vector.broadcast %31 : vector<32x1xi1> to vector<32x96xi1>
    %33 = vector.broadcast %cst_11 : f32 to vector<32x96xf32>
    %34 = arith.select %32, %30, %33 : vector<32x96xi1>, vector<32x96xf32>
    %35 = vector.extract_strided_slice %9 {offsets = [1, 0], sizes = [1, 96], strides = [1, 1]} : vector<4x96xf32> to vector<1x96xf32>
    %36 = vector.broadcast %35 : vector<1x96xf32> to vector<32x96xf32>
    %37 = arith.mulf %34, %36 : vector<32x96xf32>
    %38 = arith.addf %25, %37 : vector<32x96xf32>
    %c3_i32 = arith.constant 3 : i32
    %39 = vector.broadcast %c3_i32 : i32 to vector<32x1xi32>
    %40 = arith.cmpi sge, %1, %39 : vector<32x1xi32>
    %41 = vector.extract_strided_slice %8 {offsets = [29, 0], sizes = [3, 96], strides = [1, 1]} : vector<32x96xf32> to vector<3x96xf32>
    %42 = vector.extract_strided_slice %8 {offsets = [0, 0], sizes = [29, 96], strides = [1, 1]} : vector<32x96xf32> to vector<29x96xf32>
    %43 = tpu.concatenate %41, %42 in 0 : vector<3x96xf32>, vector<29x96xf32> -> vector<32x96xf32>
    %cst_12 = arith.constant 0.000000e+00 : f32
    %44 = vector.shape_cast %40 : vector<32x1xi1> to vector<32x1xi1>
    %45 = vector.broadcast %44 : vector<32x1xi1> to vector<32x96xi1>
    %46 = vector.broadcast %cst_12 : f32 to vector<32x96xf32>
    %47 = arith.select %45, %43, %46 : vector<32x96xi1>, vector<32x96xf32>
    %48 = vector.extract_strided_slice %9 {offsets = [0, 0], sizes = [1, 96], strides = [1, 1]} : vector<4x96xf32> to vector<1x96xf32>
    %49 = vector.broadcast %48 : vector<1x96xf32> to vector<32x96xf32>
    %50 = arith.mulf %47, %49 : vector<32x96xf32>
    %51 = arith.addf %38, %50 : vector<32x96xf32>
    %c0_13 = arith.constant 0 : index
    %c0_14 = arith.constant 0 : index
    %52 = vector.load %arg6[%c0_13, %c0_14] : memref<1x96xf32, #tpu.memory_space<vmem>>, vector<1x96xf32>
    %53 = vector.broadcast %52 : vector<1x96xf32> to vector<32x96xf32>
    %54 = arith.addf %51, %53 : vector<32x96xf32>
    %cst_15 = arith.constant 0.000000e+00 : f32
    %55 = vector.broadcast %cst_15 : f32 to vector<32x96xf32>
    %56 = arith.subf %55, %54 : vector<32x96xf32>
    %57 = math.exp %56 : vector<32x96xf32>
    %cst_16 = arith.constant 1.000000e+00 : f32
    %58 = vector.broadcast %cst_16 : f32 to vector<32x96xf32>
    %59 = arith.addf %58, %57 : vector<32x96xf32>
    %cst_17 = arith.constant 1.000000e+00 : f32
    %60 = vector.broadcast %cst_17 : f32 to vector<32x96xf32>
    %61 = arith.divf %60, %59 : vector<32x96xf32>
    %62 = arith.mulf %54, %61 : vector<32x96xf32>
    %63 = vector.extract_strided_slice %62 {offsets = [0, 0], sizes = [32, 64], strides = [1, 1]} : vector<32x96xf32> to vector<32x64xf32>
    %64 = vector.extract_strided_slice %62 {offsets = [0, 64], sizes = [32, 16], strides = [1, 1]} : vector<32x96xf32> to vector<32x16xf32>
    %65 = vector.extract_strided_slice %62 {offsets = [0, 80], sizes = [32, 16], strides = [1, 1]} : vector<32x96xf32> to vector<32x16xf32>
    %c0_18 = arith.constant 0 : index
    %c0_19 = arith.constant 0 : index
    %66 = vector.load %arg7[%c0_18, %c0_19] : memref<1x4xf32, #tpu.memory_space<vmem>>, vector<1x4xf32>
    %67 = vector.broadcast %66 : vector<1x4xf32> to vector<32x4xf32>
    %68 = arith.addf %6, %67 : vector<32x4xf32>
    %cst_20 = arith.constant 0.000000e+00 : f32
    %69 = vector.broadcast %cst_20 : f32 to vector<32x4xf32>
    %70 = arith.maximumf %68, %69 : vector<32x4xf32>
    %71 = math.absf %68 : vector<32x4xf32>
    %cst_21 = arith.constant 0.000000e+00 : f32
    %72 = vector.broadcast %cst_21 : f32 to vector<32x4xf32>
    %73 = arith.subf %72, %71 : vector<32x4xf32>
    %74 = math.exp %73 : vector<32x4xf32>
    %cst_22 = arith.constant 1.000000e+00 : f32
    %75 = vector.broadcast %cst_22 : f32 to vector<32x4xf32>
    %76 = arith.addf %75, %74 : vector<32x4xf32>
    %77 = math.log %76 : vector<32x4xf32>
    %78 = arith.addf %70, %77 : vector<32x4xf32>
    %c0_23 = arith.constant 0 : index
    %c0_24 = arith.constant 0 : index
    %79 = vector.load %arg8[%c0_23, %c0_24] : memref<1x4xf32, #tpu.memory_space<vmem>>, vector<1x4xf32>
    %80 = vector.broadcast %79 : vector<1x4xf32> to vector<32x4xf32>
    %81 = arith.mulf %78, %80 : vector<32x4xf32>
    %c1_i32_25 = arith.constant 1 : i32
    %82 = vector.broadcast %c1_i32_25 : i32 to vector<32x1xi32>
    %83 = arith.cmpi sge, %1, %82 : vector<32x1xi32>
    %84 = vector.extract_strided_slice %81 {offsets = [31, 0], sizes = [1, 4], strides = [1, 1]} : vector<32x4xf32> to vector<1x4xf32>
    %85 = vector.extract_strided_slice %81 {offsets = [0, 0], sizes = [31, 4], strides = [1, 1]} : vector<32x4xf32> to vector<31x4xf32>
    %86 = tpu.concatenate %84, %85 in 0 : vector<1x4xf32>, vector<31x4xf32> -> vector<32x4xf32>
    %cst_26 = arith.constant 0.000000e+00 : f32
    %87 = vector.shape_cast %83 : vector<32x1xi1> to vector<32x1xi1>
    %88 = vector.broadcast %87 : vector<32x1xi1> to vector<32x4xi1>
    %89 = vector.broadcast %cst_26 : f32 to vector<32x4xf32>
    %90 = arith.select %88, %86, %89 : vector<32x4xi1>, vector<32x4xf32>
    %91 = arith.addf %81, %90 : vector<32x4xf32>
    %c2_i32_27 = arith.constant 2 : i32
    %92 = vector.broadcast %c2_i32_27 : i32 to vector<32x1xi32>
    %93 = arith.cmpi sge, %1, %92 : vector<32x1xi32>
    %94 = vector.extract_strided_slice %91 {offsets = [30, 0], sizes = [2, 4], strides = [1, 1]} : vector<32x4xf32> to vector<2x4xf32>
    %95 = vector.extract_strided_slice %91 {offsets = [0, 0], sizes = [30, 4], strides = [1, 1]} : vector<32x4xf32> to vector<30x4xf32>
    %96 = tpu.concatenate %94, %95 in 0 : vector<2x4xf32>, vector<30x4xf32> -> vector<32x4xf32>
    %cst_28 = arith.constant 0.000000e+00 : f32
    %97 = vector.shape_cast %93 : vector<32x1xi1> to vector<32x1xi1>
    %98 = vector.broadcast %97 : vector<32x1xi1> to vector<32x4xi1>
    %99 = vector.broadcast %cst_28 : f32 to vector<32x4xf32>
    %100 = arith.select %98, %96, %99 : vector<32x4xi1>, vector<32x4xf32>
    %101 = arith.addf %91, %100 : vector<32x4xf32>
    %c4_i32 = arith.constant 4 : i32
    %102 = vector.broadcast %c4_i32 : i32 to vector<32x1xi32>
    %103 = arith.cmpi sge, %1, %102 : vector<32x1xi32>
    %104 = vector.extract_strided_slice %101 {offsets = [28, 0], sizes = [4, 4], strides = [1, 1]} : vector<32x4xf32> to vector<4x4xf32>
    %105 = vector.extract_strided_slice %101 {offsets = [0, 0], sizes = [28, 4], strides = [1, 1]} : vector<32x4xf32> to vector<28x4xf32>
    %106 = tpu.concatenate %104, %105 in 0 : vector<4x4xf32>, vector<28x4xf32> -> vector<32x4xf32>
    %cst_29 = arith.constant 0.000000e+00 : f32
    %107 = vector.shape_cast %103 : vector<32x1xi1> to vector<32x1xi1>
    %108 = vector.broadcast %107 : vector<32x1xi1> to vector<32x4xi1>
    %109 = vector.broadcast %cst_29 : f32 to vector<32x4xf32>
    %110 = arith.select %108, %106, %109 : vector<32x4xi1>, vector<32x4xf32>
    %111 = arith.addf %101, %110 : vector<32x4xf32>
    %c8_i32 = arith.constant 8 : i32
    %112 = vector.broadcast %c8_i32 : i32 to vector<32x1xi32>
    %113 = arith.cmpi sge, %1, %112 : vector<32x1xi32>
    %114 = vector.extract_strided_slice %111 {offsets = [24, 0], sizes = [8, 4], strides = [1, 1]} : vector<32x4xf32> to vector<8x4xf32>
    %115 = vector.extract_strided_slice %111 {offsets = [0, 0], sizes = [24, 4], strides = [1, 1]} : vector<32x4xf32> to vector<24x4xf32>
    %116 = tpu.concatenate %114, %115 in 0 : vector<8x4xf32>, vector<24x4xf32> -> vector<32x4xf32>
    %cst_30 = arith.constant 0.000000e+00 : f32
    %117 = vector.shape_cast %113 : vector<32x1xi1> to vector<32x1xi1>
    %118 = vector.broadcast %117 : vector<32x1xi1> to vector<32x4xi1>
    %119 = vector.broadcast %cst_30 : f32 to vector<32x4xf32>
    %120 = arith.select %118, %116, %119 : vector<32x4xi1>, vector<32x4xf32>
    %121 = arith.addf %111, %120 : vector<32x4xf32>
    %122 = tpu.iota {dimensions = array<i32: 0>} : vector<4x4xi32>
    %123 = tpu.iota {dimensions = array<i32: 1>} : vector<4x4xi32>
    %124 = arith.cmpi eq, %122, %123 : vector<4x4xi32>
    %125 = arith.extui %124 : vector<4x4xi1> to vector<4x4xi32>
    %126 = arith.sitofp %125 : vector<4x4xi32> to vector<4x4xf32>
    %cst_31 = arith.constant dense<0.000000e+00> : vector<4x32xf32>
    %127 = tpu.matmul %126, %121, %cst_31 {dimension_numbers = #tpu.dot_dimension_numbers<[1], [1], [0], [0], [0, 0, 1, 0], [], []>, precision = #tpu.contract_precision<fp32>} : vector<4x4xf32>, vector<32x4xf32>, vector<4x32xf32> -> vector<4x32xf32>
    %128 = tpu.iota {dimensions = array<i32: 0>} : vector<16x16xi32>
    %129 = tpu.iota {dimensions = array<i32: 1>} : vector<16x16xi32>
    %130 = arith.cmpi sle, %129, %128 : vector<16x16xi32>
    %131 = vector.extract_strided_slice %64 {offsets = [0, 0], sizes = [16, 16], strides = [1, 1]} : vector<32x16xf32> to vector<16x16xf32>
    %132 = vector.extract_strided_slice %65 {offsets = [0, 0], sizes = [16, 16], strides = [1, 1]} : vector<32x16xf32> to vector<16x16xf32>
    %133 = arith.truncf %132 : vector<16x16xf32> to vector<16x16xbf16>
    %134 = arith.truncf %131 : vector<16x16xf32> to vector<16x16xbf16>
    %cst_32 = arith.constant dense<0.000000e+00> : vector<16x16xf32>
    %135 = tpu.matmul %133, %134, %cst_32 {dimension_numbers = #tpu.dot_dimension_numbers<[1], [1], [0], [0], [0, 0, 1, 0], [], []>} : vector<16x16xbf16>, vector<16x16xbf16>, vector<16x16xf32> -> vector<16x16xf32>
    %136 = vector.extract_strided_slice %121 {offsets = [0, 0], sizes = [16, 1], strides = [1, 1]} : vector<32x4xf32> to vector<16x1xf32>
    %137 = vector.extract_strided_slice %127 {offsets = [0, 0], sizes = [1, 16], strides = [1, 1]} : vector<4x32xf32> to vector<1x16xf32>
    %138 = vector.broadcast %136 : vector<16x1xf32> to vector<16x16xf32>
    %139 = vector.broadcast %137 : vector<1x16xf32> to vector<16x16xf32>
    %140 = arith.subf %138, %139 : vector<16x16xf32>
    %cst_33 = arith.constant -1.000000e+30 : f32
    %141 = vector.broadcast %cst_33 : f32 to vector<16x16xf32>
    %142 = arith.select %130, %140, %141 : vector<16x16xi1>, vector<16x16xf32>
    %143 = math.exp %142 : vector<16x16xf32>
    %144 = arith.mulf %135, %143 : vector<16x16xf32>
    %145 = vector.extract_strided_slice %63 {offsets = [0, 0], sizes = [16, 16], strides = [1, 1]} : vector<32x64xf32> to vector<16x16xf32>
    %146 = vector.extract_strided_slice %78 {offsets = [0, 0], sizes = [16, 1], strides = [1, 1]} : vector<32x4xf32> to vector<16x1xf32>
    %147 = vector.broadcast %146 : vector<16x1xf32> to vector<16x16xf32>
    %148 = arith.mulf %145, %147 : vector<16x16xf32>
    %149 = arith.truncf %144 : vector<16x16xf32> to vector<16x16xbf16>
    %150 = arith.truncf %148 : vector<16x16xf32> to vector<16x16xbf16>
    %cst_34 = arith.constant dense<0.000000e+00> : vector<16x16xf32>
    %151 = tpu.matmul %149, %150, %cst_34 {dimension_numbers = #tpu.dot_dimension_numbers<[1], [0], [0], [1], [0, 0, 1, 1], [], []>} : vector<16x16xbf16>, vector<16x16xbf16>, vector<16x16xf32> -> vector<16x16xf32>
    %c0_35 = arith.constant 0 : index
    %c0_36 = arith.constant 0 : index
    %152 = vector.load %arg12[%c0_35, %c0_36] : memref<32x64xf32, #tpu.memory_space<vmem>>, vector<16x16xf32>
    tpu.vector_store %arg12[%c0_35, %c0_36], %151 {strides = array<i32>} : memref<32x64xf32, #tpu.memory_space<vmem>>, vector<16x16xf32>,
    %153 = vector.extract_strided_slice %121 {offsets = [0, 1], sizes = [16, 1], strides = [1, 1]} : vector<32x4xf32> to vector<16x1xf32>
    %154 = vector.extract_strided_slice %127 {offsets = [1, 0], sizes = [1, 16], strides = [1, 1]} : vector<4x32xf32> to vector<1x16xf32>
    %155 = vector.broadcast %153 : vector<16x1xf32> to vector<16x16xf32>
    %156 = vector.broadcast %154 : vector<1x16xf32> to vector<16x16xf32>
    %157 = arith.subf %155, %156 : vector<16x16xf32>
    %cst_37 = arith.constant -1.000000e+30 : f32
    %158 = vector.broadcast %cst_37 : f32 to vector<16x16xf32>
    %159 = arith.select %130, %157, %158 : vector<16x16xi1>, vector<16x16xf32>
    %160 = math.exp %159 : vector<16x16xf32>
    %161 = arith.mulf %135, %160 : vector<16x16xf32>
    %162 = vector.extract_strided_slice %63 {offsets = [0, 16], sizes = [16, 16], strides = [1, 1]} : vector<32x64xf32> to vector<16x16xf32>
    %163 = vector.extract_strided_slice %78 {offsets = [0, 1], sizes = [16, 1], strides = [1, 1]} : vector<32x4xf32> to vector<16x1xf32>
    %164 = vector.broadcast %163 : vector<16x1xf32> to vector<16x16xf32>
    %165 = arith.mulf %162, %164 : vector<16x16xf32>
    %166 = arith.truncf %161 : vector<16x16xf32> to vector<16x16xbf16>
    %167 = arith.truncf %165 : vector<16x16xf32> to vector<16x16xbf16>
    %cst_38 = arith.constant dense<0.000000e+00> : vector<16x16xf32>
    %168 = tpu.matmul %166, %167, %cst_38 {dimension_numbers = #tpu.dot_dimension_numbers<[1], [0], [0], [1], [0, 0, 1, 1], [], []>} : vector<16x16xbf16>, vector<16x16xbf16>, vector<16x16xf32> -> vector<16x16xf32>
    %c0_39 = arith.constant 0 : index
    %c16 = arith.constant 16 : index
    %169 = vector.load %arg12[%c0_39, %c16] : memref<32x64xf32, #tpu.memory_space<vmem>>, vector<16x16xf32>
    tpu.vector_store %arg12[%c0_39, %c16], %168 {strides = array<i32>} : memref<32x64xf32, #tpu.memory_space<vmem>>, vector<16x16xf32>,
    %170 = vector.extract_strided_slice %121 {offsets = [0, 2], sizes = [16, 1], strides = [1, 1]} : vector<32x4xf32> to vector<16x1xf32>
    %171 = vector.extract_strided_slice %127 {offsets = [2, 0], sizes = [1, 16], strides = [1, 1]} : vector<4x32xf32> to vector<1x16xf32>
    %172 = vector.broadcast %170 : vector<16x1xf32> to vector<16x16xf32>
    %173 = vector.broadcast %171 : vector<1x16xf32> to vector<16x16xf32>
    %174 = arith.subf %172, %173 : vector<16x16xf32>
    %cst_40 = arith.constant -1.000000e+30 : f32
    %175 = vector.broadcast %cst_40 : f32 to vector<16x16xf32>
    %176 = arith.select %130, %174, %175 : vector<16x16xi1>, vector<16x16xf32>
    %177 = math.exp %176 : vector<16x16xf32>
    %178 = arith.mulf %135, %177 : vector<16x16xf32>
    %179 = vector.extract_strided_slice %63 {offsets = [0, 32], sizes = [16, 16], strides = [1, 1]} : vector<32x64xf32> to vector<16x16xf32>
    %180 = vector.extract_strided_slice %78 {offsets = [0, 2], sizes = [16, 1], strides = [1, 1]} : vector<32x4xf32> to vector<16x1xf32>
    %181 = vector.broadcast %180 : vector<16x1xf32> to vector<16x16xf32>
    %182 = arith.mulf %179, %181 : vector<16x16xf32>
    %183 = arith.truncf %178 : vector<16x16xf32> to vector<16x16xbf16>
    %184 = arith.truncf %182 : vector<16x16xf32> to vector<16x16xbf16>
    %cst_41 = arith.constant dense<0.000000e+00> : vector<16x16xf32>
    %185 = tpu.matmul %183, %184, %cst_41 {dimension_numbers = #tpu.dot_dimension_numbers<[1], [0], [0], [1], [0, 0, 1, 1], [], []>} : vector<16x16xbf16>, vector<16x16xbf16>, vector<16x16xf32> -> vector<16x16xf32>
    %c0_42 = arith.constant 0 : index
    %c32 = arith.constant 32 : index
    %186 = vector.load %arg12[%c0_42, %c32] : memref<32x64xf32, #tpu.memory_space<vmem>>, vector<16x16xf32>
    tpu.vector_store %arg12[%c0_42, %c32], %185 {strides = array<i32>} : memref<32x64xf32, #tpu.memory_space<vmem>>, vector<16x16xf32>,
    %187 = vector.extract_strided_slice %121 {offsets = [0, 3], sizes = [16, 1], strides = [1, 1]} : vector<32x4xf32> to vector<16x1xf32>
    %188 = vector.extract_strided_slice %127 {offsets = [3, 0], sizes = [1, 16], strides = [1, 1]} : vector<4x32xf32> to vector<1x16xf32>
    %189 = vector.broadcast %187 : vector<16x1xf32> to vector<16x16xf32>
    %190 = vector.broadcast %188 : vector<1x16xf32> to vector<16x16xf32>
    %191 = arith.subf %189, %190 : vector<16x16xf32>
    %cst_43 = arith.constant -1.000000e+30 : f32
    %192 = vector.broadcast %cst_43 : f32 to vector<16x16xf32>
    %193 = arith.select %130, %191, %192 : vector<16x16xi1>, vector<16x16xf32>
    %194 = math.exp %193 : vector<16x16xf32>
    %195 = arith.mulf %135, %194 : vector<16x16xf32>
    %196 = vector.extract_strided_slice %63 {offsets = [0, 48], sizes = [16, 16], strides = [1, 1]} : vector<32x64xf32> to vector<16x16xf32>
    %197 = vector.extract_strided_slice %78 {offsets = [0, 3], sizes = [16, 1], strides = [1, 1]} : vector<32x4xf32> to vector<16x1xf32>
    %198 = vector.broadcast %197 : vector<16x1xf32> to vector<16x16xf32>
    %199 = arith.mulf %196, %198 : vector<16x16xf32>
    %200 = arith.truncf %195 : vector<16x16xf32> to vector<16x16xbf16>
    %201 = arith.truncf %199 : vector<16x16xf32> to vector<16x16xbf16>
    %cst_44 = arith.constant dense<0.000000e+00> : vector<16x16xf32>
    %202 = tpu.matmul %200, %201, %cst_44 {dimension_numbers = #tpu.dot_dimension_numbers<[1], [0], [0], [1], [0, 0, 1, 1], [], []>} : vector<16x16xbf16>, vector<16x16xbf16>, vector<16x16xf32> -> vector<16x16xf32>
    %c0_45 = arith.constant 0 : index
    %c48 = arith.constant 48 : index
    %203 = vector.load %arg12[%c0_45, %c48] : memref<32x64xf32, #tpu.memory_space<vmem>>, vector<16x16xf32>
    tpu.vector_store %arg12[%c0_45, %c48], %202 {strides = array<i32>} : memref<32x64xf32, #tpu.memory_space<vmem>>, vector<16x16xf32>,
    %204 = vector.extract_strided_slice %64 {offsets = [16, 0], sizes = [16, 16], strides = [1, 1]} : vector<32x16xf32> to vector<16x16xf32>
    %205 = vector.extract_strided_slice %65 {offsets = [16, 0], sizes = [16, 16], strides = [1, 1]} : vector<32x16xf32> to vector<16x16xf32>
    %206 = arith.truncf %205 : vector<16x16xf32> to vector<16x16xbf16>
    %207 = arith.truncf %204 : vector<16x16xf32> to vector<16x16xbf16>
    %cst_46 = arith.constant dense<0.000000e+00> : vector<16x16xf32>
    %208 = tpu.matmul %206, %207, %cst_46 {dimension_numbers = #tpu.dot_dimension_numbers<[1], [1], [0], [0], [0, 0, 1, 0], [], []>} : vector<16x16xbf16>, vector<16x16xbf16>, vector<16x16xf32> -> vector<16x16xf32>
    %209 = vector.extract_strided_slice %121 {offsets = [16, 0], sizes = [16, 1], strides = [1, 1]} : vector<32x4xf32> to vector<16x1xf32>
    %210 = vector.extract_strided_slice %127 {offsets = [0, 16], sizes = [1, 16], strides = [1, 1]} : vector<4x32xf32> to vector<1x16xf32>
    %211 = vector.broadcast %209 : vector<16x1xf32> to vector<16x16xf32>
    %212 = vector.broadcast %210 : vector<1x16xf32> to vector<16x16xf32>
    %213 = arith.subf %211, %212 : vector<16x16xf32>
    %cst_47 = arith.constant -1.000000e+30 : f32
    %214 = vector.broadcast %cst_47 : f32 to vector<16x16xf32>
    %215 = arith.select %130, %213, %214 : vector<16x16xi1>, vector<16x16xf32>
    %216 = math.exp %215 : vector<16x16xf32>
    %217 = arith.mulf %208, %216 : vector<16x16xf32>
    %218 = vector.extract_strided_slice %63 {offsets = [16, 0], sizes = [16, 16], strides = [1, 1]} : vector<32x64xf32> to vector<16x16xf32>
    %219 = vector.extract_strided_slice %78 {offsets = [16, 0], sizes = [16, 1], strides = [1, 1]} : vector<32x4xf32> to vector<16x1xf32>
    %220 = vector.broadcast %219 : vector<16x1xf32> to vector<16x16xf32>
    %221 = arith.mulf %218, %220 : vector<16x16xf32>
    %222 = arith.truncf %217 : vector<16x16xf32> to vector<16x16xbf16>
    %223 = arith.truncf %221 : vector<16x16xf32> to vector<16x16xbf16>
    %cst_48 = arith.constant dense<0.000000e+00> : vector<16x16xf32>
    %224 = tpu.matmul %222, %223, %cst_48 {dimension_numbers = #tpu.dot_dimension_numbers<[1], [0], [0], [1], [0, 0, 1, 1], [], []>} : vector<16x16xbf16>, vector<16x16xbf16>, vector<16x16xf32> -> vector<16x16xf32>
    %c16_49 = arith.constant 16 : index
    %c0_50 = arith.constant 0 : index
    %225 = vector.load %arg12[%c16_49, %c0_50] : memref<32x64xf32, #tpu.memory_space<vmem>>, vector<16x16xf32>
    tpu.vector_store %arg12[%c16_49, %c0_50], %224 {strides = array<i32>} : memref<32x64xf32, #tpu.memory_space<vmem>>, vector<16x16xf32>,
    %226 = vector.extract_strided_slice %121 {offsets = [16, 1], sizes = [16, 1], strides = [1, 1]} : vector<32x4xf32> to vector<16x1xf32>
    %227 = vector.extract_strided_slice %127 {offsets = [1, 16], sizes = [1, 16], strides = [1, 1]} : vector<4x32xf32> to vector<1x16xf32>
    %228 = vector.broadcast %226 : vector<16x1xf32> to vector<16x16xf32>
    %229 = vector.broadcast %227 : vector<1x16xf32> to vector<16x16xf32>
    %230 = arith.subf %228, %229 : vector<16x16xf32>
    %cst_51 = arith.constant -1.000000e+30 : f32
    %231 = vector.broadcast %cst_51 : f32 to vector<16x16xf32>
    %232 = arith.select %130, %230, %231 : vector<16x16xi1>, vector<16x16xf32>
    %233 = math.exp %232 : vector<16x16xf32>
    %234 = arith.mulf %208, %233 : vector<16x16xf32>
    %235 = vector.extract_strided_slice %63 {offsets = [16, 16], sizes = [16, 16], strides = [1, 1]} : vector<32x64xf32> to vector<16x16xf32>
    %236 = vector.extract_strided_slice %78 {offsets = [16, 1], sizes = [16, 1], strides = [1, 1]} : vector<32x4xf32> to vector<16x1xf32>
    %237 = vector.broadcast %236 : vector<16x1xf32> to vector<16x16xf32>
    %238 = arith.mulf %235, %237 : vector<16x16xf32>
    %239 = arith.truncf %234 : vector<16x16xf32> to vector<16x16xbf16>
    %240 = arith.truncf %238 : vector<16x16xf32> to vector<16x16xbf16>
    %cst_52 = arith.constant dense<0.000000e+00> : vector<16x16xf32>
    %241 = tpu.matmul %239, %240, %cst_52 {dimension_numbers = #tpu.dot_dimension_numbers<[1], [0], [0], [1], [0, 0, 1, 1], [], []>} : vector<16x16xbf16>, vector<16x16xbf16>, vector<16x16xf32> -> vector<16x16xf32>
    %c16_53 = arith.constant 16 : index
    %c16_54 = arith.constant 16 : index
    %242 = vector.load %arg12[%c16_53, %c16_54] : memref<32x64xf32, #tpu.memory_space<vmem>>, vector<16x16xf32>
    tpu.vector_store %arg12[%c16_53, %c16_54], %241 {strides = array<i32>} : memref<32x64xf32, #tpu.memory_space<vmem>>, vector<16x16xf32>,
    %243 = vector.extract_strided_slice %121 {offsets = [16, 2], sizes = [16, 1], strides = [1, 1]} : vector<32x4xf32> to vector<16x1xf32>
    %244 = vector.extract_strided_slice %127 {offsets = [2, 16], sizes = [1, 16], strides = [1, 1]} : vector<4x32xf32> to vector<1x16xf32>
    %245 = vector.broadcast %243 : vector<16x1xf32> to vector<16x16xf32>
    %246 = vector.broadcast %244 : vector<1x16xf32> to vector<16x16xf32>
    %247 = arith.subf %245, %246 : vector<16x16xf32>
    %cst_55 = arith.constant -1.000000e+30 : f32
    %248 = vector.broadcast %cst_55 : f32 to vector<16x16xf32>
    %249 = arith.select %130, %247, %248 : vector<16x16xi1>, vector<16x16xf32>
    %250 = math.exp %249 : vector<16x16xf32>
    %251 = arith.mulf %208, %250 : vector<16x16xf32>
    %252 = vector.extract_strided_slice %63 {offsets = [16, 32], sizes = [16, 16], strides = [1, 1]} : vector<32x64xf32> to vector<16x16xf32>
    %253 = vector.extract_strided_slice %78 {offsets = [16, 2], sizes = [16, 1], strides = [1, 1]} : vector<32x4xf32> to vector<16x1xf32>
    %254 = vector.broadcast %253 : vector<16x1xf32> to vector<16x16xf32>
    %255 = arith.mulf %252, %254 : vector<16x16xf32>
    %256 = arith.truncf %251 : vector<16x16xf32> to vector<16x16xbf16>
    %257 = arith.truncf %255 : vector<16x16xf32> to vector<16x16xbf16>
    %cst_56 = arith.constant dense<0.000000e+00> : vector<16x16xf32>
    %258 = tpu.matmul %256, %257, %cst_56 {dimension_numbers = #tpu.dot_dimension_numbers<[1], [0], [0], [1], [0, 0, 1, 1], [], []>} : vector<16x16xbf16>, vector<16x16xbf16>, vector<16x16xf32> -> vector<16x16xf32>
    %c16_57 = arith.constant 16 : index
    %c32_58 = arith.constant 32 : index
    %259 = vector.load %arg12[%c16_57, %c32_58] : memref<32x64xf32, #tpu.memory_space<vmem>>, vector<16x16xf32>
    tpu.vector_store %arg12[%c16_57, %c32_58], %258 {strides = array<i32>} : memref<32x64xf32, #tpu.memory_space<vmem>>, vector<16x16xf32>,
    %260 = vector.extract_strided_slice %121 {offsets = [16, 3], sizes = [16, 1], strides = [1, 1]} : vector<32x4xf32> to vector<16x1xf32>
    %261 = vector.extract_strided_slice %127 {offsets = [3, 16], sizes = [1, 16], strides = [1, 1]} : vector<4x32xf32> to vector<1x16xf32>
    %262 = vector.broadcast %260 : vector<16x1xf32> to vector<16x16xf32>
    %263 = vector.broadcast %261 : vector<1x16xf32> to vector<16x16xf32>
    %264 = arith.subf %262, %263 : vector<16x16xf32>
    %cst_59 = arith.constant -1.000000e+30 : f32
    %265 = vector.broadcast %cst_59 : f32 to vector<16x16xf32>
    %266 = arith.select %130, %264, %265 : vector<16x16xi1>, vector<16x16xf32>
    %267 = math.exp %266 : vector<16x16xf32>
    %268 = arith.mulf %208, %267 : vector<16x16xf32>
    %269 = vector.extract_strided_slice %63 {offsets = [16, 48], sizes = [16, 16], strides = [1, 1]} : vector<32x64xf32> to vector<16x16xf32>
    %270 = vector.extract_strided_slice %78 {offsets = [16, 3], sizes = [16, 1], strides = [1, 1]} : vector<32x4xf32> to vector<16x1xf32>
    %271 = vector.broadcast %270 : vector<16x1xf32> to vector<16x16xf32>
    %272 = arith.mulf %269, %271 : vector<16x16xf32>
    %273 = arith.truncf %268 : vector<16x16xf32> to vector<16x16xbf16>
    %274 = arith.truncf %272 : vector<16x16xf32> to vector<16x16xbf16>
    %cst_60 = arith.constant dense<0.000000e+00> : vector<16x16xf32>
    %275 = tpu.matmul %273, %274, %cst_60 {dimension_numbers = #tpu.dot_dimension_numbers<[1], [0], [0], [1], [0, 0, 1, 1], [], []>} : vector<16x16xbf16>, vector<16x16xbf16>, vector<16x16xf32> -> vector<16x16xf32>
    %c16_61 = arith.constant 16 : index
    %c48_62 = arith.constant 48 : index
    %276 = vector.load %arg12[%c16_61, %c48_62] : memref<32x64xf32, #tpu.memory_space<vmem>>, vector<16x16xf32>
    tpu.vector_store %arg12[%c16_61, %c48_62], %275 {strides = array<i32>} : memref<32x64xf32, #tpu.memory_space<vmem>>, vector<16x16xf32>,
    %c0_63 = arith.constant 0 : index
    %c0_64 = arith.constant 0 : index
    %277 = vector.load %arg12[%c0_63, %c0_64] : memref<32x64xf32, #tpu.memory_space<vmem>>, vector<32x64xf32>
    %c0_65 = arith.constant 0 : index
    %c0_66 = arith.constant 0 : index
    %278 = vector.load %arg9[%c0_65, %c0_66] : memref<1x64xf32, #tpu.memory_space<vmem>>, vector<1x64xf32>
    %279 = vector.broadcast %278 : vector<1x64xf32> to vector<32x64xf32>
    %280 = arith.mulf %63, %279 : vector<32x64xf32>
    %281 = arith.addf %277, %280 : vector<32x64xf32>
    %cst_67 = arith.constant 0.000000e+00 : f32
    %282 = vector.broadcast %cst_67 : f32 to vector<32x64xf32>
    %283 = arith.subf %282, %7 : vector<32x64xf32>
    %284 = math.exp %283 : vector<32x64xf32>
    %cst_68 = arith.constant 1.000000e+00 : f32
    %285 = vector.broadcast %cst_68 : f32 to vector<32x64xf32>
    %286 = arith.addf %285, %284 : vector<32x64xf32>
    %cst_69 = arith.constant 1.000000e+00 : f32
    %287 = vector.broadcast %cst_69 : f32 to vector<32x64xf32>
    %288 = arith.divf %287, %286 : vector<32x64xf32>
    %289 = arith.mulf %7, %288 : vector<32x64xf32>
    %290 = arith.mulf %281, %289 : vector<32x64xf32>
    %291 = arith.mulf %290, %290 : vector<32x64xf32>
    %cst_70 = arith.constant dense<0.000000e+00> : vector<32xf32>
    %292 = vector.multi_reduction <add>, %291, %cst_70 [1] : vector<32x64xf32> to vector<32xf32>
    %293 = vector.shape_cast %292 : vector<32xf32> to vector<32x1xf32>
    %cst_71 = arith.constant 6.400000e+01 : f32
    %294 = vector.broadcast %cst_71 : f32 to vector<32x1xf32>
    %295 = arith.divf %293, %294 : vector<32x1xf32>
    %cst_72 = arith.constant 9.99999974E-6 : f32
    %296 = vector.broadcast %cst_72 : f32 to vector<32x1xf32>
    %297 = arith.addf %295, %296 : vector<32x1xf32>
    %298 = math.rsqrt %297 : vector<32x1xf32>
    %299 = vector.broadcast %298 : vector<32x1xf32> to vector<32x64xf32>
    %300 = arith.mulf %290, %299 : vector<32x64xf32>
    %c0_73 = arith.constant 0 : index
    %c0_74 = arith.constant 0 : index
    %301 = vector.load %arg10[%c0_73, %c0_74] : memref<1x64xf32, #tpu.memory_space<vmem>>, vector<1x64xf32>
    %302 = vector.broadcast %301 : vector<1x64xf32> to vector<32x64xf32>
    %303 = arith.mulf %300, %302 : vector<32x64xf32>
    %c0_75 = arith.constant 0 : index
    %c0_76 = arith.constant 0 : index
    %304 = vector.load %arg11[%c0_75, %c0_76] : memref<32x64xf32, #tpu.memory_space<vmem>>, vector<32x64xf32>
    tpu.vector_store %arg11[%c0_75, %c0_76], %303 {strides = array<i32>} : memref<32x64xf32, #tpu.memory_space<vmem>>, vector<32x64xf32>,
    return
  }
  func.func @transform_0(%arg0: i32) -> (i32, i32) {
    %c0_i32 = arith.constant 0 : i32
    %c0_i32_0 = arith.constant 0 : i32
    return %arg0, %c0_i32 : i32, i32
  }
  func.func @transform_1(%arg0: i32) -> (i32, i32) {
    %c0_i32 = arith.constant 0 : i32
    %c0_i32_0 = arith.constant 0 : i32
    %c0_i32_1 = arith.constant 0 : i32
    return %c0_i32, %c0_i32_0 : i32, i32
  }
  func.func @transform_2(%arg0: i32) -> (i32, i32) {
    %c0_i32 = arith.constant 0 : i32
    %c0_i32_0 = arith.constant 0 : i32
    %c0_i32_1 = arith.constant 0 : i32
    return %c0_i32, %c0_i32_0 : i32, i32
  }
  func.func @transform_3(%arg0: i32) -> (i32, i32) {
    %c0_i32 = arith.constant 0 : i32
    %c0_i32_0 = arith.constant 0 : i32
    %c0_i32_1 = arith.constant 0 : i32
    return %c0_i32, %c0_i32_0 : i32, i32
  }
  func.func @transform_4(%arg0: i32) -> (i32, i32) {
    %c0_i32 = arith.constant 0 : i32
    %c0_i32_0 = arith.constant 0 : i32
    %c0_i32_1 = arith.constant 0 : i32
    return %c0_i32, %c0_i32_0 : i32, i32
  }
  func.func @transform_5(%arg0: i32) -> (i32, i32) {
    %c0_i32 = arith.constant 0 : i32
    %c0_i32_0 = arith.constant 0 : i32
    %c0_i32_1 = arith.constant 0 : i32
    return %c0_i32, %c0_i32_0 : i32, i32
  }
  func.func @transform_6(%arg0: i32) -> (i32, i32) {
    %c0_i32 = arith.constant 0 : i32
    %c0_i32_0 = arith.constant 0 : i32
    %c0_i32_1 = arith.constant 0 : i32
    return %c0_i32, %c0_i32_0 : i32, i32
  }
  func.func @transform_7(%arg0: i32) -> (i32, i32) {
    %c0_i32 = arith.constant 0 : i32
    %c0_i32_0 = arith.constant 0 : i32
    %c0_i32_1 = arith.constant 0 : i32
    return %c0_i32, %c0_i32_0 : i32, i32
  }
  func.func @transform_8(%arg0: i32) -> (i32, i32) {
    %c0_i32 = arith.constant 0 : i32
    %c0_i32_0 = arith.constant 0 : i32
    %c0_i32_1 = arith.constant 0 : i32
    return %c0_i32, %c0_i32_0 : i32, i32
  }
  func.func @transform_9(%arg0: i32) -> (i32, i32) {
    %c0_i32 = arith.constant 0 : i32
    %c0_i32_0 = arith.constant 0 : i32
    %c0_i32_1 = arith.constant 0 : i32
    return %c0_i32, %c0_i32_0 : i32, i32
  }
  func.func @transform_10(%arg0: i32) -> (i32, i32) {
    %c0_i32 = arith.constant 0 : i32
    %c0_i32_0 = arith.constant 0 : i32
    return %arg0, %c0_i32 : i32, i32
  }
}

</mosaic_0001>

<llo_original>
// kernel: tpu_custom_call.1
$region0: #{tpu_custom_call.1}
  #allocation0 [shape = 'u32[]', space=smem, size = 0x4, offset = 0x4, fixed_abs, tag = 'smem constant byte address 0x4 - core index']
  #allocation1 [shape = 'u32[144,128]{1,0:T(1,128)}', space=vmem, size = 0x12000, scoped, tag = 'internal scratch']
  #allocation2 [shape = 'f32[32,64]{1,0:T(8,128)}', space=vmem, size = 0x4000, scoped, tag = 'scratch operand']
  %s0 = inlined_call_operand.vmem [shape: f32[32,32], index: 0, kind: input, shape index: {}]
  %s1 = inlined_call_operand.vmem [shape: s32[32,1], index: 1, kind: input, shape index: {}]
  %s2 = inlined_call_operand.vmem [shape: bf16[32,160], index: 2, kind: input, shape index: {}]
  %s3 = inlined_call_operand.vmem [shape: f32[32,4], index: 3, kind: input, shape index: {}]
  %s4 = inlined_call_operand.vmem [shape: f32[4,96], index: 4, kind: input, shape index: {}]
  %s5 = inlined_call_operand.vmem [shape: f32[1,96], index: 5, kind: input, shape index: {}]
  %s6 = inlined_call_operand.vmem [shape: f32[1,4], index: 6, kind: input, shape index: {}]
  %s7 = inlined_call_operand.vmem [shape: f32[1,4], index: 7, kind: input, shape index: {}]
  %s8 = inlined_call_operand.vmem [shape: f32[1,64], index: 8, kind: input, shape index: {}]
  %s9 = inlined_call_operand.vmem [shape: f32[1,64], index: 9, kind: input, shape index: {}]
  %s10 = inlined_call_operand.hbm [shape: f32[32,64], index: 10, kind: output, shape index: {}]
  %s11 = sld [smem:[#allocation0]]
  $region50: #{tpu_custom_call.1} parent=0
    _
  %s13 = ssub.s32 1, %s11
  %s14 = scalar_select 0, %s13, %s11
  $region1: #{tpu_custom_call.1} parent=0
    #allocation3 [shape = 'u8[16384]{0}', space=vmem, size = 0x4000, scoped, tag = 'output window, operand 0, single buffered']
    #allocation4 [shape = 's32[1]{0}', space=sflag, size = 0x4, scoped, tag = 'scoped memory for tpu_custom_call.1']
    %15 = vsyncpa [#allocation4], 0
    // Predicated region
    $region2: #{tpu_custom_call.1} parent=1 // pred_check
      _
    $region3: #{tpu_custom_call.1} parent=1 // pred_check_branch
      %17 = sbr.rel (0) target = $region5
    $region4: #{tpu_custom_call.1} parent=1 // pred_region
      _
    $region5: #{tpu_custom_call.1} parent=1 // pred_fallthru
      _
    // Predicated region
    $region6: #{tpu_custom_call.1} parent=1 // pred_check
      _
    $region7: #{tpu_custom_call.1} parent=1 // pred_check_branch
      %19 = sbr.rel (0) target = $region9
    $region8: #{tpu_custom_call.1} parent=1 // pred_region
      _
    $region9: #{tpu_custom_call.1} parent=1 // pred_fallthru
      _
    // Predicated region
    $region10: #{tpu_custom_call.1} parent=1 // pred_check
      _
    $region11: #{tpu_custom_call.1} parent=1 // pred_check_branch
      %21 = sbr.rel (0) target = $region13
    $region12: #{tpu_custom_call.1} parent=1 // pred_region
      _
    $region13: #{tpu_custom_call.1} parent=1 // pred_fallthru
      _
    // Predicated region
    $region14: #{tpu_custom_call.1} parent=1 // pred_check
      _
    $region15: #{tpu_custom_call.1} parent=1 // pred_check_branch
      %23 = sbr.rel (0) target = $region17
    $region16: #{tpu_custom_call.1} parent=1 // pred_region
      _
    $region17: #{tpu_custom_call.1} parent=1 // pred_fallthru
      _
    // Predicated region
    $region18: #{tpu_custom_call.1} parent=1 // pred_check
      _
    $region19: #{tpu_custom_call.1} parent=1 // pred_check_branch
      %25 = sbr.rel (0) target = $region21
    $region20: #{tpu_custom_call.1} parent=1 // pred_region
      _
    $region21: #{tpu_custom_call.1} parent=1 // pred_fallthru
      _
    // Predicated region
    $region22: #{tpu_custom_call.1} parent=1 // pred_check
      _
    $region23: #{tpu_custom_call.1} parent=1 // pred_check_branch
      %27 = sbr.rel (0) target = $region25
    $region24: #{tpu_custom_call.1} parent=1 // pred_region
      _
    $region25: #{tpu_custom_call.1} parent=1 // pred_fallthru
      _
    // Predicated region
    $region26: #{tpu_custom_call.1} parent=1 // pred_check
      _
    $region27: #{tpu_custom_call.1} parent=1 // pred_check_branch
      %29 = sbr.rel (0) target = $region29
    $region28: #{tpu_custom_call.1} parent=1 // pred_region
      _
    $region29: #{tpu_custom_call.1} parent=1 // pred_fallthru
      _
    // Predicated region
    $region30: #{tpu_custom_call.1} parent=1 // pred_check
      _
    $region31: #{tpu_custom_call.1} parent=1 // pred_check_branch
      %31 = sbr.rel (0) target = $region33
    $region32: #{tpu_custom_call.1} parent=1 // pred_region
      _
    $region33: #{tpu_custom_call.1} parent=1 // pred_fallthru
      _
    // Predicated region
    $region34: #{tpu_custom_call.1} parent=1 // pred_check
      _
    $region35: #{tpu_custom_call.1} parent=1 // pred_check_branch
      %33 = sbr.rel (0) target = $region37
    $region36: #{tpu_custom_call.1} parent=1 // pred_region
      _
    $region37: #{tpu_custom_call.1} parent=1 // pred_fallthru
      _
    // Predicated region
    $region38: #{tpu_custom_call.1} parent=1 // pred_check
      _
    $region39: #{tpu_custom_call.1} parent=1 // pred_check_branch
      %35 = sbr.rel (0) target = $region41
    $region40: #{tpu_custom_call.1} parent=1 // pred_region
      _
    $region41: #{tpu_custom_call.1} parent=1 // pred_fallthru
      _
    %v37 = vld [vmem:[%s0] sm:$0xff]
    %v38 = vld [vmem:[%s0 + $0x8] sm:$0xff]
    %v39 = vld [vmem:[%s0 + $0x10] sm:$0xff]
    %v40 = vld [vmem:[%s0 + $0x18] sm:$0xff]
    %v41 = vld [vmem:[%s1] sm:$0xff]
    %v42 = vld [vmem:[%s1 + $0x8] sm:$0xff]
    %v43 = vld [vmem:[%s1 + $0x10] sm:$0xff]
    %v44 = vld [vmem:[%s1 + $0x18] sm:$0xff]
    %v45 = vpack.c.bf16 %v38, %v37
    %v46 = vpack.c.bf16 %v40, %v39
    %v47 = vld [vmem:[%s2] sm:$0xff]
    %v48 = vld [vmem:[%s2 + $0x8] sm:$0xff]
    %v49 = vld [vmem:[%s2 + $0x10] sm:$0xff]
    %v50 = vld [vmem:[%s2 + $0x18] sm:$0xff]
    %v55 = vunpack.c.l.b16 %v47
    %v56 = vunpack.c.h.b16 %v47
    %v57 = vunpack.c.l.b16 %v48
    %v58 = vunpack.c.h.b16 %v48
    %v59 = vunpack.c.l.b16 %v49
    %v60 = vunpack.c.h.b16 %v49
    %v61 = vunpack.c.l.b16 %v50
    %v62 = vunpack.c.h.b16 %v50
    %v63 = vpack.c.b16 %v57, %v55
    %v64 = vpack.c.b16 %v58, %v56
    %v65 = vpack.c.b16 %v61, %v59
    %v66 = vpack.c.b16 %v62, %v60
    %vm71 = vcmask 261120
    %v73 = vsel %vm71, %v45, 0
    %v76 = vsel %vm71, %v46, 0
    %78 = vmatprep.subr.bf16.mxu0 %v64
    %79 = vmatpush1.bf16.msra.mxu0 %v63
    %80 = vmatprep.subr.bf16.mxu0 %v66
    %81 = vmatpush1.bf16.msra.mxu0 %v65
    %82 = vmatprep.subr.bf16.mxu0 0
    %83 = vmatpush1.bf16.msra.mxu0 0
    %84 = vmatprep.subr.bf16.mxu0 0
    %85 = vmatpush1.bf16.msra.mxu0 0
    %86 = vmatprep.subr.bf16.mxu0 0
    %87 = vmatpush1.bf16.msra.mxu0 0
    %88 = vmatprep.subr.bf16.mxu0 0
    %89 = vmatpush1.bf16.msra.mxu0 0
    %90 = vmatprep.subr.bf16.mxu0 0
    %91 = vmatpush1.bf16.msra.mxu0 0
    %92 = vmatprep.subr.bf16.mxu0 0
    %93 = vmatpush1.bf16.msra.mxu0 0
    %94 = vmatprep.subr.bf16.mxu0 0
    %95 = vmatpush1.bf16.msra.mxu0 0
    %96 = vmatprep.subr.bf16.mxu0 0
    %97 = vmatpush1.bf16.msra.mxu0 0
    %98 = vmatprep.subr.bf16.mxu0 0
    %99 = vmatpush1.bf16.msra.mxu0 0
    %100 = vmatprep.subr.bf16.mxu0 0
    %101 = vmatpush1.bf16.msra.mxu0 0
    %102 = vmatprep.subr.bf16.mxu0 0
    %103 = vmatpush1.bf16.msra.mxu0 0
    %104 = vmatprep.subr.bf16.mxu0 0
    %105 = vmatpush1.bf16.msra.mxu0 0
    %106 = vmatprep.subr.bf16.mxu0 0
    %107 = vmatpush1.bf16.msra.mxu0 0
    %108 = vmatprep.subr.bf16.mxu0 0
    %109 = vmatpush1.bf16.msra.mxu0 0
    %110 = vmatprep.mubr.bf16.mxu0 0
    %111 = vmatmul.mubr.bf16.gmra.mrb[0].mxu0 %v73
    %v112 = vpop.f32.mrb[0].mxu0
    %v113 = vadd.f32 0.0, %v112
    %v114 = vpop.f32.mrb[0].mxu0
    %v115 = vadd.f32 0.0, %v114
    %v116 = vpop.f32.mrb[0].mxu0
    %v117 = vadd.f32 0.0, %v116
    %v118 = vpop.f32.mrb[0].mxu0
    %v119 = vadd.f32 0.0, %v118
    %120 = vmatprep.mubr.bf16.mxu0 0
    %121 = vmatmul.mubr.bf16.gmra.mrb[0].mxu0 %v76
    %v122 = vpop.f32.mrb[0].mxu0
    %v123 = vadd.f32 0.0, %v122
    %v124 = vpop.f32.mrb[0].mxu0
    %v125 = vadd.f32 0.0, %v124
    %v126 = vpop.f32.mrb[0].mxu0
    %v127 = vadd.f32 0.0, %v126
    %v128 = vpop.f32.mrb[0].mxu0
    %v129 = vadd.f32 0.0, %v128
    %130 = vdwg.mxu0
    %v131 = vld [vmem:[%s3] sm:$0xff]
    %v132 = vld [vmem:[%s3 + $0x8] sm:$0xff]
    %v133 = vld [vmem:[%s3 + $0x10] sm:$0xff]
    %v134 = vld [vmem:[%s3 + $0x18] sm:$0xff]
    %v135 = vld [vmem:[%s4] sm:$0xf]
    %v136 = vlaneseq
    %v137 = vshrl.u32 %v136, 7
    %v138 = vsub.s32 3, %v137
    %v139 = vrot.slane %v135, %v138
    %141 = vrot.lane.b32.xlu0 %v139, 64
    %v142 = vpop.permute.xlu0 %141
    %v144 = vmul.f32 %v113, %v142
    %v145 = vmul.f32 %v115, %v142
    %v146 = vmul.f32 %v117, %v142
    %v147 = vmul.f32 %v119, %v142
    %v148 = vmul.f32 %v123, %v142
    %v149 = vmul.f32 %v125, %v142
    %v150 = vmul.f32 %v127, %v142
    %v151 = vmul.f32 %v129, %v142
    %vm152 = vcmp.ge.s32.totalorder %v41, 1
    %vm153 = vcmp.ge.s32.totalorder %v42, 1
    %vm154 = vcmp.ge.s32.totalorder %v43, 1
    %vm155 = vcmp.ge.s32.totalorder %v44, 1
    %v158 = vrot.slane %v127, 7
    %v159 = vrot.slane %v129, 7
    %vm168 = vcmask 1040384
    %v169 = vrot.slane %v113, 7
    %v170 = vrot.slane %v115, 7
    %v171 = vrot.slane %v117, 7
    %v172 = vsel %vm168, %v169, %v171
    %v173 = vrot.slane %v119, 7
    %v174 = vsel %vm168, %v170, %v173
    %v175 = vrot.slane %v123, 7
    %v176 = vsel %vm168, %v171, %v175
    %v177 = vrot.slane %v125, 7
    %v178 = vsel %vm168, %v173, %v177
    %v179 = vsel %vm168, %v175, %v158
    %v180 = vsel %vm168, %v177, %v159
    %v189 = vsel %vm168, %v158, %v169
    %v190 = vsel %vm168, %v159, %v170
    %v191 = vsel %vm152, 1, 0
    %v192 = vsel %vm153, 1, 0
    %v193 = vsel %vm154, 1, 0
    %v194 = vsel %vm155, 1, 0
    %195 = vset.pattern.permute.xlu0 0
    %196 = vperm.xlu0 %195, %v191
    %v197 = vpop.permute.xlu0 %196
    %198 = vset.pattern.permute.xlu0 0
    %199 = vperm.xlu0 %198, %v192
    %v200 = vpop.permute.xlu0 %199
    %201 = vset.pattern.permute.xlu0 0
    %202 = vperm.xlu0 %201, %v193
    %v203 = vpop.permute.xlu0 %202
    %204 = vset.pattern.permute.xlu0 0
    %205 = vperm.xlu0 %204, %v194
    %v206 = vpop.permute.xlu0 %205
    %vm207 = vcmp.eq.s32.totalorder %v197, 1
    %vm208 = vcmp.eq.s32.totalorder %v200, 1
    %vm209 = vcmp.eq.s32.totalorder %v203, 1
    %vm210 = vcmp.eq.s32.totalorder %v206, 1
    %v211 = vsel %vm207, %v189, 0.0
    %v212 = vsel %vm207, %v190, 0.0
    %v213 = vsel %vm208, %v172, 0.0
    %v214 = vsel %vm208, %v174, 0.0
    %v215 = vsel %vm209, %v176, 0.0
    %v216 = vsel %vm209, %v178, 0.0
    %v217 = vsel %vm210, %v179, 0.0
    %v218 = vsel %vm210, %v180, 0.0
    %v219 = vlaneseq
    %v220 = vshrl.u32 %v219, 7
    %v221 = vsub.s32 2, %v220
    %v222 = vrot.slane %v135, %v221
    %224 = vrot.lane.b32.xlu0 %v222, 64
    %v225 = vpop.permute.xlu0 %224
    %v227 = vmul.f32 %v211, %v225
    %v228 = vmul.f32 %v212, %v225
    %v229 = vmul.f32 %v213, %v225
    %v230 = vmul.f32 %v214, %v225
    %v231 = vmul.f32 %v215, %v225
    %v232 = vmul.f32 %v216, %v225
    %v233 = vmul.f32 %v217, %v225
    %v234 = vmul.f32 %v218, %v225
    %v235 = vadd.f32 %v144, %v227
    %v236 = vadd.f32 %v145, %v228
    %v237 = vadd.f32 %v146, %v229
    %v238 = vadd.f32 %v147, %v230
    %v239 = vadd.f32 %v148, %v231
    %v240 = vadd.f32 %v149, %v232
    %v241 = vadd.f32 %v150, %v233
    %v242 = vadd.f32 %v151, %v234
    %vm243 = vcmp.ge.s32.totalorder %v41, 2
    %vm244 = vcmp.ge.s32.totalorder %v42, 2
    %vm245 = vcmp.ge.s32.totalorder %v43, 2
    %vm246 = vcmp.ge.s32.totalorder %v44, 2
    %v247 = vrot.slane %v127, 6
    %v248 = vrot.slane %v129, 6
    %vm251 = vcmask 1041408
    %v252 = vrot.slane %v113, 6
    %v253 = vrot.slane %v115, 6
    %v254 = vrot.slane %v117, 6
    %v255 = vsel %vm251, %v252, %v254
    %v256 = vrot.slane %v119, 6
    %v257 = vsel %vm251, %v253, %v256
    %v258 = vrot.slane %v123, 6
    %v259 = vsel %vm251, %v254, %v258
    %v260 = vrot.slane %v125, 6
    %v261 = vsel %vm251, %v256, %v260
    %v262 = vsel %vm251, %v258, %v247
    %v263 = vsel %vm251, %v260, %v248
    %v272 = vsel %vm251, %v247, %v252
    %v273 = vsel %vm251, %v248, %v253
    %v274 = vsel %vm243, 1, 0
    %v275 = vsel %vm244, 1, 0
    %v276 = vsel %vm245, 1, 0
    %v277 = vsel %vm246, 1, 0
    %278 = vset.pattern.permute.xlu0 0
    %279 = vperm.xlu0 %278, %v274
    %v280 = vpop.permute.xlu0 %279
    %281 = vset.pattern.permute.xlu0 0
    %282 = vperm.xlu0 %281, %v275
    %v283 = vpop.permute.xlu0 %282
    %284 = vset.pattern.permute.xlu0 0
    %285 = vperm.xlu0 %284, %v276
    %v286 = vpop.permute.xlu0 %285
    %287 = vset.pattern.permute.xlu0 0
    %288 = vperm.xlu0 %287, %v277
    %v289 = vpop.permute.xlu0 %288
    %vm290 = vcmp.eq.s32.totalorder %v280, 1
    %vm291 = vcmp.eq.s32.totalorder %v283, 1
    %vm292 = vcmp.eq.s32.totalorder %v286, 1
    %vm293 = vcmp.eq.s32.totalorder %v289, 1
    %v294 = vsel %vm290, %v272, 0.0
    %v295 = vsel %vm290, %v273, 0.0
    %v296 = vsel %vm291, %v255, 0.0
    %v297 = vsel %vm291, %v257, 0.0
    %v298 = vsel %vm292, %v259, 0.0
    %v299 = vsel %vm292, %v261, 0.0
    %v300 = vsel %vm293, %v262, 0.0
    %v301 = vsel %vm293, %v263, 0.0
    %v302 = vlaneseq
    %v303 = vshrl.u32 %v302, 7
    %v304 = vsub.s32 1, %v303
    %v305 = vrot.slane %v135, %v304
    %307 = vrot.lane.b32.xlu0 %v305, 64
    %v308 = vpop.permute.xlu0 %307
    %v310 = vmul.f32 %v294, %v308
    %v311 = vmul.f32 %v295, %v308
    %v312 = vmul.f32 %v296, %v308
    %v313 = vmul.f32 %v297, %v308
    %v314 = vmul.f32 %v298, %v308
    %v315 = vmul.f32 %v299, %v308
    %v316 = vmul.f32 %v300, %v308
    %v317 = vmul.f32 %v301, %v308
    %v318 = vadd.f32 %v235, %v310
    %v319 = vadd.f32 %v236, %v311
    %v320 = vadd.f32 %v237, %v312
    %v321 = vadd.f32 %v238, %v313
    %v322 = vadd.f32 %v239, %v314
    %v323 = vadd.f32 %v240, %v315
    %v324 = vadd.f32 %v241, %v316
    %v325 = vadd.f32 %v242, %v317
    %vm326 = vcmp.ge.s32.totalorder %v41, 3
    %vm327 = vcmp.ge.s32.totalorder %v42, 3
    %vm328 = vcmp.ge.s32.totalorder %v43, 3
    %vm329 = vcmp.ge.s32.totalorder %v44, 3
    %v330 = vrot.slane %v127, 5
    %v331 = vrot.slane %v129, 5
    %vm334 = vcmask 1042432
    %v335 = vrot.slane %v113, 5
    %v336 = vrot.slane %v115, 5
    %v337 = vrot.slane %v117, 5
    %v338 = vsel %vm334, %v335, %v337
    %v339 = vrot.slane %v119, 5
    %v340 = vsel %vm334, %v336, %v339
    %v341 = vrot.slane %v123, 5
    %v342 = vsel %vm334, %v337, %v341
    %v343 = vrot.slane %v125, 5
    %v344 = vsel %vm334, %v339, %v343
    %v345 = vsel %vm334, %v341, %v330
    %v346 = vsel %vm334, %v343, %v331
    %v355 = vsel %vm334, %v330, %v335
    %v356 = vsel %vm334, %v331, %v336
    %v357 = vsel %vm326, 1, 0
    %v358 = vsel %vm327, 1, 0
    %v359 = vsel %vm328, 1, 0
    %v360 = vsel %vm329, 1, 0
    %361 = vset.pattern.permute.xlu0 0
    %362 = vperm.xlu0 %361, %v357
    %v363 = vpop.permute.xlu0 %362
    %364 = vset.pattern.permute.xlu0 0
    %365 = vperm.xlu0 %364, %v358
    %v366 = vpop.permute.xlu0 %365
    %367 = vset.pattern.permute.xlu0 0
    %368 = vperm.xlu0 %367, %v359
    %v369 = vpop.permute.xlu0 %368
    %370 = vset.pattern.permute.xlu0 0
    %371 = vperm.xlu0 %370, %v360
    %v372 = vpop.permute.xlu0 %371
    %vm373 = vcmp.eq.s32.totalorder %v363, 1
    %vm374 = vcmp.eq.s32.totalorder %v366, 1
    %vm375 = vcmp.eq.s32.totalorder %v369, 1
    %vm376 = vcmp.eq.s32.totalorder %v372, 1
    %v377 = vsel %vm373, %v355, 0.0
    %v378 = vsel %vm373, %v356, 0.0
    %v379 = vsel %vm374, %v338, 0.0
    %v380 = vsel %vm374, %v340, 0.0
    %v381 = vsel %vm375, %v342, 0.0
    %v382 = vsel %vm375, %v344, 0.0
    %v383 = vsel %vm376, %v345, 0.0
    %v384 = vsel %vm376, %v346, 0.0
    %v385 = vlaneseq
    %v386 = vshrl.u32 %v385, 7
    %v387 = vsub.s32 0, %v386
    %v388 = vrot.slane %v135, %v387
    %390 = vrot.lane.b32.xlu0 %v388, 64
    %v391 = vpop.permute.xlu0 %390
    %v393 = vmul.f32 %v377, %v391
    %v394 = vmul.f32 %v378, %v391
    %v395 = vmul.f32 %v379, %v391
    %v396 = vmul.f32 %v380, %v391
    %v397 = vmul.f32 %v381, %v391
    %v398 = vmul.f32 %v382, %v391
    %v399 = vmul.f32 %v383, %v391
    %v400 = vmul.f32 %v384, %v391
    %v401 = vadd.f32 %v318, %v393
    %v402 = vadd.f32 %v319, %v394
    %v403 = vadd.f32 %v320, %v395
    %v404 = vadd.f32 %v321, %v396
    %v405 = vadd.f32 %v322, %v397
    %v406 = vadd.f32 %v323, %v398
    %v407 = vadd.f32 %v324, %v399
    %v408 = vadd.f32 %v325, %v400
    %v409 = vld [vmem:[%s5] sm:$0x1]
    %v411 = vlaneseq
    %v412 = vshrl.u32 %v411, 7
    %v413 = vsub.s32 0, %v412
    %v414 = vrot.slane %v409, %v413
    %415 = vrot.lane.b32.xlu0 %v414, 64
    %v416 = vpop.permute.xlu0 %415
    %v418 = vadd.f32 %v401, %v416
    %v419 = vadd.f32 %v402, %v416
    %v420 = vadd.f32 %v403, %v416
    %v421 = vadd.f32 %v404, %v416
    %v422 = vadd.f32 %v405, %v416
    %v423 = vadd.f32 %v406, %v416
    %v424 = vadd.f32 %v407, %v416
    %v425 = vadd.f32 %v408, %v416
    %v426 = vsub.f32 0.0, %v418
    %v427 = vsub.f32 0.0, %v419
    %v428 = vsub.f32 0.0, %v420
    %v429 = vsub.f32 0.0, %v421
    %v430 = vsub.f32 0.0, %v422
    %v431 = vsub.f32 0.0, %v423
    %v432 = vsub.f32 0.0, %v424
    %v433 = vsub.f32 0.0, %v425
    %v434 = vmul.f32 %v426, 1.442695
    %v435 = vpow.pop %v434
    %v436 = vmul.f32 %v427, 1.442695
    %v437 = vpow.pop %v436
    %v438 = vmul.f32 %v428, 1.442695
    %v439 = vpow.pop %v438
    %v440 = vmul.f32 %v429, 1.442695
    %v441 = vpow.pop %v440
    %v442 = vmul.f32 %v430, 1.442695
    %v443 = vpow.pop %v442
    %v444 = vmul.f32 %v431, 1.442695
    %v445 = vpow.pop %v444
    %v446 = vmul.f32 %v432, 1.442695
    %v447 = vpow.pop %v446
    %v448 = vmul.f32 %v433, 1.442695
    %v449 = vpow.pop %v448
    %v450 = vadd.f32 %v435, 1.0
    %v451 = vadd.f32 %v437, 1.0
    %v452 = vadd.f32 %v439, 1.0
    %v453 = vadd.f32 %v441, 1.0
    %v454 = vadd.f32 %v443, 1.0
    %v455 = vadd.f32 %v445, 1.0
    %v456 = vadd.f32 %v447, 1.0
    %v457 = vadd.f32 %v449, 1.0
    %v458 = vrcp.pop %v450
    %v459 = vmul.f32 1.0, %v458
    %v460 = vrcp.pop %v451
    %v461 = vmul.f32 1.0, %v460
    %v462 = vrcp.pop %v452
    %v463 = vmul.f32 1.0, %v462
    %v464 = vrcp.pop %v453
    %v465 = vmul.f32 1.0, %v464
    %v466 = vrcp.pop %v454
    %v467 = vmul.f32 1.0, %v466
    %v468 = vrcp.pop %v455
    %v469 = vmul.f32 1.0, %v468
    %v470 = vrcp.pop %v456
    %v471 = vmul.f32 1.0, %v470
    %v472 = vrcp.pop %v457
    %v473 = vmul.f32 1.0, %v472
    %v474 = vmul.f32 %v418, %v459
    %v475 = vmul.f32 %v419, %v461
    %v476 = vmul.f32 %v420, %v463
    %v477 = vmul.f32 %v421, %v465
    %v478 = vmul.f32 %v422, %v467
    %v479 = vmul.f32 %v423, %v469
    %v480 = vmul.f32 %v424, %v471
    %v481 = vmul.f32 %v425, %v473
    %v482 = vld [vmem:[%s6] sm:$0x1]
    %v484 = vlaneseq
    %v485 = vshrl.u32 %v484, 7
    %v486 = vsub.s32 0, %v485
    %v487 = vrot.slane %v482, %v486
    %v490 = vsel %vm71, %v37, 0
    %v493 = vsel %vm71, %v38, 0
    %v496 = vsel %vm71, %v39, 0
    %v499 = vsel %vm71, %v40, 0
    %501 = vmatprep.subr.mxu0 0.0
    %v502 = vand.u32 %v131, 4294901760
    %503 = vmatpush1.msra.mxu0 %v502
    %504 = vmatprep.subr.mxu0 0.0
    %v505 = vand.u32 %v132, 4294901760
    %506 = vmatpush1.msra.mxu0 %v505
    %507 = vmatprep.subr.mxu0 0.0
    %v508 = vand.u32 %v133, 4294901760
    %509 = vmatpush1.msra.mxu0 %v508
    %510 = vmatprep.subr.mxu0 0.0
    %v511 = vand.u32 %v134, 4294901760
    %512 = vmatpush1.msra.mxu0 %v511
    %513 = vmatprep.subr.mxu0 0.0
    %514 = vmatpush1.msra.mxu0 0.0
    %515 = vmatprep.subr.mxu0 0.0
    %516 = vmatpush1.msra.mxu0 0.0
    %517 = vmatprep.subr.mxu0 0.0
    %518 = vmatpush1.msra.mxu0 0.0
    %519 = vmatprep.subr.mxu0 0.0
    %520 = vmatpush1.msra.mxu0 0.0
    %521 = vmatprep.subr.mxu0 0.0
    %522 = vmatpush1.msra.mxu0 0.0
    %523 = vmatprep.subr.mxu0 0.0
    %524 = vmatpush1.msra.mxu0 0.0
    %525 = vmatprep.subr.mxu0 0.0
    %526 = vmatpush1.msra.mxu0 0.0
    %527 = vmatprep.subr.mxu0 0.0
    %528 = vmatpush1.msra.mxu0 0.0
    %529 = vmatprep.subr.mxu0 0.0
    %530 = vmatpush1.msra.mxu0 0.0
    %531 = vmatprep.subr.mxu0 0.0
    %532 = vmatpush1.msra.mxu0 0.0
    %533 = vmatprep.subr.mxu0 0.0
    %534 = vmatpush1.msra.mxu0 0.0
    %535 = vmatprep.subr.mxu0 0.0
    %536 = vmatpush1.msra.mxu0 0.0
    %537 = vmatprep.subr.mxu0 0.0
    %538 = vmatpush1.msra.mxu0 0.0
    %539 = vmatprep.subr.mxu0 0.0
    %540 = vmatpush1.msra.mxu0 0.0
    %541 = vmatprep.subr.mxu0 0.0
    %542 = vmatpush1.msra.mxu0 0.0
    %543 = vmatprep.subr.mxu0 0.0
    %544 = vmatpush1.msra.mxu0 0.0
    %545 = vmatprep.subr.mxu0 0.0
    %546 = vmatpush1.msra.mxu0 0.0
    %547 = vmatprep.subr.mxu0 0.0
    %548 = vmatpush1.msra.mxu0 0.0
    %549 = vmatprep.subr.mxu0 0.0
    %550 = vmatpush1.msra.mxu0 0.0
    %551 = vmatprep.subr.mxu0 0.0
    %552 = vmatpush1.msra.mxu0 0.0
    %553 = vmatprep.subr.mxu0 0.0
    %554 = vmatpush1.msra.mxu0 0.0
    %555 = vmatprep.subr.mxu0 0.0
    %556 = vmatpush1.msra.mxu0 0.0
    %557 = vmatprep.subr.mxu0 0.0
    %558 = vmatpush1.msra.mxu0 0.0
    %559 = vmatprep.subr.mxu0 0.0
    %560 = vmatpush1.msra.mxu0 0.0
    %561 = vmatprep.subr.mxu0 0.0
    %562 = vmatpush1.msra.mxu0 0.0
    %563 = vmatprep.subr.mxu0 0.0
    %564 = vmatpush1.msra.mxu0 0.0
    %565 = vmatprep.subr.mxu0 0.0
    %566 = vmatpush1.msra.mxu0 0.0
    %567 = vmatprep.subr.mxu0 0.0
    %568 = vmatpush1.msra.mxu0 0.0
    %569 = vmatprep.mubr.f32.mxu0 0.0
    %v570 = vand.u32 %v490, 4294901760
    %v571 = vsub.f32 %v490, %v570
    %v572 = vand.u32 %v571, 4294901760
    %v573 = vsub.f32 %v571, %v572
    %v574 = vand.u32 %v573, 4294901760
    %575 = vmatmul.mubr.f32.gmra.mrb[0].mxu0 %v574
    %v576 = vpop.f32.mrb[0].mxu0
    %v577 = vadd.f32 %v487, %v576
    %v578 = vpop.f32.mrb[0].mxu0
    %579 = vmatprep.mubr.f32.mxu0 0.0
    %v580 = vand.u32 %v493, 4294901760
    %v581 = vsub.f32 %v493, %v580
    %v582 = vand.u32 %v581, 4294901760
    %v583 = vsub.f32 %v581, %v582
    %v584 = vand.u32 %v583, 4294901760
    %585 = vmatmul.mubr.f32.gmra.mrb[0].mxu0 %v584
    %v586 = vpop.f32.mrb[0].mxu0
    %v587 = vadd.f32 %v487, %v586
    %v588 = vpop.f32.mrb[0].mxu0
    %589 = vmatprep.mubr.f32.mxu0 0.0
    %v590 = vand.u32 %v496, 4294901760
    %v591 = vsub.f32 %v496, %v590
    %v592 = vand.u32 %v591, 4294901760
    %v593 = vsub.f32 %v591, %v592
    %v594 = vand.u32 %v593, 4294901760
    %595 = vmatmul.mubr.f32.gmra.mrb[0].mxu0 %v594
    %v596 = vpop.f32.mrb[0].mxu0
    %v597 = vadd.f32 %v487, %v596
    %v598 = vpop.f32.mrb[0].mxu0
    %599 = vmatprep.mubr.f32.mxu0 0.0
    %v600 = vand.u32 %v499, 4294901760
    %v601 = vsub.f32 %v499, %v600
    %v602 = vand.u32 %v601, 4294901760
    %v603 = vsub.f32 %v601, %v602
    %v604 = vand.u32 %v603, 4294901760
    %605 = vmatmul.mubr.f32.gmra.mrb[0].mxu0 %v604
    %v606 = vpop.f32.mrb[0].mxu0
    %v607 = vadd.f32 %v487, %v606
    %v608 = vpop.f32.mrb[0].mxu0
    %609 = vdwg.mxu0
    %610 = vmatprep.subr.mxu0 0.0
    %v611 = vand.u32 %v131, 4294901760
    %v612 = vsub.f32 %v131, %v611
    %v613 = vand.u32 %v612, 4294901760
    %v614 = vsub.f32 %v612, %v613
    %v615 = vand.u32 %v614, 4294901760
    %616 = vmatpush1.msra.mxu0 %v615
    %617 = vmatprep.subr.mxu0 0.0
    %v618 = vand.u32 %v132, 4294901760
    %v619 = vsub.f32 %v132, %v618
    %v620 = vand.u32 %v619, 4294901760
    %v621 = vsub.f32 %v619, %v620
    %v622 = vand.u32 %v621, 4294901760
    %623 = vmatpush1.msra.mxu0 %v622
    %624 = vmatprep.subr.mxu0 0.0
    %v625 = vand.u32 %v133, 4294901760
    %v626 = vsub.f32 %v133, %v625
    %v627 = vand.u32 %v626, 4294901760
    %v628 = vsub.f32 %v626, %v627
    %v629 = vand.u32 %v628, 4294901760
    %630 = vmatpush1.msra.mxu0 %v629
    %631 = vmatprep.subr.mxu0 0.0
    %v632 = vand.u32 %v134, 4294901760
    %v633 = vsub.f32 %v134, %v632
    %v634 = vand.u32 %v633, 4294901760
    %v635 = vsub.f32 %v633, %v634
    %v636 = vand.u32 %v635, 4294901760
    %637 = vmatpush1.msra.mxu0 %v636
    %638 = vmatprep.subr.mxu0 0.0
    %639 = vmatpush1.msra.mxu0 0.0
    %640 = vmatprep.subr.mxu0 0.0
    %641 = vmatpush1.msra.mxu0 0.0
    %642 = vmatprep.subr.mxu0 0.0
    %643 = vmatpush1.msra.mxu0 0.0
    %644 = vmatprep.subr.mxu0 0.0
    %645 = vmatpush1.msra.mxu0 0.0
    %646 = vmatprep.subr.mxu0 0.0
    %647 = vmatpush1.msra.mxu0 0.0
    %648 = vmatprep.subr.mxu0 0.0
    %649 = vmatpush1.msra.mxu0 0.0
    %650 = vmatprep.subr.mxu0 0.0
    %651 = vmatpush1.msra.mxu0 0.0
    %652 = vmatprep.subr.mxu0 0.0
    %653 = vmatpush1.msra.mxu0 0.0
    %654 = vmatprep.subr.mxu0 0.0
    %655 = vmatpush1.msra.mxu0 0.0
    %656 = vmatprep.subr.mxu0 0.0
    %657 = vmatpush1.msra.mxu0 0.0
    %658 = vmatprep.subr.mxu0 0.0
    %659 = vmatpush1.msra.mxu0 0.0
    %660 = vmatprep.subr.mxu0 0.0
    %661 = vmatpush1.msra.mxu0 0.0
    %662 = vmatprep.subr.mxu0 0.0
    %663 = vmatpush1.msra.mxu0 0.0
    %664 = vmatprep.subr.mxu0 0.0
    %665 = vmatpush1.msra.mxu0 0.0
    %666 = vmatprep.subr.mxu0 0.0
    %667 = vmatpush1.msra.mxu0 0.0
    %668 = vmatprep.subr.mxu0 0.0
    %669 = vmatpush1.msra.mxu0 0.0
    %670 = vmatprep.subr.mxu0 0.0
    %671 = vmatpush1.msra.mxu0 0.0
    %672 = vmatprep.subr.mxu0 0.0
    %673 = vmatpush1.msra.mxu0 0.0
    %674 = vmatprep.subr.mxu0 0.0
    %675 = vmatpush1.msra.mxu0 0.0
    %676 = vmatprep.subr.mxu0 0.0
    %677 = vmatpush1.msra.mxu0 0.0
    %678 = vmatprep.subr.mxu0 0.0
    %679 = vmatpush1.msra.mxu0 0.0
    %680 = vmatprep.subr.mxu0 0.0
    %681 = vmatpush1.msra.mxu0 0.0
    %682 = vmatprep.subr.mxu0 0.0
    %683 = vmatpush1.msra.mxu0 0.0
    %684 = vmatprep.subr.mxu0 0.0
    %685 = vmatpush1.msra.mxu0 0.0
    %686 = vmatprep.subr.mxu0 0.0
    %687 = vmatpush1.msra.mxu0 0.0
    %688 = vmatprep.subr.mxu0 0.0
    %689 = vmatpush1.msra.mxu0 0.0
    %690 = vmatprep.subr.mxu0 0.0
    %691 = vmatpush1.msra.mxu0 0.0
    %692 = vmatprep.subr.mxu0 0.0
    %693 = vmatpush1.msra.mxu0 0.0
    %694 = vmatprep.mubr.f32.mxu0 0.0
    %v695 = vand.u32 %v490, 4294901760
    %696 = vmatmul.mubr.f32.gmra.mrb[0].mxu0 %v695
    %v697 = vpop.f32.mrb[0].mxu0
    %v698 = vadd.f32 %v577, %v697
    %v699 = vpop.f32.mrb[0].mxu0
    %700 = vmatprep.mubr.f32.mxu0 0.0
    %v701 = vand.u32 %v493, 4294901760
    %702 = vmatmul.mubr.f32.gmra.mrb[0].mxu0 %v701
    %v703 = vpop.f32.mrb[0].mxu0
    %v704 = vadd.f32 %v587, %v703
    %v705 = vpop.f32.mrb[0].mxu0
    %706 = vmatprep.mubr.f32.mxu0 0.0
    %v707 = vand.u32 %v496, 4294901760
    %708 = vmatmul.mubr.f32.gmra.mrb[0].mxu0 %v707
    %v709 = vpop.f32.mrb[0].mxu0
    %v710 = vadd.f32 %v597, %v709
    %v711 = vpop.f32.mrb[0].mxu0
    %712 = vmatprep.mubr.f32.mxu0 0.0
    %v713 = vand.u32 %v499, 4294901760
    %714 = vmatmul.mubr.f32.gmra.mrb[0].mxu0 %v713
    %v715 = vpop.f32.mrb[0].mxu0
    %v716 = vadd.f32 %v607, %v715
    %v717 = vpop.f32.mrb[0].mxu0
    %718 = vdwg.mxu0
    %719 = vmatprep.subr.mxu0 0.0
    %v720 = vand.u32 %v131, 4294901760
    %v721 = vsub.f32 %v131, %v720
    %722 = vmatpush1.msra.mxu0 %v721
    %723 = vmatprep.subr.mxu0 0.0
    %v724 = vand.u32 %v132, 4294901760
    %v725 = vsub.f32 %v132, %v724
    %726 = vmatpush1.msra.mxu0 %v725
    %727 = vmatprep.subr.mxu0 0.0
    %v728 = vand.u32 %v133, 4294901760
    %v729 = vsub.f32 %v133, %v728
    %730 = vmatpush1.msra.mxu0 %v729
    %731 = vmatprep.subr.mxu0 0.0
    %v732 = vand.u32 %v134, 4294901760
    %v733 = vsub.f32 %v134, %v732
    %734 = vmatpush1.msra.mxu0 %v733
    %735 = vmatprep.subr.mxu0 0.0
    %736 = vmatpush1.msra.mxu0 0.0
    %737 = vmatprep.subr.mxu0 0.0
    %738 = vmatpush1.msra.mxu0 0.0
    %739 = vmatprep.subr.mxu0 0.0
    %740 = vmatpush1.msra.mxu0 0.0
    %741 = vmatprep.subr.mxu0 0.0
    %742 = vmatpush1.msra.mxu0 0.0
    %743 = vmatprep.subr.mxu0 0.0
    %744 = vmatpush1.msra.mxu0 0.0
    %745 = vmatprep.subr.mxu0 0.0
    %746 = vmatpush1.msra.mxu0 0.0
    %747 = vmatprep.subr.mxu0 0.0
    %748 = vmatpush1.msra.mxu0 0.0
    %749 = vmatprep.subr.mxu0 0.0
    %750 = vmatpush1.msra.mxu0 0.0
    %751 = vmatprep.subr.mxu0 0.0
    %752 = vmatpush1.msra.mxu0 0.0
    %753 = vmatprep.subr.mxu0 0.0
    %754 = vmatpush1.msra.mxu0 0.0
    %755 = vmatprep.subr.mxu0 0.0
    %756 = vmatpush1.msra.mxu0 0.0
    %757 = vmatprep.subr.mxu0 0.0
    %758 = vmatpush1.msra.mxu0 0.0
    %759 = vmatprep.subr.mxu0 0.0
    %760 = vmatpush1.msra.mxu0 0.0
    %761 = vmatprep.subr.mxu0 0.0
    %762 = vmatpush1.msra.mxu0 0.0
    %763 = vmatprep.subr.mxu0 0.0
    %764 = vmatpush1.msra.mxu0 0.0
    %765 = vmatprep.subr.mxu0 0.0
    %766 = vmatpush1.msra.mxu0 0.0
    %767 = vmatprep.subr.mxu0 0.0
    %768 = vmatpush1.msra.mxu0 0.0
    %769 = vmatprep.subr.mxu0 0.0
    %770 = vmatpush1.msra.mxu0 0.0
    %771 = vmatprep.subr.mxu0 0.0
    %772 = vmatpush1.msra.mxu0 0.0
    %773 = vmatprep.subr.mxu0 0.0
    %774 = vmatpush1.msra.mxu0 0.0
    %775 = vmatprep.subr.mxu0 0.0
    %776 = vmatpush1.msra.mxu0 0.0
    %777 = vmatprep.subr.mxu0 0.0
    %778 = vmatpush1.msra.mxu0 0.0
    %779 = vmatprep.subr.mxu0 0.0
    %780 = vmatpush1.msra.mxu0 0.0
    %781 = vmatprep.subr.mxu0 0.0
    %782 = vmatpush1.msra.mxu0 0.0
    %783 = vmatprep.subr.mxu0 0.0
    %784 = vmatpush1.msra.mxu0 0.0
    %785 = vmatprep.subr.mxu0 0.0
    %786 = vmatpush1.msra.mxu0 0.0
    %787 = vmatprep.subr.mxu0 0.0
    %788 = vmatpush1.msra.mxu0 0.0
    %789 = vmatprep.subr.mxu0 0.0
    %790 = vmatpush1.msra.mxu0 0.0
    %791 = vmatprep.mubr.f32.mxu0 0.0
    %v792 = vand.u32 %v490, 4294901760
    %v793 = vsub.f32 %v490, %v792
    %794 = vmatmul.mubr.f32.gmra.mrb[0].mxu0 %v793
    %v795 = vpop.f32.mrb[0].mxu0
    %v796 = vadd.f32 %v698, %v795
    %v797 = vpop.f32.mrb[0].mxu0
    %798 = vmatprep.mubr.f32.mxu0 0.0
    %v799 = vand.u32 %v493, 4294901760
    %v800 = vsub.f32 %v493, %v799
    %801 = vmatmul.mubr.f32.gmra.mrb[0].mxu0 %v800
    %v802 = vpop.f32.mrb[0].mxu0
    %v803 = vadd.f32 %v704, %v802
    %v804 = vpop.f32.mrb[0].mxu0
    %805 = vmatprep.mubr.f32.mxu0 0.0
    %v806 = vand.u32 %v496, 4294901760
    %v807 = vsub.f32 %v496, %v806
    %808 = vmatmul.mubr.f32.gmra.mrb[0].mxu0 %v807
    %v809 = vpop.f32.mrb[0].mxu0
    %v810 = vadd.f32 %v710, %v809
    %v811 = vpop.f32.mrb[0].mxu0
    %812 = vmatprep.mubr.f32.mxu0 0.0
    %v813 = vand.u32 %v499, 4294901760
    %v814 = vsub.f32 %v499, %v813
    %815 = vmatmul.mubr.f32.gmra.mrb[0].mxu0 %v814
    %v816 = vpop.f32.mrb[0].mxu0
    %v817 = vadd.f32 %v716, %v816
    %v818 = vpop.f32.mrb[0].mxu0
    %819 = vdwg.mxu0
    %820 = vmatprep.subr.mxu0 0.0
    %v821 = vand.u32 %v131, 4294901760
    %822 = vmatpush1.msra.mxu0 %v821
    %823 = vmatprep.subr.mxu0 0.0
    %v824 = vand.u32 %v132, 4294901760
    %825 = vmatpush1.msra.mxu0 %v824
    %826 = vmatprep.subr.mxu0 0.0
    %v827 = vand.u32 %v133, 4294901760
    %828 = vmatpush1.msra.mxu0 %v827
    %829 = vmatprep.subr.mxu0 0.0
    %v830 = vand.u32 %v134, 4294901760
    %831 = vmatpush1.msra.mxu0 %v830
    %832 = vmatprep.subr.mxu0 0.0
    %833 = vmatpush1.msra.mxu0 0.0
    %834 = vmatprep.subr.mxu0 0.0
    %835 = vmatpush1.msra.mxu0 0.0
    %836 = vmatprep.subr.mxu0 0.0
    %837 = vmatpush1.msra.mxu0 0.0
    %838 = vmatprep.subr.mxu0 0.0
    %839 = vmatpush1.msra.mxu0 0.0
    %840 = vmatprep.subr.mxu0 0.0
    %841 = vmatpush1.msra.mxu0 0.0
    %842 = vmatprep.subr.mxu0 0.0
    %843 = vmatpush1.msra.mxu0 0.0
    %844 = vmatprep.subr.mxu0 0.0
    %845 = vmatpush1.msra.mxu0 0.0
    %846 = vmatprep.subr.mxu0 0.0
    %847 = vmatpush1.msra.mxu0 0.0
    %848 = vmatprep.subr.mxu0 0.0
    %849 = vmatpush1.msra.mxu0 0.0
    %850 = vmatprep.subr.mxu0 0.0
    %851 = vmatpush1.msra.mxu0 0.0
    %852 = vmatprep.subr.mxu0 0.0
    %853 = vmatpush1.msra.mxu0 0.0
    %854 = vmatprep.subr.mxu0 0.0
    %855 = vmatpush1.msra.mxu0 0.0
    %856 = vmatprep.subr.mxu0 0.0
    %857 = vmatpush1.msra.mxu0 0.0
    %858 = vmatprep.subr.mxu0 0.0
    %859 = vmatpush1.msra.mxu0 0.0
    %860 = vmatprep.subr.mxu0 0.0
    %861 = vmatpush1.msra.mxu0 0.0
    %862 = vmatprep.subr.mxu0 0.0
    %863 = vmatpush1.msra.mxu0 0.0
    %864 = vmatprep.subr.mxu0 0.0
    %865 = vmatpush1.msra.mxu0 0.0
    %866 = vmatprep.subr.mxu0 0.0
    %867 = vmatpush1.msra.mxu0 0.0
    %868 = vmatprep.subr.mxu0 0.0
    %869 = vmatpush1.msra.mxu0 0.0
    %870 = vmatprep.subr.mxu0 0.0
    %871 = vmatpush1.msra.mxu0 0.0
    %872 = vmatprep.subr.mxu0 0.0
    %873 = vmatpush1.msra.mxu0 0.0
    %874 = vmatprep.subr.mxu0 0.0
    %875 = vmatpush1.msra.mxu0 0.0
    %876 = vmatprep.subr.mxu0 0.0
    %877 = vmatpush1.msra.mxu0 0.0
    %878 = vmatprep.subr.mxu0 0.0
    %879 = vmatpush1.msra.mxu0 0.0
    %880 = vmatprep.subr.mxu0 0.0
    %881 = vmatpush1.msra.mxu0 0.0
    %882 = vmatprep.subr.mxu0 0.0
    %883 = vmatpush1.msra.mxu0 0.0
    %884 = vmatprep.subr.mxu0 0.0
    %885 = vmatpush1.msra.mxu0 0.0
    %886 = vmatprep.subr.mxu0 0.0
    %887 = vmatpush1.msra.mxu0 0.0
    %888 = vmatprep.mubr.f32.mxu0 0.0
    %v889 = vand.u32 %v490, 4294901760
    %v890 = vsub.f32 %v490, %v889
    %v891 = vand.u32 %v890, 4294901760
    %892 = vmatmul.mubr.f32.gmra.mrb[0].mxu0 %v891
    %v893 = vpop.f32.mrb[0].mxu0
    %v894 = vadd.f32 %v796, %v893
    %v895 = vpop.f32.mrb[0].mxu0
    %896 = vmatprep.mubr.f32.mxu0 0.0
    %v897 = vand.u32 %v493, 4294901760
    %v898 = vsub.f32 %v493, %v897
    %v899 = vand.u32 %v898, 4294901760
    %900 = vmatmul.mubr.f32.gmra.mrb[0].mxu0 %v899
    %v901 = vpop.f32.mrb[0].mxu0
    %v902 = vadd.f32 %v803, %v901
    %v903 = vpop.f32.mrb[0].mxu0
    %904 = vmatprep.mubr.f32.mxu0 0.0
    %v905 = vand.u32 %v496, 4294901760
    %v906 = vsub.f32 %v496, %v905
    %v907 = vand.u32 %v906, 4294901760
    %908 = vmatmul.mubr.f32.gmra.mrb[0].mxu0 %v907
    %v909 = vpop.f32.mrb[0].mxu0
    %v910 = vadd.f32 %v810, %v909
    %v911 = vpop.f32.mrb[0].mxu0
    %912 = vmatprep.mubr.f32.mxu0 0.0
    %v913 = vand.u32 %v499, 4294901760
    %v914 = vsub.f32 %v499, %v913
    %v915 = vand.u32 %v914, 4294901760
    %916 = vmatmul.mubr.f32.gmra.mrb[0].mxu0 %v915
    %v917 = vpop.f32.mrb[0].mxu0
    %v918 = vadd.f32 %v817, %v917
    %v919 = vpop.f32.mrb[0].mxu0
    %920 = vdwg.mxu0
    %921 = vmatprep.subr.mxu0 0.0
    %v922 = vand.u32 %v131, 4294901760
    %v923 = vsub.f32 %v131, %v922
    %v924 = vand.u32 %v923, 4294901760
    %925 = vmatpush1.msra.mxu0 %v924
    %926 = vmatprep.subr.mxu0 0.0
    %v927 = vand.u32 %v132, 4294901760
    %v928 = vsub.f32 %v132, %v927
    %v929 = vand.u32 %v928, 4294901760
    %930 = vmatpush1.msra.mxu0 %v929
    %931 = vmatprep.subr.mxu0 0.0
    %v932 = vand.u32 %v133, 4294901760
    %v933 = vsub.f32 %v133, %v932
    %v934 = vand.u32 %v933, 4294901760
    %935 = vmatpush1.msra.mxu0 %v934
    %936 = vmatprep.subr.mxu0 0.0
    %v937 = vand.u32 %v134, 4294901760
    %v938 = vsub.f32 %v134, %v937
    %v939 = vand.u32 %v938, 4294901760
    %940 = vmatpush1.msra.mxu0 %v939
    %941 = vmatprep.subr.mxu0 0.0
    %942 = vmatpush1.msra.mxu0 0.0
    %943 = vmatprep.subr.mxu0 0.0
    %944 = vmatpush1.msra.mxu0 0.0
    %945 = vmatprep.subr.mxu0 0.0
    %946 = vmatpush1.msra.mxu0 0.0
    %947 = vmatprep.subr.mxu0 0.0
    %948 = vmatpush1.msra.mxu0 0.0
    %949 = vmatprep.subr.mxu0 0.0
    %950 = vmatpush1.msra.mxu0 0.0
    %951 = vmatprep.subr.mxu0 0.0
    %952 = vmatpush1.msra.mxu0 0.0
    %953 = vmatprep.subr.mxu0 0.0
    %954 = vmatpush1.msra.mxu0 0.0
    %955 = vmatprep.subr.mxu0 0.0
    %956 = vmatpush1.msra.mxu0 0.0
    %957 = vmatprep.subr.mxu0 0.0
    %958 = vmatpush1.msra.mxu0 0.0
    %959 = vmatprep.subr.mxu0 0.0
    %960 = vmatpush1.msra.mxu0 0.0
    %961 = vmatprep.subr.mxu0 0.0
    %962 = vmatpush1.msra.mxu0 0.0
    %963 = vmatprep.subr.mxu0 0.0
    %964 = vmatpush1.msra.mxu0 0.0
    %965 = vmatprep.subr.mxu0 0.0
    %966 = vmatpush1.msra.mxu0 0.0
    %967 = vmatprep.subr.mxu0 0.0
    %968 = vmatpush1.msra.mxu0 0.0
    %969 = vmatprep.subr.mxu0 0.0
    %970 = vmatpush1.msra.mxu0 0.0
    %971 = vmatprep.subr.mxu0 0.0
    %972 = vmatpush1.msra.mxu0 0.0
    %973 = vmatprep.subr.mxu0 0.0
    %974 = vmatpush1.msra.mxu0 0.0
    %975 = vmatprep.subr.mxu0 0.0
    %976 = vmatpush1.msra.mxu0 0.0
    %977 = vmatprep.subr.mxu0 0.0
    %978 = vmatpush1.msra.mxu0 0.0
    %979 = vmatprep.subr.mxu0 0.0
    %980 = vmatpush1.msra.mxu0 0.0
    %981 = vmatprep.subr.mxu0 0.0
    %982 = vmatpush1.msra.mxu0 0.0
    %983 = vmatprep.subr.mxu0 0.0
    %984 = vmatpush1.msra.mxu0 0.0
    %985 = vmatprep.subr.mxu0 0.0
    %986 = vmatpush1.msra.mxu0 0.0
    %987 = vmatprep.subr.mxu0 0.0
    %988 = vmatpush1.msra.mxu0 0.0
    %989 = vmatprep.subr.mxu0 0.0
    %990 = vmatpush1.msra.mxu0 0.0
    %991 = vmatprep.subr.mxu0 0.0
    %992 = vmatpush1.msra.mxu0 0.0
    %993 = vmatprep.subr.mxu0 0.0
    %994 = vmatpush1.msra.mxu0 0.0
    %995 = vmatprep.subr.mxu0 0.0
    %996 = vmatpush1.msra.mxu0 0.0
    %997 = vmatprep.mubr.f32.mxu0 0.0
    %v998 = vand.u32 %v490, 4294901760
    %999 = vmatmul.mubr.f32.gmra.mrb[0].mxu0 %v998
    %v1000 = vpop.f32.mrb[0].mxu0
    %v1001 = vadd.f32 %v894, %v1000
    %v1002 = vpop.f32.mrb[0].mxu0
    %1003 = vmatprep.mubr.f32.mxu0 0.0
    %v1004 = vand.u32 %v493, 4294901760
    %1005 = vmatmul.mubr.f32.gmra.mrb[0].mxu0 %v1004
    %v1006 = vpop.f32.mrb[0].mxu0
    %v1007 = vadd.f32 %v902, %v1006
    %v1008 = vpop.f32.mrb[0].mxu0
    %1009 = vmatprep.mubr.f32.mxu0 0.0
    %v1010 = vand.u32 %v496, 4294901760
    %1011 = vmatmul.mubr.f32.gmra.mrb[0].mxu0 %v1010
    %v1012 = vpop.f32.mrb[0].mxu0
    %v1013 = vadd.f32 %v910, %v1012
    %v1014 = vpop.f32.mrb[0].mxu0
    %1015 = vmatprep.mubr.f32.mxu0 0.0
    %v1016 = vand.u32 %v499, 4294901760
    %1017 = vmatmul.mubr.f32.gmra.mrb[0].mxu0 %v1016
    %v1018 = vpop.f32.mrb[0].mxu0
    %v1019 = vadd.f32 %v918, %v1018
    %v1020 = vpop.f32.mrb[0].mxu0
    %1021 = vdwg.mxu0
    %1022 = vmatprep.subr.mxu0 0.0
    %v1023 = vand.u32 %v131, 4294901760
    %1024 = vmatpush1.msra.mxu0 %v1023
    %1025 = vmatprep.subr.mxu0 0.0
    %v1026 = vand.u32 %v132, 4294901760
    %1027 = vmatpush1.msra.mxu0 %v1026
    %1028 = vmatprep.subr.mxu0 0.0
    %v1029 = vand.u32 %v133, 4294901760
    %1030 = vmatpush1.msra.mxu0 %v1029
    %1031 = vmatprep.subr.mxu0 0.0
    %v1032 = vand.u32 %v134, 4294901760
    %1033 = vmatpush1.msra.mxu0 %v1032
    %1034 = vmatprep.subr.mxu0 0.0
    %1035 = vmatpush1.msra.mxu0 0.0
    %1036 = vmatprep.subr.mxu0 0.0
    %1037 = vmatpush1.msra.mxu0 0.0
    %1038 = vmatprep.subr.mxu0 0.0
    %1039 = vmatpush1.msra.mxu0 0.0
    %1040 = vmatprep.subr.mxu0 0.0
    %1041 = vmatpush1.msra.mxu0 0.0
    %1042 = vmatprep.subr.mxu0 0.0
    %1043 = vmatpush1.msra.mxu0 0.0
    %1044 = vmatprep.subr.mxu0 0.0
    %1045 = vmatpush1.msra.mxu0 0.0
    %1046 = vmatprep.subr.mxu0 0.0
    %1047 = vmatpush1.msra.mxu0 0.0
    %1048 = vmatprep.subr.mxu0 0.0
    %1049 = vmatpush1.msra.mxu0 0.0
    %1050 = vmatprep.subr.mxu0 0.0
    %1051 = vmatpush1.msra.mxu0 0.0
    %1052 = vmatprep.subr.mxu0 0.0
    %1053 = vmatpush1.msra.mxu0 0.0
    %1054 = vmatprep.subr.mxu0 0.0
    %1055 = vmatpush1.msra.mxu0 0.0
    %1056 = vmatprep.subr.mxu0 0.0
    %1057 = vmatpush1.msra.mxu0 0.0
    %1058 = vmatprep.subr.mxu0 0.0
    %1059 = vmatpush1.msra.mxu0 0.0
    %1060 = vmatprep.subr.mxu0 0.0
    %1061 = vmatpush1.msra.mxu0 0.0
    %1062 = vmatprep.subr.mxu0 0.0
    %1063 = vmatpush1.msra.mxu0 0.0
    %1064 = vmatprep.subr.mxu0 0.0
    %1065 = vmatpush1.msra.mxu0 0.0
    %1066 = vmatprep.subr.mxu0 0.0
    %1067 = vmatpush1.msra.mxu0 0.0
    %1068 = vmatprep.subr.mxu0 0.0
    %1069 = vmatpush1.msra.mxu0 0.0
    %1070 = vmatprep.subr.mxu0 0.0
    %1071 = vmatpush1.msra.mxu0 0.0
    %1072 = vmatprep.subr.mxu0 0.0
    %1073 = vmatpush1.msra.mxu0 0.0
    %1074 = vmatprep.subr.mxu0 0.0
    %1075 = vmatpush1.msra.mxu0 0.0
    %1076 = vmatprep.subr.mxu0 0.0
    %1077 = vmatpush1.msra.mxu0 0.0
    %1078 = vmatprep.subr.mxu0 0.0
    %1079 = vmatpush1.msra.mxu0 0.0
    %1080 = vmatprep.subr.mxu0 0.0
    %1081 = vmatpush1.msra.mxu0 0.0
    %1082 = vmatprep.subr.mxu0 0.0
    %1083 = vmatpush1.msra.mxu0 0.0
    %1084 = vmatprep.subr.mxu0 0.0
    %1085 = vmatpush1.msra.mxu0 0.0
    %1086 = vmatprep.subr.mxu0 0.0
    %1087 = vmatpush1.msra.mxu0 0.0
    %1088 = vmatprep.subr.mxu0 0.0
    %1089 = vmatpush1.msra.mxu0 0.0
    %1090 = vmatprep.mubr.f32.mxu0 0.0
    %v1091 = vand.u32 %v490, 4294901760
    %1092 = vmatmul.mubr.f32.gmra.mrb[0].mxu0 %v1091
    %v1093 = vpop.f32.mrb[0].mxu0
    %v1094 = vadd.f32 %v1001, %v1093
    %v1095 = vpop.f32.mrb[0].mxu0
    %1096 = vmatprep.mubr.f32.mxu0 0.0
    %v1097 = vand.u32 %v493, 4294901760
    %1098 = vmatmul.mubr.f32.gmra.mrb[0].mxu0 %v1097
    %v1099 = vpop.f32.mrb[0].mxu0
    %v1100 = vadd.f32 %v1007, %v1099
    %v1101 = vpop.f32.mrb[0].mxu0
    %1102 = vmatprep.mubr.f32.mxu0 0.0
    %v1103 = vand.u32 %v496, 4294901760
    %1104 = vmatmul.mubr.f32.gmra.mrb[0].mxu0 %v1103
    %v1105 = vpop.f32.mrb[0].mxu0
    %v1106 = vadd.f32 %v1013, %v1105
    %v1107 = vpop.f32.mrb[0].mxu0
    %1108 = vmatprep.mubr.f32.mxu0 0.0
    %v1109 = vand.u32 %v499, 4294901760
    %1110 = vmatmul.mubr.f32.gmra.mrb[0].mxu0 %v1109
    %v1111 = vpop.f32.mrb[0].mxu0
    %v1112 = vadd.f32 %v1019, %v1111
    %v1113 = vpop.f32.mrb[0].mxu0
    %1114 = vdwg.mxu0
    %v1115 = vmax.f32 %v1094, 0.0
    %v1116 = vmax.f32 %v1100, 0.0
    %v1117 = vmax.f32 %v1106, 0.0
    %v1118 = vmax.f32 %v1112, 0.0
    %v1119 = vand.u32 2147483647, %v1094
    %v1120 = vand.u32 2147483647, %v1100
    %v1121 = vand.u32 2147483647, %v1106
    %v1122 = vand.u32 2147483647, %v1112
    %v1123 = vsub.f32 0.0, %v1119
    %v1124 = vsub.f32 0.0, %v1120
    %v1125 = vsub.f32 0.0, %v1121
    %v1126 = vsub.f32 0.0, %v1122
    %v1127 = vmul.f32 %v1123, 1.442695
    %v1128 = vpow.pop %v1127
    %v1129 = vmul.f32 %v1124, 1.442695
    %v1130 = vpow.pop %v1129
    %v1131 = vmul.f32 %v1125, 1.442695
    %v1132 = vpow.pop %v1131
    %v1133 = vmul.f32 %v1126, 1.442695
    %v1134 = vpow.pop %v1133
    %v1135 = vadd.f32 %v1128, 1.0
    %v1136 = vadd.f32 %v1130, 1.0
    %v1137 = vadd.f32 %v1132, 1.0
    %v1138 = vadd.f32 %v1134, 1.0
    %v1139 = vlog2.pop %v1135
    %v1140 = vmul.f32 %v1139, 0.6931472
    %v1141 = vlog2.pop %v1136
    %v1142 = vmul.f32 %v1141, 0.6931472
    %v1143 = vlog2.pop %v1137
    %v1144 = vmul.f32 %v1143, 0.6931472
    %v1145 = vlog2.pop %v1138
    %v1146 = vmul.f32 %v1145, 0.6931472
    %v1147 = vadd.f32 %v1115, %v1140
    %v1148 = vadd.f32 %v1116, %v1142
    %v1149 = vadd.f32 %v1117, %v1144
    %v1150 = vadd.f32 %v1118, %v1146
    %v1151 = vld [vmem:[%s7] sm:$0x1]
    %v1153 = vlaneseq
    %v1154 = vshrl.u32 %v1153, 7
    %v1155 = vsub.s32 0, %v1154
    %v1156 = vrot.slane %v1151, %v1155
    %v1158 = vmul.f32 %v1147, %v1156
    %v1159 = vmul.f32 %v1148, %v1156
    %v1160 = vmul.f32 %v1149, %v1156
    %v1161 = vmul.f32 %v1150, %v1156
    %v1163 = vrot.slane %v1161, 7
    %v1168 = vrot.slane %v1158, 7
    %v1169 = vrot.slane %v1159, 7
    %v1170 = vsel %vm168, %v1168, %v1169
    %v1171 = vrot.slane %v1160, 7
    %v1172 = vsel %vm168, %v1169, %v1171
    %v1173 = vsel %vm168, %v1171, %v1163
    %v1178 = vsel %vm168, %v1163, %v1168
    %v1179 = vsel %vm207, %v1178, 0.0
    %v1180 = vsel %vm208, %v1170, 0.0
    %v1181 = vsel %vm209, %v1172, 0.0
    %v1182 = vsel %vm210, %v1173, 0.0
    %v1183 = vadd.f32 %v1158, %v1179
    %v1184 = vadd.f32 %v1159, %v1180
    %v1185 = vadd.f32 %v1160, %v1181
    %v1186 = vadd.f32 %v1161, %v1182
    %v1188 = vrot.slane %v1186, 6
    %v1193 = vrot.slane %v1183, 6
    %v1194 = vrot.slane %v1184, 6
    %v1195 = vsel %vm251, %v1193, %v1194
    %v1196 = vrot.slane %v1185, 6
    %v1197 = vsel %vm251, %v1194, %v1196
    %v1198 = vsel %vm251, %v1196, %v1188
    %v1203 = vsel %vm251, %v1188, %v1193
    %v1204 = vsel %vm290, %v1203, 0.0
    %v1205 = vsel %vm291, %v1195, 0.0
    %v1206 = vsel %vm292, %v1197, 0.0
    %v1207 = vsel %vm293, %v1198, 0.0
    %v1208 = vadd.f32 %v1183, %v1204
    %v1209 = vadd.f32 %v1184, %v1205
    %v1210 = vadd.f32 %v1185, %v1206
    %v1211 = vadd.f32 %v1186, %v1207
    %vm1212 = vcmp.ge.s32.totalorder %v41, 4
    %vm1213 = vcmp.ge.s32.totalorder %v42, 4
    %vm1214 = vcmp.ge.s32.totalorder %v43, 4
    %vm1215 = vcmp.ge.s32.totalorder %v44, 4
    %v1217 = vrot.slane %v1211, 4
    %vm1222 = vcmask 1043456
    %v1223 = vrot.slane %v1208, 4
    %v1224 = vrot.slane %v1209, 4
    %v1225 = vsel %vm1222, %v1223, %v1224
    %v1226 = vrot.slane %v1210, 4
    %v1227 = vsel %vm1222, %v1224, %v1226
    %v1228 = vsel %vm1222, %v1226, %v1217
    %v1233 = vsel %vm1222, %v1217, %v1223
    %v1234 = vsel %vm1212, 1, 0
    %v1235 = vsel %vm1213, 1, 0
    %v1236 = vsel %vm1214, 1, 0
    %v1237 = vsel %vm1215, 1, 0
    %1238 = vset.pattern.permute.xlu0 0
    %1239 = vperm.xlu0 %1238, %v1234
    %v1240 = vpop.permute.xlu0 %1239
    %1241 = vset.pattern.permute.xlu0 0
    %1242 = vperm.xlu0 %1241, %v1235
    %v1243 = vpop.permute.xlu0 %1242
    %1244 = vset.pattern.permute.xlu0 0
    %1245 = vperm.xlu0 %1244, %v1236
    %v1246 = vpop.permute.xlu0 %1245
    %1247 = vset.pattern.permute.xlu0 0
    %1248 = vperm.xlu0 %1247, %v1237
    %v1249 = vpop.permute.xlu0 %1248
    %vm1250 = vcmp.eq.s32.totalorder %v1240, 1
    %vm1251 = vcmp.eq.s32.totalorder %v1243, 1
    %vm1252 = vcmp.eq.s32.totalorder %v1246, 1
    %vm1253 = vcmp.eq.s32.totalorder %v1249, 1
    %v1254 = vsel %vm1250, %v1233, 0.0
    %v1255 = vsel %vm1251, %v1225, 0.0
    %v1256 = vsel %vm1252, %v1227, 0.0
    %v1257 = vsel %vm1253, %v1228, 0.0
    %v1258 = vadd.f32 %v1208, %v1254
    %v1259 = vadd.f32 %v1209, %v1255
    %v1260 = vadd.f32 %v1210, %v1256
    %v1261 = vadd.f32 %v1211, %v1257
    %vm1262 = vcmp.ge.s32.totalorder %v41, 8
    %vm1263 = vcmp.ge.s32.totalorder %v42, 8
    %vm1264 = vcmp.ge.s32.totalorder %v43, 8
    %vm1265 = vcmp.ge.s32.totalorder %v44, 8
    %v1266 = vsel %vm1262, 1, 0
    %v1267 = vsel %vm1263, 1, 0
    %v1268 = vsel %vm1264, 1, 0
    %v1269 = vsel %vm1265, 1, 0
    %1270 = vset.pattern.permute.xlu0 0
    %1271 = vperm.xlu0 %1270, %v1266
    %v1272 = vpop.permute.xlu0 %1271
    %1273 = vset.pattern.permute.xlu0 0
    %1274 = vperm.xlu0 %1273, %v1267
    %v1275 = vpop.permute.xlu0 %1274
    %1276 = vset.pattern.permute.xlu0 0
    %1277 = vperm.xlu0 %1276, %v1268
    %v1278 = vpop.permute.xlu0 %1277
    %1279 = vset.pattern.permute.xlu0 0
    %1280 = vperm.xlu0 %1279, %v1269
    %v1281 = vpop.permute.xlu0 %1280
    %vm1282 = vcmp.eq.s32.totalorder %v1272, 1
    %vm1283 = vcmp.eq.s32.totalorder %v1275, 1
    %vm1284 = vcmp.eq.s32.totalorder %v1278, 1
    %vm1285 = vcmp.eq.s32.totalorder %v1281, 1
    %v1286 = vsel %vm1282, %v1261, 0.0
    %v1287 = vsel %vm1283, %v1258, 0.0
    %v1288 = vsel %vm1284, %v1259, 0.0
    %v1289 = vsel %vm1285, %v1260, 0.0
    %v1290 = vadd.f32 %v1258, %v1286
    %v1291 = vadd.f32 %v1259, %v1287
    %v1292 = vadd.f32 %v1260, %v1288
    %v1293 = vadd.f32 %v1261, %v1289
    %v1294 = vlaneseq
    %v1295 = vshrl.u32 %v1294, 7
    %v1296 = vlaneseq
    %v1297 = vand.u32 %v1296, 127
    %vm1298 = vcmp.eq.s32.totalorder %v1295, %v1297
    %v1299 = vsel %vm1298, 1, 0
    %v1300 = vcvt.s32.f32 %v1299
    %vm1301 = vcmask 31744
    %v1303 = vsel %vm1301, %v1300, 0
    %v1306 = vsel %vm1301, %v1290, 0
    %v1309 = vsel %vm1301, %v1291, 0
    %v1312 = vsel %vm1301, %v1292, 0
    %v1315 = vsel %vm1301, %v1293, 0
    %1317 = vmatprep.subr.mxu0 0.0
    %v1318 = vand.u32 %v1306, 4294901760
    %1319 = vmatpush1.xpose.msra.mxu0 %v1318
    %1320 = vmatprep.subr.mxu0 0.0
    %v1321 = vand.u32 %v1309, 4294901760
    %1322 = vmatpush1.xpose.msra.mxu0 %v1321
    %1323 = vmatprep.subr.mxu0 0.0
    %v1324 = vand.u32 %v1312, 4294901760
    %1325 = vmatpush1.xpose.msra.mxu0 %v1324
    %1326 = vmatprep.subr.mxu0 0.0
    %v1327 = vand.u32 %v1315, 4294901760
    %1328 = vmatpush1.xpose.msra.mxu0 %v1327
    %1329 = vmatprep.subr.mxu0 0.0
    %1330 = vmatpush1.xpose.msra.mxu0 0.0
    %1331 = vmatprep.subr.mxu0 0.0
    %1332 = vmatpush1.xpose.msra.mxu0 0.0
    %1333 = vmatprep.subr.mxu0 0.0
    %1334 = vmatpush1.xpose.msra.mxu0 0.0
    %1335 = vmatprep.subr.mxu0 0.0
    %1336 = vmatpush1.xpose.msra.mxu0 0.0
    %1337 = vmatprep.subr.mxu0 0.0
    %1338 = vmatpush1.xpose.msra.mxu0 0.0
    %1339 = vmatprep.subr.mxu0 0.0
    %1340 = vmatpush1.xpose.msra.mxu0 0.0
    %1341 = vmatprep.subr.mxu0 0.0
    %1342 = vmatpush1.xpose.msra.mxu0 0.0
    %1343 = vmatprep.subr.mxu0 0.0
    %1344 = vmatpush1.xpose.msra.mxu0 0.0
    %1345 = vmatprep.subr.mxu0 0.0
    %1346 = vmatpush1.xpose.msra.mxu0 0.0
    %1347 = vmatprep.subr.mxu0 0.0
    %1348 = vmatpush1.xpose.msra.mxu0 0.0
    %1349 = vmatprep.subr.mxu0 0.0
    %1350 = vmatpush1.xpose.msra.mxu0 0.0
    %1351 = vmatprep.subr.mxu0 0.0
    %1352 = vmatpush1.xpose.msra.mxu0 0.0
    %1353 = vmatprep.subr.mxu0 0.0
    %1354 = vmatpush1.xpose.msra.mxu0 0.0
    %1355 = vmatprep.subr.mxu0 0.0
    %1356 = vmatpush1.xpose.msra.mxu0 0.0
    %1357 = vmatprep.subr.mxu0 0.0
    %1358 = vmatpush1.xpose.msra.mxu0 0.0
    %1359 = vmatprep.subr.mxu0 0.0
    %1360 = vmatpush1.xpose.msra.mxu0 0.0
    %1361 = vmatprep.subr.mxu0 0.0
    %1362 = vmatpush1.xpose.msra.mxu0 0.0
    %1363 = vmatprep.subr.mxu0 0.0
    %1364 = vmatpush1.xpose.msra.mxu0 0.0
    %1365 = vmatprep.subr.mxu0 0.0
    %1366 = vmatpush1.xpose.msra.mxu0 0.0
    %1367 = vmatprep.subr.mxu0 0.0
    %1368 = vmatpush1.xpose.msra.mxu0 0.0
    %1369 = vmatprep.subr.mxu0 0.0
    %1370 = vmatpush1.xpose.msra.mxu0 0.0
    %1371 = vmatprep.subr.mxu0 0.0
    %1372 = vmatpush1.xpose.msra.mxu0 0.0
    %1373 = vmatprep.subr.mxu0 0.0
    %1374 = vmatpush1.xpose.msra.mxu0 0.0
    %1375 = vmatprep.subr.mxu0 0.0
    %1376 = vmatpush1.xpose.msra.mxu0 0.0
    %1377 = vmatprep.subr.mxu0 0.0
    %1378 = vmatpush1.xpose.msra.mxu0 0.0
    %1379 = vmatprep.subr.mxu0 0.0
    %1380 = vmatpush1.xpose.msra.mxu0 0.0
    %1381 = vmatprep.subr.mxu0 0.0
    %1382 = vmatpush1.xpose.msra.mxu0 0.0
    %1383 = vmatprep.subr.mxu0 0.0
    %1384 = vmatpush1.xpose.msra.mxu0 0.0
    %1385 = vmatprep.mubr.f32.mxu0 0.0
    %v1386 = vand.u32 %v1303, 4294901760
    %v1387 = vsub.f32 %v1303, %v1386
    %v1388 = vand.u32 %v1387, 4294901760
    %v1389 = vsub.f32 %v1387, %v1388
    %v1390 = vand.u32 %v1389, 4294901760
    %1391 = vmatmul.mubr.f32.gmra.mrb[0].mxu0 %v1390
    %v1392 = vpop.f32.mrb[0].mxu0
    %v1393 = vadd.f32 0.0, %v1392
    %v1394 = vpop.f32.mrb[0].mxu0
    %1395 = vdwg.mxu0
    %1396 = vmatprep.subr.mxu0 0.0
    %v1397 = vand.u32 %v1306, 4294901760
    %v1398 = vsub.f32 %v1306, %v1397
    %v1399 = vand.u32 %v1398, 4294901760
    %v1400 = vsub.f32 %v1398, %v1399
    %v1401 = vand.u32 %v1400, 4294901760
    %1402 = vmatpush1.xpose.msra.mxu0 %v1401
    %1403 = vmatprep.subr.mxu0 0.0
    %v1404 = vand.u32 %v1309, 4294901760
    %v1405 = vsub.f32 %v1309, %v1404
    %v1406 = vand.u32 %v1405, 4294901760
    %v1407 = vsub.f32 %v1405, %v1406
    %v1408 = vand.u32 %v1407, 4294901760
    %1409 = vmatpush1.xpose.msra.mxu0 %v1408
    %1410 = vmatprep.subr.mxu0 0.0
    %v1411 = vand.u32 %v1312, 4294901760
    %v1412 = vsub.f32 %v1312, %v1411
    %v1413 = vand.u32 %v1412, 4294901760
    %v1414 = vsub.f32 %v1412, %v1413
    %v1415 = vand.u32 %v1414, 4294901760
    %1416 = vmatpush1.xpose.msra.mxu0 %v1415
    %1417 = vmatprep.subr.mxu0 0.0
    %v1418 = vand.u32 %v1315, 4294901760
    %v1419 = vsub.f32 %v1315, %v1418
    %v1420 = vand.u32 %v1419, 4294901760
    %v1421 = vsub.f32 %v1419, %v1420
    %v1422 = vand.u32 %v1421, 4294901760
    %1423 = vmatpush1.xpose.msra.mxu0 %v1422
    %1424 = vmatprep.subr.mxu0 0.0
    %1425 = vmatpush1.xpose.msra.mxu0 0.0
    %1426 = vmatprep.subr.mxu0 0.0
    %1427 = vmatpush1.xpose.msra.mxu0 0.0
    %1428 = vmatprep.subr.mxu0 0.0
    %1429 = vmatpush1.xpose.msra.mxu0 0.0
    %1430 = vmatprep.subr.mxu0 0.0
    %1431 = vmatpush1.xpose.msra.mxu0 0.0
    %1432 = vmatprep.subr.mxu0 0.0
    %1433 = vmatpush1.xpose.msra.mxu0 0.0
    %1434 = vmatprep.subr.mxu0 0.0
    %1435 = vmatpush1.xpose.msra.mxu0 0.0
    %1436 = vmatprep.subr.mxu0 0.0
    %1437 = vmatpush1.xpose.msra.mxu0 0.0
    %1438 = vmatprep.subr.mxu0 0.0
    %1439 = vmatpush1.xpose.msra.mxu0 0.0
    %1440 = vmatprep.subr.mxu0 0.0
    %1441 = vmatpush1.xpose.msra.mxu0 0.0
    %1442 = vmatprep.subr.mxu0 0.0
    %1443 = vmatpush1.xpose.msra.mxu0 0.0
    %1444 = vmatprep.subr.mxu0 0.0
    %1445 = vmatpush1.xpose.msra.mxu0 0.0
    %1446 = vmatprep.subr.mxu0 0.0
    %1447 = vmatpush1.xpose.msra.mxu0 0.0
    %1448 = vmatprep.subr.mxu0 0.0
    %1449 = vmatpush1.xpose.msra.mxu0 0.0
    %1450 = vmatprep.subr.mxu0 0.0
    %1451 = vmatpush1.xpose.msra.mxu0 0.0
    %1452 = vmatprep.subr.mxu0 0.0
    %1453 = vmatpush1.xpose.msra.mxu0 0.0
    %1454 = vmatprep.subr.mxu0 0.0
    %1455 = vmatpush1.xpose.msra.mxu0 0.0
    %1456 = vmatprep.subr.mxu0 0.0
    %1457 = vmatpush1.xpose.msra.mxu0 0.0
    %1458 = vmatprep.subr.mxu0 0.0
    %1459 = vmatpush1.xpose.msra.mxu0 0.0
    %1460 = vmatprep.subr.mxu0 0.0
    %1461 = vmatpush1.xpose.msra.mxu0 0.0
    %1462 = vmatprep.subr.mxu0 0.0
    %1463 = vmatpush1.xpose.msra.mxu0 0.0
    %1464 = vmatprep.subr.mxu0 0.0
    %1465 = vmatpush1.xpose.msra.mxu0 0.0
    %1466 = vmatprep.subr.mxu0 0.0
    %1467 = vmatpush1.xpose.msra.mxu0 0.0
    %1468 = vmatprep.subr.mxu0 0.0
    %1469 = vmatpush1.xpose.msra.mxu0 0.0
    %1470 = vmatprep.subr.mxu0 0.0
    %1471 = vmatpush1.xpose.msra.mxu0 0.0
    %1472 = vmatprep.subr.mxu0 0.0
    %1473 = vmatpush1.xpose.msra.mxu0 0.0
    %1474 = vmatprep.subr.mxu0 0.0
    %1475 = vmatpush1.xpose.msra.mxu0 0.0
    %1476 = vmatprep.subr.mxu0 0.0
    %1477 = vmatpush1.xpose.msra.mxu0 0.0
    %1478 = vmatprep.subr.mxu0 0.0
    %1479 = vmatpush1.xpose.msra.mxu0 0.0
    %1480 = vmatprep.mubr.f32.mxu0 0.0
    %v1481 = vand.u32 %v1303, 4294901760
    %1482 = vmatmul.mubr.f32.gmra.mrb[0].mxu0 %v1481
    %v1483 = vpop.f32.mrb[0].mxu0
    %v1484 = vadd.f32 %v1393, %v1483
    %v1485 = vpop.f32.mrb[0].mxu0
    %1486 = vdwg.mxu0
    %1487 = vmatprep.subr.mxu0 0.0
    %v1488 = vand.u32 %v1306, 4294901760
    %v1489 = vsub.f32 %v1306, %v1488
    %1490 = vmatpush1.xpose.msra.mxu0 %v1489
    %1491 = vmatprep.subr.mxu0 0.0
    %v1492 = vand.u32 %v1309, 4294901760
    %v1493 = vsub.f32 %v1309, %v1492
    %1494 = vmatpush1.xpose.msra.mxu0 %v1493
    %1495 = vmatprep.subr.mxu0 0.0
    %v1496 = vand.u32 %v1312, 4294901760
    %v1497 = vsub.f32 %v1312, %v1496
    %1498 = vmatpush1.xpose.msra.mxu0 %v1497
    %1499 = vmatprep.subr.mxu0 0.0
    %v1500 = vand.u32 %v1315, 4294901760
    %v1501 = vsub.f32 %v1315, %v1500
    %1502 = vmatpush1.xpose.msra.mxu0 %v1501
    %1503 = vmatprep.subr.mxu0 0.0
    %1504 = vmatpush1.xpose.msra.mxu0 0.0
    %1505 = vmatprep.subr.mxu0 0.0
    %1506 = vmatpush1.xpose.msra.mxu0 0.0
    %1507 = vmatprep.subr.mxu0 0.0
    %1508 = vmatpush1.xpose.msra.mxu0 0.0
    %1509 = vmatprep.subr.mxu0 0.0
    %1510 = vmatpush1.xpose.msra.mxu0 0.0
    %1511 = vmatprep.subr.mxu0 0.0
    %1512 = vmatpush1.xpose.msra.mxu0 0.0
    %1513 = vmatprep.subr.mxu0 0.0
    %1514 = vmatpush1.xpose.msra.mxu0 0.0
    %1515 = vmatprep.subr.mxu0 0.0
    %1516 = vmatpush1.xpose.msra.mxu0 0.0
    %1517 = vmatprep.subr.mxu0 0.0
    %1518 = vmatpush1.xpose.msra.mxu0 0.0
    %1519 = vmatprep.subr.mxu0 0.0
    %1520 = vmatpush1.xpose.msra.mxu0 0.0
    %1521 = vmatprep.subr.mxu0 0.0
    %1522 = vmatpush1.xpose.msra.mxu0 0.0
    %1523 = vmatprep.subr.mxu0 0.0
    %1524 = vmatpush1.xpose.msra.mxu0 0.0
    %1525 = vmatprep.subr.mxu0 0.0
    %1526 = vmatpush1.xpose.msra.mxu0 0.0
    %1527 = vmatprep.subr.mxu0 0.0
    %1528 = vmatpush1.xpose.msra.mxu0 0.0
    %1529 = vmatprep.subr.mxu0 0.0
    %1530 = vmatpush1.xpose.msra.mxu0 0.0
    %1531 = vmatprep.subr.mxu0 0.0
    %1532 = vmatpush1.xpose.msra.mxu0 0.0
    %1533 = vmatprep.subr.mxu0 0.0
    %1534 = vmatpush1.xpose.msra.mxu0 0.0
    %1535 = vmatprep.subr.mxu0 0.0
    %1536 = vmatpush1.xpose.msra.mxu0 0.0
    %1537 = vmatprep.subr.mxu0 0.0
    %1538 = vmatpush1.xpose.msra.mxu0 0.0
    %1539 = vmatprep.subr.mxu0 0.0
    %1540 = vmatpush1.xpose.msra.mxu0 0.0
    %1541 = vmatprep.subr.mxu0 0.0
    %1542 = vmatpush1.xpose.msra.mxu0 0.0
    %1543 = vmatprep.subr.mxu0 0.0
    %1544 = vmatpush1.xpose.msra.mxu0 0.0
    %1545 = vmatprep.subr.mxu0 0.0
    %1546 = vmatpush1.xpose.msra.mxu0 0.0
    %1547 = vmatprep.subr.mxu0 0.0
    %1548 = vmatpush1.xpose.msra.mxu0 0.0
    %1549 = vmatprep.subr.mxu0 0.0
    %1550 = vmatpush1.xpose.msra.mxu0 0.0
    %1551 = vmatprep.subr.mxu0 0.0
    %1552 = vmatpush1.xpose.msra.mxu0 0.0
    %1553 = vmatprep.subr.mxu0 0.0
    %1554 = vmatpush1.xpose.msra.mxu0 0.0
    %1555 = vmatprep.subr.mxu0 0.0
    %1556 = vmatpush1.xpose.msra.mxu0 0.0
    %1557 = vmatprep.subr.mxu0 0.0
    %1558 = vmatpush1.xpose.msra.mxu0 0.0
    %1559 = vmatprep.mubr.f32.mxu0 0.0
    %v1560 = vand.u32 %v1303, 4294901760
    %v1561 = vsub.f32 %v1303, %v1560
    %1562 = vmatmul.mubr.f32.gmra.mrb[0].mxu0 %v1561
    %v1563 = vpop.f32.mrb[0].mxu0
    %v1564 = vadd.f32 %v1484, %v1563
    %v1565 = vpop.f32.mrb[0].mxu0
    %1566 = vdwg.mxu0
    %1567 = vmatprep.subr.mxu0 0.0
    %v1568 = vand.u32 %v1306, 4294901760
    %1569 = vmatpush1.xpose.msra.mxu0 %v1568
    %1570 = vmatprep.subr.mxu0 0.0
    %v1571 = vand.u32 %v1309, 4294901760
    %1572 = vmatpush1.xpose.msra.mxu0 %v1571
    %1573 = vmatprep.subr.mxu0 0.0
    %v1574 = vand.u32 %v1312, 4294901760
    %1575 = vmatpush1.xpose.msra.mxu0 %v1574
    %1576 = vmatprep.subr.mxu0 0.0
    %v1577 = vand.u32 %v1315, 4294901760
    %1578 = vmatpush1.xpose.msra.mxu0 %v1577
    %1579 = vmatprep.subr.mxu0 0.0
    %1580 = vmatpush1.xpose.msra.mxu0 0.0
    %1581 = vmatprep.subr.mxu0 0.0
    %1582 = vmatpush1.xpose.msra.mxu0 0.0
    %1583 = vmatprep.subr.mxu0 0.0
    %1584 = vmatpush1.xpose.msra.mxu0 0.0
    %1585 = vmatprep.subr.mxu0 0.0
    %1586 = vmatpush1.xpose.msra.mxu0 0.0
    %1587 = vmatprep.subr.mxu0 0.0
    %1588 = vmatpush1.xpose.msra.mxu0 0.0
    %1589 = vmatprep.subr.mxu0 0.0
    %1590 = vmatpush1.xpose.msra.mxu0 0.0
    %1591 = vmatprep.subr.mxu0 0.0
    %1592 = vmatpush1.xpose.msra.mxu0 0.0
    %1593 = vmatprep.subr.mxu0 0.0
    %1594 = vmatpush1.xpose.msra.mxu0 0.0
    %1595 = vmatprep.subr.mxu0 0.0
    %1596 = vmatpush1.xpose.msra.mxu0 0.0
    %1597 = vmatprep.subr.mxu0 0.0
    %1598 = vmatpush1.xpose.msra.mxu0 0.0
    %1599 = vmatprep.subr.mxu0 0.0
    %1600 = vmatpush1.xpose.msra.mxu0 0.0
    %1601 = vmatprep.subr.mxu0 0.0
    %1602 = vmatpush1.xpose.msra.mxu0 0.0
    %1603 = vmatprep.subr.mxu0 0.0
    %1604 = vmatpush1.xpose.msra.mxu0 0.0
    %1605 = vmatprep.subr.mxu0 0.0
    %1606 = vmatpush1.xpose.msra.mxu0 0.0
    %1607 = vmatprep.subr.mxu0 0.0
    %1608 = vmatpush1.xpose.msra.mxu0 0.0
    %1609 = vmatprep.subr.mxu0 0.0
    %1610 = vmatpush1.xpose.msra.mxu0 0.0
    %1611 = vmatprep.subr.mxu0 0.0
    %1612 = vmatpush1.xpose.msra.mxu0 0.0
    %1613 = vmatprep.subr.mxu0 0.0
    %1614 = vmatpush1.xpose.msra.mxu0 0.0
    %1615 = vmatprep.subr.mxu0 0.0
    %1616 = vmatpush1.xpose.msra.mxu0 0.0
    %1617 = vmatprep.subr.mxu0 0.0
    %1618 = vmatpush1.xpose.msra.mxu0 0.0
    %1619 = vmatprep.subr.mxu0 0.0
    %1620 = vmatpush1.xpose.msra.mxu0 0.0
    %1621 = vmatprep.subr.mxu0 0.0
    %1622 = vmatpush1.xpose.msra.mxu0 0.0
    %1623 = vmatprep.subr.mxu0 0.0
    %1624 = vmatpush1.xpose.msra.mxu0 0.0
    %1625 = vmatprep.subr.mxu0 0.0
    %1626 = vmatpush1.xpose.msra.mxu0 0.0
    %1627 = vmatprep.subr.mxu0 0.0
    %1628 = vmatpush1.xpose.msra.mxu0 0.0
    %1629 = vmatprep.subr.mxu0 0.0
    %1630 = vmatpush1.xpose.msra.mxu0 0.0
    %1631 = vmatprep.subr.mxu0 0.0
    %1632 = vmatpush1.xpose.msra.mxu0 0.0
    %1633 = vmatprep.subr.mxu0 0.0
    %1634 = vmatpush1.xpose.msra.mxu0 0.0
    %1635 = vmatprep.mubr.f32.mxu0 0.0
    %v1636 = vand.u32 %v1303, 4294901760
    %v1637 = vsub.f32 %v1303, %v1636
    %v1638 = vand.u32 %v1637, 4294901760
    %1639 = vmatmul.mubr.f32.gmra.mrb[0].mxu0 %v1638
    %v1640 = vpop.f32.mrb[0].mxu0
    %v1641 = vadd.f32 %v1564, %v1640
    %v1642 = vpop.f32.mrb[0].mxu0
    %1643 = vdwg.mxu0
    %1644 = vmatprep.subr.mxu0 0.0
    %v1645 = vand.u32 %v1306, 4294901760
    %v1646 = vsub.f32 %v1306, %v1645
    %v1647 = vand.u32 %v1646, 4294901760
    %1648 = vmatpush1.xpose.msra.mxu0 %v1647
    %1649 = vmatprep.subr.mxu0 0.0
    %v1650 = vand.u32 %v1309, 4294901760
    %v1651 = vsub.f32 %v1309, %v1650
    %v1652 = vand.u32 %v1651, 4294901760
    %1653 = vmatpush1.xpose.msra.mxu0 %v1652
    %1654 = vmatprep.subr.mxu0 0.0
    %v1655 = vand.u32 %v1312, 4294901760
    %v1656 = vsub.f32 %v1312, %v1655
    %v1657 = vand.u32 %v1656, 4294901760
    %1658 = vmatpush1.xpose.msra.mxu0 %v1657
    %1659 = vmatprep.subr.mxu0 0.0
    %v1660 = vand.u32 %v1315, 4294901760
    %v1661 = vsub.f32 %v1315, %v1660
    %v1662 = vand.u32 %v1661, 4294901760
    %1663 = vmatpush1.xpose.msra.mxu0 %v1662
    %1664 = vmatprep.subr.mxu0 0.0
    %1665 = vmatpush1.xpose.msra.mxu0 0.0
    %1666 = vmatprep.subr.mxu0 0.0
    %1667 = vmatpush1.xpose.msra.mxu0 0.0
    %1668 = vmatprep.subr.mxu0 0.0
    %1669 = vmatpush1.xpose.msra.mxu0 0.0
    %1670 = vmatprep.subr.mxu0 0.0
    %1671 = vmatpush1.xpose.msra.mxu0 0.0
    %1672 = vmatprep.subr.mxu0 0.0
    %1673 = vmatpush1.xpose.msra.mxu0 0.0
    %1674 = vmatprep.subr.mxu0 0.0
    %1675 = vmatpush1.xpose.msra.mxu0 0.0
    %1676 = vmatprep.subr.mxu0 0.0
    %1677 = vmatpush1.xpose.msra.mxu0 0.0
    %1678 = vmatprep.subr.mxu0 0.0
    %1679 = vmatpush1.xpose.msra.mxu0 0.0
    %1680 = vmatprep.subr.mxu0 0.0
    %1681 = vmatpush1.xpose.msra.mxu0 0.0
    %1682 = vmatprep.subr.mxu0 0.0
    %1683 = vmatpush1.xpose.msra.mxu0 0.0
    %1684 = vmatprep.subr.mxu0 0.0
    %1685 = vmatpush1.xpose.msra.mxu0 0.0
    %1686 = vmatprep.subr.mxu0 0.0
    %1687 = vmatpush1.xpose.msra.mxu0 0.0
    %1688 = vmatprep.subr.mxu0 0.0
    %1689 = vmatpush1.xpose.msra.mxu0 0.0
    %1690 = vmatprep.subr.mxu0 0.0
    %1691 = vmatpush1.xpose.msra.mxu0 0.0
    %1692 = vmatprep.subr.mxu0 0.0
    %1693 = vmatpush1.xpose.msra.mxu0 0.0
    %1694 = vmatprep.subr.mxu0 0.0
    %1695 = vmatpush1.xpose.msra.mxu0 0.0
    %1696 = vmatprep.subr.mxu0 0.0
    %1697 = vmatpush1.xpose.msra.mxu0 0.0
    %1698 = vmatprep.subr.mxu0 0.0
    %1699 = vmatpush1.xpose.msra.mxu0 0.0
    %1700 = vmatprep.subr.mxu0 0.0
    %1701 = vmatpush1.xpose.msra.mxu0 0.0
    %1702 = vmatprep.subr.mxu0 0.0
    %1703 = vmatpush1.xpose.msra.mxu0 0.0
    %1704 = vmatprep.subr.mxu0 0.0
    %1705 = vmatpush1.xpose.msra.mxu0 0.0
    %1706 = vmatprep.subr.mxu0 0.0
    %1707 = vmatpush1.xpose.msra.mxu0 0.0
    %1708 = vmatprep.subr.mxu0 0.0
    %1709 = vmatpush1.xpose.msra.mxu0 0.0
    %1710 = vmatprep.subr.mxu0 0.0
    %1711 = vmatpush1.xpose.msra.mxu0 0.0
    %1712 = vmatprep.subr.mxu0 0.0
    %1713 = vmatpush1.xpose.msra.mxu0 0.0
    %1714 = vmatprep.subr.mxu0 0.0
    %1715 = vmatpush1.xpose.msra.mxu0 0.0
    %1716 = vmatprep.subr.mxu0 0.0
    %1717 = vmatpush1.xpose.msra.mxu0 0.0
    %1718 = vmatprep.subr.mxu0 0.0
    %1719 = vmatpush1.xpose.msra.mxu0 0.0
    %1720 = vmatprep.mubr.f32.mxu0 0.0
    %v1721 = vand.u32 %v1303, 4294901760
    %1722 = vmatmul.mubr.f32.gmra.mrb[0].mxu0 %v1721
    %v1723 = vpop.f32.mrb[0].mxu0
    %v1724 = vadd.f32 %v1641, %v1723
    %v1725 = vpop.f32.mrb[0].mxu0
    %1726 = vdwg.mxu0
    %1727 = vmatprep.subr.mxu0 0.0
    %v1728 = vand.u32 %v1306, 4294901760
    %1729 = vmatpush1.xpose.msra.mxu0 %v1728
    %1730 = vmatprep.subr.mxu0 0.0
    %v1731 = vand.u32 %v1309, 4294901760
    %1732 = vmatpush1.xpose.msra.mxu0 %v1731
    %1733 = vmatprep.subr.mxu0 0.0
    %v1734 = vand.u32 %v1312, 4294901760
    %1735 = vmatpush1.xpose.msra.mxu0 %v1734
    %1736 = vmatprep.subr.mxu0 0.0
    %v1737 = vand.u32 %v1315, 4294901760
    %1738 = vmatpush1.xpose.msra.mxu0 %v1737
    %1739 = vmatprep.subr.mxu0 0.0
    %1740 = vmatpush1.xpose.msra.mxu0 0.0
    %1741 = vmatprep.subr.mxu0 0.0
    %1742 = vmatpush1.xpose.msra.mxu0 0.0
    %1743 = vmatprep.subr.mxu0 0.0
    %1744 = vmatpush1.xpose.msra.mxu0 0.0
    %1745 = vmatprep.subr.mxu0 0.0
    %1746 = vmatpush1.xpose.msra.mxu0 0.0
    %1747 = vmatprep.subr.mxu0 0.0
    %1748 = vmatpush1.xpose.msra.mxu0 0.0
    %1749 = vmatprep.subr.mxu0 0.0
    %1750 = vmatpush1.xpose.msra.mxu0 0.0
    %1751 = vmatprep.subr.mxu0 0.0
    %1752 = vmatpush1.xpose.msra.mxu0 0.0
    %1753 = vmatprep.subr.mxu0 0.0
    %1754 = vmatpush1.xpose.msra.mxu0 0.0
    %1755 = vmatprep.subr.mxu0 0.0
    %1756 = vmatpush1.xpose.msra.mxu0 0.0
    %1757 = vmatprep.subr.mxu0 0.0
    %1758 = vmatpush1.xpose.msra.mxu0 0.0
    %1759 = vmatprep.subr.mxu0 0.0
    %1760 = vmatpush1.xpose.msra.mxu0 0.0
    %1761 = vmatprep.subr.mxu0 0.0
    %1762 = vmatpush1.xpose.msra.mxu0 0.0
    %1763 = vmatprep.subr.mxu0 0.0
    %1764 = vmatpush1.xpose.msra.mxu0 0.0
    %1765 = vmatprep.subr.mxu0 0.0
    %1766 = vmatpush1.xpose.msra.mxu0 0.0
    %1767 = vmatprep.subr.mxu0 0.0
    %1768 = vmatpush1.xpose.msra.mxu0 0.0
    %1769 = vmatprep.subr.mxu0 0.0
    %1770 = vmatpush1.xpose.msra.mxu0 0.0
    %1771 = vmatprep.subr.mxu0 0.0
    %1772 = vmatpush1.xpose.msra.mxu0 0.0
    %1773 = vmatprep.subr.mxu0 0.0
    %1774 = vmatpush1.xpose.msra.mxu0 0.0
    %1775 = vmatprep.subr.mxu0 0.0
    %1776 = vmatpush1.xpose.msra.mxu0 0.0
    %1777 = vmatprep.subr.mxu0 0.0
    %1778 = vmatpush1.xpose.msra.mxu0 0.0
    %1779 = vmatprep.subr.mxu0 0.0
    %1780 = vmatpush1.xpose.msra.mxu0 0.0
    %1781 = vmatprep.subr.mxu0 0.0
    %1782 = vmatpush1.xpose.msra.mxu0 0.0
    %1783 = vmatprep.subr.mxu0 0.0
    %1784 = vmatpush1.xpose.msra.mxu0 0.0
    %1785 = vmatprep.subr.mxu0 0.0
    %1786 = vmatpush1.xpose.msra.mxu0 0.0
    %1787 = vmatprep.subr.mxu0 0.0
    %1788 = vmatpush1.xpose.msra.mxu0 0.0
    %1789 = vmatprep.subr.mxu0 0.0
    %1790 = vmatpush1.xpose.msra.mxu0 0.0
    %1791 = vmatprep.subr.mxu0 0.0
    %1792 = vmatpush1.xpose.msra.mxu0 0.0
    %1793 = vmatprep.subr.mxu0 0.0
    %1794 = vmatpush1.xpose.msra.mxu0 0.0
    %1795 = vmatprep.mubr.f32.mxu0 0.0
    %v1796 = vand.u32 %v1303, 4294901760
    %1797 = vmatmul.mubr.f32.gmra.mrb[0].mxu0 %v1796
    %v1798 = vpop.f32.mrb[0].mxu0
    %v1799 = vadd.f32 %v1724, %v1798
    %v1800 = vpop.f32.mrb[0].mxu0
    %1801 = vdwg.mxu0
    %v1802 = vadd.s32 %v1295, 8
    %vm1803 = vcmp.le.s32.totalorder %v1297, %v1295
    %vm1804 = vcmp.le.s32.totalorder %v1297, %v1802
    %v1805 = vpack.c.bf16 %v477, %v475
    %1807 = vrot.lane.b32.xlu0 %v1805, 112
    %v1808 = vpop.permute.xlu0 %1807
    %vm1809 = vcmask 130048
    %v1811 = vsel %vm1809, %v1808, 0
    %v1814 = vsel %vm1809, %v1805, 0
    %1816 = vmatprep.subr.bf16.mxu0 0
    %1817 = vmatpush1.bf16.xpose.msra.mxu0 %v1814
    %1818 = vmatprep.subr.bf16.mxu0 0
    %1819 = vmatpush1.bf16.xpose.msra.mxu0 0
    %1820 = vmatprep.subr.bf16.mxu0 0
    %1821 = vmatpush1.bf16.xpose.msra.mxu0 0
    %1822 = vmatprep.subr.bf16.mxu0 0
    %1823 = vmatpush1.bf16.xpose.msra.mxu0 0
    %1824 = vmatprep.subr.bf16.mxu0 0
    %1825 = vmatpush1.bf16.xpose.msra.mxu0 0
    %1826 = vmatprep.subr.bf16.mxu0 0
    %1827 = vmatpush1.bf16.xpose.msra.mxu0 0
    %1828 = vmatprep.subr.bf16.mxu0 0
    %1829 = vmatpush1.bf16.xpose.msra.mxu0 0
    %1830 = vmatprep.subr.bf16.mxu0 0
    %1831 = vmatpush1.bf16.xpose.msra.mxu0 0
    %1832 = vmatprep.subr.bf16.mxu0 0
    %1833 = vmatpush1.bf16.xpose.msra.mxu0 0
    %1834 = vmatprep.subr.bf16.mxu0 0
    %1835 = vmatpush1.bf16.xpose.msra.mxu0 0
    %1836 = vmatprep.subr.bf16.mxu0 0
    %1837 = vmatpush1.bf16.xpose.msra.mxu0 0
    %1838 = vmatprep.subr.bf16.mxu0 0
    %1839 = vmatpush1.bf16.xpose.msra.mxu0 0
    %1840 = vmatprep.subr.bf16.mxu0 0
    %1841 = vmatpush1.bf16.xpose.msra.mxu0 0
    %1842 = vmatprep.subr.bf16.mxu0 0
    %1843 = vmatpush1.bf16.xpose.msra.mxu0 0
    %1844 = vmatprep.subr.bf16.mxu0 0
    %1845 = vmatpush1.bf16.xpose.msra.mxu0 0
    %1846 = vmatprep.subr.bf16.mxu0 0
    %1847 = vmatpush1.bf16.xpose.msra.mxu0 0
    %1848 = vmatprep.mubr.bf16.mxu0 0
    %1849 = vmatmul.mubr.bf16.gmra.mrb[0].mxu0 %v1811
    %v1850 = vpop.f32.mrb[0].mxu0
    %v1851 = vadd.f32 0.0, %v1850
    %v1852 = vpop.f32.mrb[0].mxu0
    %v1853 = vpop.f32.mrb[0].mxu0
    %v1854 = vadd.f32 0.0, %v1853
    %v1855 = vpop.f32.mrb[0].mxu0
    %1856 = vdwg.mxu0
    %1857 = vset.pattern.permute.xlu0 0
    %1858 = vperm.xlu0 %1857, %v1290
    %v1859 = vpop.permute.xlu0 %1858
    %1861 = vset.pattern.permute.xlu0 0
    %1862 = vperm.xlu0 %1861, %v1291
    %v1863 = vpop.permute.xlu0 %1862
    %v1865 = vlaneseq
    %v1866 = vshrl.u32 %v1865, 7
    %v1867 = vsub.s32 0, %v1866
    %v1868 = vrot.slane %v1799, %v1867
    %v1869 = vsub.f32 %v1859, %v1868
    %v1870 = vsub.f32 %v1863, %v1868
    %v1871 = vsel %vm1803, %v1869, -1e+30
    %v1872 = vsel %vm1804, %v1870, -1e+30
    %v1873 = vmul.f32 %v1871, 1.442695
    %v1874 = vpow.pop %v1873
    %v1875 = vmul.f32 %v1872, 1.442695
    %v1876 = vpow.pop %v1875
    %v1877 = vmul.f32 %v1851, %v1874
    %v1878 = vmul.f32 %v1854, %v1876
    %1880 = vset.pattern.permute.xlu0 0
    %1881 = vperm.xlu0 %1880, %v1147
    %v1882 = vpop.permute.xlu0 %1881
    %1885 = vset.pattern.permute.xlu0 0
    %1886 = vperm.xlu0 %1885, %v1148
    %v1887 = vpop.permute.xlu0 %1886
    %v1889 = vmul.f32 %v474, %v1882
    %v1890 = vmul.f32 %v476, %v1887
    %v1891 = vpack.c.bf16 %v1878, %v1877
    %v1892 = vpack.c.bf16 %v1890, %v1889
    %1894 = vrot.lane.b32.xlu0 %v1892, 64
    %v1895 = vpop.permute.xlu0 %1894
    %v1898 = vsel %vm1809, %v1891, 0
    %1900 = vmatprep.subr.bf16.mxu0 0
    %1901 = vmatpush1.bf16.msra.mxu0 %v1895
    %1902 = vmatprep.subr.bf16.mxu0 0
    %1903 = vmatpush1.bf16.msra.mxu0 0
    %1904 = vmatprep.subr.bf16.mxu0 0
    %1905 = vmatpush1.bf16.msra.mxu0 0
    %1906 = vmatprep.subr.bf16.mxu0 0
    %1907 = vmatpush1.bf16.msra.mxu0 0
    %1908 = vmatprep.subr.bf16.mxu0 0
    %1909 = vmatpush1.bf16.msra.mxu0 0
    %1910 = vmatprep.subr.bf16.mxu0 0
    %1911 = vmatpush1.bf16.msra.mxu0 0
    %1912 = vmatprep.subr.bf16.mxu0 0
    %1913 = vmatpush1.bf16.msra.mxu0 0
    %1914 = vmatprep.subr.bf16.mxu0 0
    %1915 = vmatpush1.bf16.msra.mxu0 0
    %1916 = vmatprep.subr.bf16.mxu0 0
    %1917 = vmatpush1.bf16.msra.mxu0 0
    %1918 = vmatprep.subr.bf16.mxu0 0
    %1919 = vmatpush1.bf16.msra.mxu0 0
    %1920 = vmatprep.subr.bf16.mxu0 0
    %1921 = vmatpush1.bf16.msra.mxu0 0
    %1922 = vmatprep.subr.bf16.mxu0 0
    %1923 = vmatpush1.bf16.msra.mxu0 0
    %1924 = vmatprep.subr.bf16.mxu0 0
    %1925 = vmatpush1.bf16.msra.mxu0 0
    %1926 = vmatprep.subr.bf16.mxu0 0
    %1927 = vmatpush1.bf16.msra.mxu0 0
    %1928 = vmatprep.subr.bf16.mxu0 0
    %1929 = vmatpush1.bf16.msra.mxu0 0
    %1930 = vmatprep.subr.bf16.mxu0 0
    %1931 = vmatpush1.bf16.msra.mxu0 0
    %1932 = vmatprep.mubr.bf16.mxu0 0
    %1933 = vmatmul.mubr.bf16.gmra.mrb[0].mxu0 %v1898
    %v1934 = vpop.f32.mrb[0].mxu0
    %v1935 = vadd.f32 0.0, %v1934
    %v1936 = vpop.f32.mrb[0].mxu0
    %v1937 = vpop.f32.mrb[0].mxu0
    %v1938 = vadd.f32 0.0, %v1937
    %v1939 = vpop.f32.mrb[0].mxu0
    %1940 = vdwg.mxu0
    %1941 = vst.msk [vmem:[#allocation2] sm:$0xff] %vm1809, %v1935
    %1942 = vst.msk [vmem:[#allocation2 + $0x8] sm:$0xff] %vm1809, %v1938
    %1943 = vset.pattern.permute.xlu0 1
    %1944 = vperm.xlu0 %1943, %v1290
    %v1945 = vpop.permute.xlu0 %1944
    %1947 = vset.pattern.permute.xlu0 1
    %1948 = vperm.xlu0 %1947, %v1291
    %v1949 = vpop.permute.xlu0 %1948
    %v1951 = vlaneseq
    %v1952 = vshrl.u32 %v1951, 7
    %v1953 = vsub.s32 1, %v1952
    %v1954 = vrot.slane %v1799, %v1953
    %v1955 = vsub.f32 %v1945, %v1954
    %v1956 = vsub.f32 %v1949, %v1954
    %v1957 = vsel %vm1803, %v1955, -1e+30
    %v1958 = vsel %vm1804, %v1956, -1e+30
    %v1959 = vmul.f32 %v1957, 1.442695
    %v1960 = vpow.pop %v1959
    %v1961 = vmul.f32 %v1958, 1.442695
    %v1962 = vpow.pop %v1961
    %v1963 = vmul.f32 %v1851, %v1960
    %v1964 = vmul.f32 %v1854, %v1962
    %1965 = vset.pattern.permute.xlu0 1
    %1966 = vperm.xlu0 %1965, %v1147
    %v1967 = vpop.permute.xlu0 %1966
    %1969 = vset.pattern.permute.xlu0 1
    %1970 = vperm.xlu0 %1969, %v1148
    %v1971 = vpop.permute.xlu0 %1970
    %v1973 = vmul.f32 %v474, %v1967
    %v1974 = vmul.f32 %v476, %v1971
    %v1975 = vpack.c.bf16 %v1964, %v1963
    %v1976 = vpack.c.bf16 %v1974, %v1973
    %1978 = vrot.lane.b32.xlu0 %v1976, 48
    %v1979 = vpop.permute.xlu0 %1978
    %v1982 = vsel %vm1809, %v1975, 0
    %1984 = vmatprep.subr.bf16.mxu0 0
    %1985 = vmatpush1.bf16.msra.mxu0 %v1979
    %1986 = vmatprep.subr.bf16.mxu0 0
    %1987 = vmatpush1.bf16.msra.mxu0 0
    %1988 = vmatprep.subr.bf16.mxu0 0
    %1989 = vmatpush1.bf16.msra.mxu0 0
    %1990 = vmatprep.subr.bf16.mxu0 0
    %1991 = vmatpush1.bf16.msra.mxu0 0
    %1992 = vmatprep.subr.bf16.mxu0 0
    %1993 = vmatpush1.bf16.msra.mxu0 0
    %1994 = vmatprep.subr.bf16.mxu0 0
    %1995 = vmatpush1.bf16.msra.mxu0 0
    %1996 = vmatprep.subr.bf16.mxu0 0
    %1997 = vmatpush1.bf16.msra.mxu0 0
    %1998 = vmatprep.subr.bf16.mxu0 0
    %1999 = vmatpush1.bf16.msra.mxu0 0
    %2000 = vmatprep.subr.bf16.mxu0 0
    %2001 = vmatpush1.bf16.msra.mxu0 0
    %2002 = vmatprep.subr.bf16.mxu0 0
    %2003 = vmatpush1.bf16.msra.mxu0 0
    %2004 = vmatprep.subr.bf16.mxu0 0
    %2005 = vmatpush1.bf16.msra.mxu0 0
    %2006 = vmatprep.subr.bf16.mxu0 0
    %2007 = vmatpush1.bf16.msra.mxu0 0
    %2008 = vmatprep.subr.bf16.mxu0 0
    %2009 = vmatpush1.bf16.msra.mxu0 0
    %2010 = vmatprep.subr.bf16.mxu0 0
    %2011 = vmatpush1.bf16.msra.mxu0 0
    %2012 = vmatprep.subr.bf16.mxu0 0
    %2013 = vmatpush1.bf16.msra.mxu0 0
    %2014 = vmatprep.subr.bf16.mxu0 0
    %2015 = vmatpush1.bf16.msra.mxu0 0
    %2016 = vmatprep.mubr.bf16.mxu0 0
    %2017 = vmatmul.mubr.bf16.gmra.mrb[0].mxu0 %v1982
    %v2018 = vpop.f32.mrb[0].mxu0
    %v2019 = vadd.f32 0.0, %v2018
    %v2020 = vpop.f32.mrb[0].mxu0
    %v2021 = vpop.f32.mrb[0].mxu0
    %v2022 = vadd.f32 0.0, %v2021
    %v2023 = vpop.f32.mrb[0].mxu0
    %2024 = vdwg.mxu0
    %2027 = vrot.lane.b32.xlu0 %v2019, 16
    %v2028 = vpop.permute.xlu0 %2027
    %2029 = vrot.lane.b32.xlu0 %v2022, 16
    %v2030 = vpop.permute.xlu0 %2029
    %vm2033 = vcmask 261248
    %2034 = vst.msk [vmem:[#allocation2] sm:$0xff] %vm2033, %v2028
    %2035 = vst.msk [vmem:[#allocation2 + $0x8] sm:$0xff] %vm2033, %v2030
    %2036 = vset.pattern.permute.xlu0 2
    %2037 = vperm.xlu0 %2036, %v1290
    %v2038 = vpop.permute.xlu0 %2037
    %2040 = vset.pattern.permute.xlu0 2
    %2041 = vperm.xlu0 %2040, %v1291
    %v2042 = vpop.permute.xlu0 %2041
    %v2044 = vlaneseq
    %v2045 = vshrl.u32 %v2044, 7
    %v2046 = vsub.s32 2, %v2045
    %v2047 = vrot.slane %v1799, %v2046
    %v2048 = vsub.f32 %v2038, %v2047
    %v2049 = vsub.f32 %v2042, %v2047
    %v2050 = vsel %vm1803, %v2048, -1e+30
    %v2051 = vsel %vm1804, %v2049, -1e+30
    %v2052 = vmul.f32 %v2050, 1.442695
    %v2053 = vpow.pop %v2052
    %v2054 = vmul.f32 %v2051, 1.442695
    %v2055 = vpow.pop %v2054
    %v2056 = vmul.f32 %v1851, %v2053
    %v2057 = vmul.f32 %v1854, %v2055
    %2058 = vset.pattern.permute.xlu0 2
    %2059 = vperm.xlu0 %2058, %v1147
    %v2060 = vpop.permute.xlu0 %2059
    %2062 = vset.pattern.permute.xlu0 2
    %2063 = vperm.xlu0 %2062, %v1148
    %v2064 = vpop.permute.xlu0 %2063
    %v2066 = vmul.f32 %v474, %v2060
    %v2067 = vmul.f32 %v476, %v2064
    %v2068 = vpack.c.bf16 %v2057, %v2056
    %v2069 = vpack.c.bf16 %v2067, %v2066
    %2071 = vrot.lane.b32.xlu0 %v2069, 32
    %v2072 = vpop.permute.xlu0 %2071
    %v2075 = vsel %vm1809, %v2068, 0
    %2077 = vmatprep.subr.bf16.mxu0 0
    %2078 = vmatpush1.bf16.msra.mxu0 %v2072
    %2079 = vmatprep.subr.bf16.mxu0 0
    %2080 = vmatpush1.bf16.msra.mxu0 0
    %2081 = vmatprep.subr.bf16.mxu0 0
    %2082 = vmatpush1.bf16.msra.mxu0 0
    %2083 = vmatprep.subr.bf16.mxu0 0
    %2084 = vmatpush1.bf16.msra.mxu0 0
    %2085 = vmatprep.subr.bf16.mxu0 0
    %2086 = vmatpush1.bf16.msra.mxu0 0
    %2087 = vmatprep.subr.bf16.mxu0 0
    %2088 = vmatpush1.bf16.msra.mxu0 0
    %2089 = vmatprep.subr.bf16.mxu0 0
    %2090 = vmatpush1.bf16.msra.mxu0 0
    %2091 = vmatprep.subr.bf16.mxu0 0
    %2092 = vmatpush1.bf16.msra.mxu0 0
    %2093 = vmatprep.subr.bf16.mxu0 0
    %2094 = vmatpush1.bf16.msra.mxu0 0
    %2095 = vmatprep.subr.bf16.mxu0 0
    %2096 = vmatpush1.bf16.msra.mxu0 0
    %2097 = vmatprep.subr.bf16.mxu0 0
    %2098 = vmatpush1.bf16.msra.mxu0 0
    %2099 = vmatprep.subr.bf16.mxu0 0
    %2100 = vmatpush1.bf16.msra.mxu0 0
    %2101 = vmatprep.subr.bf16.mxu0 0
    %2102 = vmatpush1.bf16.msra.mxu0 0
    %2103 = vmatprep.subr.bf16.mxu0 0
    %2104 = vmatpush1.bf16.msra.mxu0 0
    %2105 = vmatprep.subr.bf16.mxu0 0
    %2106 = vmatpush1.bf16.msra.mxu0 0
    %2107 = vmatprep.subr.bf16.mxu0 0
    %2108 = vmatpush1.bf16.msra.mxu0 0
    %2109 = vmatprep.mubr.bf16.mxu0 0
    %2110 = vmatmul.mubr.bf16.gmra.mrb[0].mxu0 %v2075
    %v2111 = vpop.f32.mrb[0].mxu0
    %v2112 = vadd.f32 0.0, %v2111
    %v2113 = vpop.f32.mrb[0].mxu0
    %v2114 = vpop.f32.mrb[0].mxu0
    %v2115 = vadd.f32 0.0, %v2114
    %v2116 = vpop.f32.mrb[0].mxu0
    %2117 = vdwg.mxu0
    %2120 = vrot.lane.b32.xlu0 %v2112, 32
    %v2121 = vpop.permute.xlu0 %2120
    %2122 = vrot.lane.b32.xlu0 %v2115, 32
    %v2123 = vpop.permute.xlu0 %2122
    %vm2126 = vcmask 392448
    %2127 = vst.msk [vmem:[#allocation2] sm:$0xff] %vm2126, %v2121
    %2128 = vst.msk [vmem:[#allocation2 + $0x8] sm:$0xff] %vm2126, %v2123
    %2129 = vset.pattern.permute.xlu0 3
    %2130 = vperm.xlu0 %2129, %v1290
    %v2131 = vpop.permute.xlu0 %2130
    %2133 = vset.pattern.permute.xlu0 3
    %2134 = vperm.xlu0 %2133, %v1291
    %v2135 = vpop.permute.xlu0 %2134
    %v2137 = vlaneseq
    %v2138 = vshrl.u32 %v2137, 7
    %v2139 = vsub.s32 3, %v2138
    %v2140 = vrot.slane %v1799, %v2139
    %v2141 = vsub.f32 %v2131, %v2140
    %v2142 = vsub.f32 %v2135, %v2140
    %v2143 = vsel %vm1803, %v2141, -1e+30
    %v2144 = vsel %vm1804, %v2142, -1e+30
    %v2145 = vmul.f32 %v2143, 1.442695
    %v2146 = vpow.pop %v2145
    %v2147 = vmul.f32 %v2144, 1.442695
    %v2148 = vpow.pop %v2147
    %v2149 = vmul.f32 %v1851, %v2146
    %v2150 = vmul.f32 %v1854, %v2148
    %2151 = vset.pattern.permute.xlu0 3
    %2152 = vperm.xlu0 %2151, %v1147
    %v2153 = vpop.permute.xlu0 %2152
    %2155 = vset.pattern.permute.xlu0 3
    %2156 = vperm.xlu0 %2155, %v1148
    %v2157 = vpop.permute.xlu0 %2156
    %v2159 = vmul.f32 %v474, %v2153
    %v2160 = vmul.f32 %v476, %v2157
    %v2161 = vpack.c.bf16 %v2150, %v2149
    %v2162 = vpack.c.bf16 %v2160, %v2159
    %2164 = vrot.lane.b32.xlu0 %v2162, 16
    %v2165 = vpop.permute.xlu0 %2164
    %v2168 = vsel %vm1809, %v2161, 0
    %2170 = vmatprep.subr.bf16.mxu0 0
    %2171 = vmatpush1.bf16.msra.mxu0 %v2165
    %2172 = vmatprep.subr.bf16.mxu0 0
    %2173 = vmatpush1.bf16.msra.mxu0 0
    %2174 = vmatprep.subr.bf16.mxu0 0
    %2175 = vmatpush1.bf16.msra.mxu0 0
    %2176 = vmatprep.subr.bf16.mxu0 0
    %2177 = vmatpush1.bf16.msra.mxu0 0
    %2178 = vmatprep.subr.bf16.mxu0 0
    %2179 = vmatpush1.bf16.msra.mxu0 0
    %2180 = vmatprep.subr.bf16.mxu0 0
    %2181 = vmatpush1.bf16.msra.mxu0 0
    %2182 = vmatprep.subr.bf16.mxu0 0
    %2183 = vmatpush1.bf16.msra.mxu0 0
    %2184 = vmatprep.subr.bf16.mxu0 0
    %2185 = vmatpush1.bf16.msra.mxu0 0
    %2186 = vmatprep.subr.bf16.mxu0 0
    %2187 = vmatpush1.bf16.msra.mxu0 0
    %2188 = vmatprep.subr.bf16.mxu0 0
    %2189 = vmatpush1.bf16.msra.mxu0 0
    %2190 = vmatprep.subr.bf16.mxu0 0
    %2191 = vmatpush1.bf16.msra.mxu0 0
    %2192 = vmatprep.subr.bf16.mxu0 0
    %2193 = vmatpush1.bf16.msra.mxu0 0
    %2194 = vmatprep.subr.bf16.mxu0 0
    %2195 = vmatpush1.bf16.msra.mxu0 0
    %2196 = vmatprep.subr.bf16.mxu0 0
    %2197 = vmatpush1.bf16.msra.mxu0 0
    %2198 = vmatprep.subr.bf16.mxu0 0
    %2199 = vmatpush1.bf16.msra.mxu0 0
    %2200 = vmatprep.subr.bf16.mxu0 0
    %2201 = vmatpush1.bf16.msra.mxu0 0
    %2202 = vmatprep.mubr.bf16.mxu0 0
    %2203 = vmatmul.mubr.bf16.gmra.mrb[0].mxu0 %v2168
    %v2204 = vpop.f32.mrb[0].mxu0
    %v2205 = vadd.f32 0.0, %v2204
    %v2206 = vpop.f32.mrb[0].mxu0
    %v2207 = vpop.f32.mrb[0].mxu0
    %v2208 = vadd.f32 0.0, %v2207
    %v2209 = vpop.f32.mrb[0].mxu0
    %2210 = vdwg.mxu0
    %2213 = vrot.lane.b32.xlu0 %v2205, 48
    %v2214 = vpop.permute.xlu0 %2213
    %2215 = vrot.lane.b32.xlu0 %v2208, 48
    %v2216 = vpop.permute.xlu0 %2215
    %vm2219 = vcmask 523648
    %2220 = vst.msk [vmem:[#allocation2] sm:$0xff] %vm2219, %v2214
    %2221 = vst.msk [vmem:[#allocation2 + $0x8] sm:$0xff] %vm2219, %v2216
    %v2222 = vpack.c.bf16 %v481, %v479
    %2224 = vrot.lane.b32.xlu0 %v2222, 112
    %v2225 = vpop.permute.xlu0 %2224
    %v2227 = vsel %vm1809, %v2225, 0
    %v2230 = vsel %vm1809, %v2222, 0
    %2232 = vmatprep.subr.bf16.mxu0 0
    %2233 = vmatpush1.bf16.xpose.msra.mxu0 %v2230
    %2234 = vmatprep.subr.bf16.mxu0 0
    %2235 = vmatpush1.bf16.xpose.msra.mxu0 0
    %2236 = vmatprep.subr.bf16.mxu0 0
    %2237 = vmatpush1.bf16.xpose.msra.mxu0 0
    %2238 = vmatprep.subr.bf16.mxu0 0
    %2239 = vmatpush1.bf16.xpose.msra.mxu0 0
    %2240 = vmatprep.subr.bf16.mxu0 0
    %2241 = vmatpush1.bf16.xpose.msra.mxu0 0
    %2242 = vmatprep.subr.bf16.mxu0 0
    %2243 = vmatpush1.bf16.xpose.msra.mxu0 0
    %2244 = vmatprep.subr.bf16.mxu0 0
    %2245 = vmatpush1.bf16.xpose.msra.mxu0 0
    %2246 = vmatprep.subr.bf16.mxu0 0
    %2247 = vmatpush1.bf16.xpose.msra.mxu0 0
    %2248 = vmatprep.subr.bf16.mxu0 0
    %2249 = vmatpush1.bf16.xpose.msra.mxu0 0
    %2250 = vmatprep.subr.bf16.mxu0 0
    %2251 = vmatpush1.bf16.xpose.msra.mxu0 0
    %2252 = vmatprep.subr.bf16.mxu0 0
    %2253 = vmatpush1.bf16.xpose.msra.mxu0 0
    %2254 = vmatprep.subr.bf16.mxu0 0
    %2255 = vmatpush1.bf16.xpose.msra.mxu0 0
    %2256 = vmatprep.subr.bf16.mxu0 0
    %2257 = vmatpush1.bf16.xpose.msra.mxu0 0
    %2258 = vmatprep.subr.bf16.mxu0 0
    %2259 = vmatpush1.bf16.xpose.msra.mxu0 0
    %2260 = vmatprep.subr.bf16.mxu0 0
    %2261 = vmatpush1.bf16.xpose.msra.mxu0 0
    %2262 = vmatprep.subr.bf16.mxu0 0
    %2263 = vmatpush1.bf16.xpose.msra.mxu0 0
    %2264 = vmatprep.mubr.bf16.mxu0 0
    %2265 = vmatmul.mubr.bf16.gmra.mrb[0].mxu0 %v2227
    %v2266 = vpop.f32.mrb[0].mxu0
    %v2267 = vadd.f32 0.0, %v2266
    %v2268 = vpop.f32.mrb[0].mxu0
    %v2269 = vpop.f32.mrb[0].mxu0
    %v2270 = vadd.f32 0.0, %v2269
    %v2271 = vpop.f32.mrb[0].mxu0
    %2272 = vdwg.mxu0
    %2273 = vset.pattern.permute.xlu0 0
    %2274 = vperm.xlu0 %2273, %v1292
    %v2275 = vpop.permute.xlu0 %2274
    %2277 = vset.pattern.permute.xlu0 0
    %2278 = vperm.xlu0 %2277, %v1293
    %v2279 = vpop.permute.xlu0 %2278
    %v2281 = vsub.f32 %v2275, %v1868
    %v2282 = vsub.f32 %v2279, %v1868
    %2285 = vrot.lane.b32.xlu0 %v2281, 112
    %v2286 = vpop.permute.xlu0 %2285
    %2287 = vrot.lane.b32.xlu0 %v2282, 112
    %v2288 = vpop.permute.xlu0 %2287
    %v2291 = vsel %vm1803, %v2286, -1e+30
    %v2292 = vsel %vm1804, %v2288, -1e+30
    %v2293 = vmul.f32 %v2291, 1.442695
    %v2294 = vpow.pop %v2293
    %v2295 = vmul.f32 %v2292, 1.442695
    %v2296 = vpow.pop %v2295
    %v2297 = vmul.f32 %v2267, %v2294
    %v2298 = vmul.f32 %v2270, %v2296
    %2300 = vset.pattern.permute.xlu0 0
    %2301 = vperm.xlu0 %2300, %v1149
    %v2302 = vpop.permute.xlu0 %2301
    %2305 = vset.pattern.permute.xlu0 0
    %2306 = vperm.xlu0 %2305, %v1150
    %v2307 = vpop.permute.xlu0 %2306
    %v2309 = vmul.f32 %v478, %v2302
    %v2310 = vmul.f32 %v480, %v2307
    %v2311 = vpack.c.bf16 %v2298, %v2297
    %v2312 = vpack.c.bf16 %v2310, %v2309
    %2314 = vrot.lane.b32.xlu0 %v2312, 64
    %v2315 = vpop.permute.xlu0 %2314
    %v2318 = vsel %vm1809, %v2311, 0
    %2320 = vmatprep.subr.bf16.mxu0 0
    %2321 = vmatpush1.bf16.msra.mxu0 %v2315
    %2322 = vmatprep.subr.bf16.mxu0 0
    %2323 = vmatpush1.bf16.msra.mxu0 0
    %2324 = vmatprep.subr.bf16.mxu0 0
    %2325 = vmatpush1.bf16.msra.mxu0 0
    %2326 = vmatprep.subr.bf16.mxu0 0
    %2327 = vmatpush1.bf16.msra.mxu0 0
    %2328 = vmatprep.subr.bf16.mxu0 0
    %2329 = vmatpush1.bf16.msra.mxu0 0
    %2330 = vmatprep.subr.bf16.mxu0 0
    %2331 = vmatpush1.bf16.msra.mxu0 0
    %2332 = vmatprep.subr.bf16.mxu0 0
    %2333 = vmatpush1.bf16.msra.mxu0 0
    %2334 = vmatprep.subr.bf16.mxu0 0
    %2335 = vmatpush1.bf16.msra.mxu0 0
    %2336 = vmatprep.subr.bf16.mxu0 0
    %2337 = vmatpush1.bf16.msra.mxu0 0
    %2338 = vmatprep.subr.bf16.mxu0 0
    %2339 = vmatpush1.bf16.msra.mxu0 0
    %2340 = vmatprep.subr.bf16.mxu0 0
    %2341 = vmatpush1.bf16.msra.mxu0 0
    %2342 = vmatprep.subr.bf16.mxu0 0
    %2343 = vmatpush1.bf16.msra.mxu0 0
    %2344 = vmatprep.subr.bf16.mxu0 0
    %2345 = vmatpush1.bf16.msra.mxu0 0
    %2346 = vmatprep.subr.bf16.mxu0 0
    %2347 = vmatpush1.bf16.msra.mxu0 0
    %2348 = vmatprep.subr.bf16.mxu0 0
    %2349 = vmatpush1.bf16.msra.mxu0 0
    %2350 = vmatprep.subr.bf16.mxu0 0
    %2351 = vmatpush1.bf16.msra.mxu0 0
    %2352 = vmatprep.mubr.bf16.mxu0 0
    %2353 = vmatmul.mubr.bf16.gmra.mrb[0].mxu0 %v2318
    %v2354 = vpop.f32.mrb[0].mxu0
    %v2355 = vadd.f32 0.0, %v2354
    %v2356 = vpop.f32.mrb[0].mxu0
    %v2357 = vpop.f32.mrb[0].mxu0
    %v2358 = vadd.f32 0.0, %v2357
    %v2359 = vpop.f32.mrb[0].mxu0
    %2360 = vdwg.mxu0
    %2361 = vst.msk [vmem:[#allocation2 + $0x10] sm:$0xff] %vm1809, %v2355
    %2362 = vst.msk [vmem:[#allocation2 + $0x18] sm:$0xff] %vm1809, %v2358
    %2363 = vset.pattern.permute.xlu0 1
    %2364 = vperm.xlu0 %2363, %v1292
    %v2365 = vpop.permute.xlu0 %2364
    %2367 = vset.pattern.permute.xlu0 1
    %2368 = vperm.xlu0 %2367, %v1293
    %v2369 = vpop.permute.xlu0 %2368
    %v2371 = vsub.f32 %v2365, %v1954
    %v2372 = vsub.f32 %v2369, %v1954
    %2375 = vrot.lane.b32.xlu0 %v2371, 112
    %v2376 = vpop.permute.xlu0 %2375
    %2377 = vrot.lane.b32.xlu0 %v2372, 112
    %v2378 = vpop.permute.xlu0 %2377
    %v2381 = vsel %vm1803, %v2376, -1e+30
    %v2382 = vsel %vm1804, %v2378, -1e+30
    %v2383 = vmul.f32 %v2381, 1.442695
    %v2384 = vpow.pop %v2383
    %v2385 = vmul.f32 %v2382, 1.442695
    %v2386 = vpow.pop %v2385
    %v2387 = vmul.f32 %v2267, %v2384
    %v2388 = vmul.f32 %v2270, %v2386
    %2389 = vset.pattern.permute.xlu0 1
    %2390 = vperm.xlu0 %2389, %v1149
    %v2391 = vpop.permute.xlu0 %2390
    %2393 = vset.pattern.permute.xlu0 1
    %2394 = vperm.xlu0 %2393, %v1150
    %v2395 = vpop.permute.xlu0 %2394
    %v2397 = vmul.f32 %v478, %v2391
    %v2398 = vmul.f32 %v480, %v2395
    %v2399 = vpack.c.bf16 %v2388, %v2387
    %v2400 = vpack.c.bf16 %v2398, %v2397
    %2402 = vrot.lane.b32.xlu0 %v2400, 48
    %v2403 = vpop.permute.xlu0 %2402
    %v2406 = vsel %vm1809, %v2399, 0
    %2408 = vmatprep.subr.bf16.mxu0 0
    %2409 = vmatpush1.bf16.msra.mxu0 %v2403
    %2410 = vmatprep.subr.bf16.mxu0 0
    %2411 = vmatpush1.bf16.msra.mxu0 0
    %2412 = vmatprep.subr.bf16.mxu0 0
    %2413 = vmatpush1.bf16.msra.mxu0 0
    %2414 = vmatprep.subr.bf16.mxu0 0
    %2415 = vmatpush1.bf16.msra.mxu0 0
    %2416 = vmatprep.subr.bf16.mxu0 0
    %2417 = vmatpush1.bf16.msra.mxu0 0
    %2418 = vmatprep.subr.bf16.mxu0 0
    %2419 = vmatpush1.bf16.msra.mxu0 0
    %2420 = vmatprep.subr.bf16.mxu0 0
    %2421 = vmatpush1.bf16.msra.mxu0 0
    %2422 = vmatprep.subr.bf16.mxu0 0
    %2423 = vmatpush1.bf16.msra.mxu0 0
    %2424 = vmatprep.subr.bf16.mxu0 0
    %2425 = vmatpush1.bf16.msra.mxu0 0
    %2426 = vmatprep.subr.bf16.mxu0 0
    %2427 = vmatpush1.bf16.msra.mxu0 0
    %2428 = vmatprep.subr.bf16.mxu0 0
    %2429 = vmatpush1.bf16.msra.mxu0 0
    %2430 = vmatprep.subr.bf16.mxu0 0
    %2431 = vmatpush1.bf16.msra.mxu0 0
    %2432 = vmatprep.subr.bf16.mxu0 0
    %2433 = vmatpush1.bf16.msra.mxu0 0
    %2434 = vmatprep.subr.bf16.mxu0 0
    %2435 = vmatpush1.bf16.msra.mxu0 0
    %2436 = vmatprep.subr.bf16.mxu0 0
    %2437 = vmatpush1.bf16.msra.mxu0 0
    %2438 = vmatprep.subr.bf16.mxu0 0
    %2439 = vmatpush1.bf16.msra.mxu0 0
    %2440 = vmatprep.mubr.bf16.mxu0 0
    %2441 = vmatmul.mubr.bf16.gmra.mrb[0].mxu0 %v2406
    %v2442 = vpop.f32.mrb[0].mxu0
    %v2443 = vadd.f32 0.0, %v2442
    %v2444 = vpop.f32.mrb[0].mxu0
    %v2445 = vpop.f32.mrb[0].mxu0
    %v2446 = vadd.f32 0.0, %v2445
    %v2447 = vpop.f32.mrb[0].mxu0
    %2448 = vdwg.mxu0
    %2451 = vrot.lane.b32.xlu0 %v2443, 16
    %v2452 = vpop.permute.xlu0 %2451
    %2453 = vrot.lane.b32.xlu0 %v2446, 16
    %v2454 = vpop.permute.xlu0 %2453
    %2457 = vst.msk [vmem:[#allocation2 + $0x10] sm:$0xff] %vm2033, %v2452
    %2458 = vst.msk [vmem:[#allocation2 + $0x18] sm:$0xff] %vm2033, %v2454
    %2459 = vset.pattern.permute.xlu0 2
    %2460 = vperm.xlu0 %2459, %v1292
    %v2461 = vpop.permute.xlu0 %2460
    %2463 = vset.pattern.permute.xlu0 2
    %2464 = vperm.xlu0 %2463, %v1293
    %v2465 = vpop.permute.xlu0 %2464
    %v2467 = vsub.f32 %v2461, %v2047
    %v2468 = vsub.f32 %v2465, %v2047
    %2471 = vrot.lane.b32.xlu0 %v2467, 112
    %v2472 = vpop.permute.xlu0 %2471
    %2473 = vrot.lane.b32.xlu0 %v2468, 112
    %v2474 = vpop.permute.xlu0 %2473
    %v2477 = vsel %vm1803, %v2472, -1e+30
    %v2478 = vsel %vm1804, %v2474, -1e+30
    %v2479 = vmul.f32 %v2477, 1.442695
    %v2480 = vpow.pop %v2479
    %v2481 = vmul.f32 %v2478, 1.442695
    %v2482 = vpow.pop %v2481
    %v2483 = vmul.f32 %v2267, %v2480
    %v2484 = vmul.f32 %v2270, %v2482
    %2485 = vset.pattern.permute.xlu0 2
    %2486 = vperm.xlu0 %2485, %v1149
    %v2487 = vpop.permute.xlu0 %2486
    %2489 = vset.pattern.permute.xlu0 2
    %2490 = vperm.xlu0 %2489, %v1150
    %v2491 = vpop.permute.xlu0 %2490
    %v2493 = vmul.f32 %v478, %v2487
    %v2494 = vmul.f32 %v480, %v2491
    %v2495 = vpack.c.bf16 %v2484, %v2483
    %v2496 = vpack.c.bf16 %v2494, %v2493
    %2498 = vrot.lane.b32.xlu0 %v2496, 32
    %v2499 = vpop.permute.xlu0 %2498
    %v2502 = vsel %vm1809, %v2495, 0
    %2504 = vmatprep.subr.bf16.mxu0 0
    %2505 = vmatpush1.bf16.msra.mxu0 %v2499
    %2506 = vmatprep.subr.bf16.mxu0 0
    %2507 = vmatpush1.bf16.msra.mxu0 0
    %2508 = vmatprep.subr.bf16.mxu0 0
    %2509 = vmatpush1.bf16.msra.mxu0 0
    %2510 = vmatprep.subr.bf16.mxu0 0
    %2511 = vmatpush1.bf16.msra.mxu0 0
    %2512 = vmatprep.subr.bf16.mxu0 0
    %2513 = vmatpush1.bf16.msra.mxu0 0
    %2514 = vmatprep.subr.bf16.mxu0 0
    %2515 = vmatpush1.bf16.msra.mxu0 0
    %2516 = vmatprep.subr.bf16.mxu0 0
    %2517 = vmatpush1.bf16.msra.mxu0 0
    %2518 = vmatprep.subr.bf16.mxu0 0
    %2519 = vmatpush1.bf16.msra.mxu0 0
    %2520 = vmatprep.subr.bf16.mxu0 0
    %2521 = vmatpush1.bf16.msra.mxu0 0
    %2522 = vmatprep.subr.bf16.mxu0 0
    %2523 = vmatpush1.bf16.msra.mxu0 0
    %2524 = vmatprep.subr.bf16.mxu0 0
    %2525 = vmatpush1.bf16.msra.mxu0 0
    %2526 = vmatprep.subr.bf16.mxu0 0
    %2527 = vmatpush1.bf16.msra.mxu0 0
    %2528 = vmatprep.subr.bf16.mxu0 0
    %2529 = vmatpush1.bf16.msra.mxu0 0
    %2530 = vmatprep.subr.bf16.mxu0 0
    %2531 = vmatpush1.bf16.msra.mxu0 0
    %2532 = vmatprep.subr.bf16.mxu0 0
    %2533 = vmatpush1.bf16.msra.mxu0 0
    %2534 = vmatprep.subr.bf16.mxu0 0
    %2535 = vmatpush1.bf16.msra.mxu0 0
    %2536 = vmatprep.mubr.bf16.mxu0 0
    %2537 = vmatmul.mubr.bf16.gmra.mrb[0].mxu0 %v2502
    %v2538 = vpop.f32.mrb[0].mxu0
    %v2539 = vadd.f32 0.0, %v2538
    %v2540 = vpop.f32.mrb[0].mxu0
    %v2541 = vpop.f32.mrb[0].mxu0
    %v2542 = vadd.f32 0.0, %v2541
    %v2543 = vpop.f32.mrb[0].mxu0
    %2544 = vdwg.mxu0
    %2547 = vrot.lane.b32.xlu0 %v2539, 32
    %v2548 = vpop.permute.xlu0 %2547
    %2549 = vrot.lane.b32.xlu0 %v2542, 32
    %v2550 = vpop.permute.xlu0 %2549
    %2553 = vst.msk [vmem:[#allocation2 + $0x10] sm:$0xff] %vm2126, %v2548
    %2554 = vst.msk [vmem:[#allocation2 + $0x18] sm:$0xff] %vm2126, %v2550
    %2555 = vset.pattern.permute.xlu0 3
    %2556 = vperm.xlu0 %2555, %v1292
    %v2557 = vpop.permute.xlu0 %2556
    %2559 = vset.pattern.permute.xlu0 3
    %2560 = vperm.xlu0 %2559, %v1293
    %v2561 = vpop.permute.xlu0 %2560
    %v2563 = vsub.f32 %v2557, %v2140
    %v2564 = vsub.f32 %v2561, %v2140
    %2567 = vrot.lane.b32.xlu0 %v2563, 112
    %v2568 = vpop.permute.xlu0 %2567
    %2569 = vrot.lane.b32.xlu0 %v2564, 112
    %v2570 = vpop.permute.xlu0 %2569
    %v2573 = vsel %vm1803, %v2568, -1e+30
    %v2574 = vsel %vm1804, %v2570, -1e+30
    %v2575 = vmul.f32 %v2573, 1.442695
    %v2576 = vpow.pop %v2575
    %v2577 = vmul.f32 %v2574, 1.442695
    %v2578 = vpow.pop %v2577
    %v2579 = vmul.f32 %v2267, %v2576
    %v2580 = vmul.f32 %v2270, %v2578
    %2581 = vset.pattern.permute.xlu0 3
    %2582 = vperm.xlu0 %2581, %v1149
    %v2583 = vpop.permute.xlu0 %2582
    %2585 = vset.pattern.permute.xlu0 3
    %2586 = vperm.xlu0 %2585, %v1150
    %v2587 = vpop.permute.xlu0 %2586
    %v2589 = vmul.f32 %v478, %v2583
    %v2590 = vmul.f32 %v480, %v2587
    %v2591 = vpack.c.bf16 %v2580, %v2579
    %v2592 = vpack.c.bf16 %v2590, %v2589
    %2594 = vrot.lane.b32.xlu0 %v2592, 16
    %v2595 = vpop.permute.xlu0 %2594
    %v2598 = vsel %vm1809, %v2591, 0
    %2600 = vmatprep.subr.bf16.mxu0 0
    %2601 = vmatpush1.bf16.msra.mxu0 %v2595
    %2602 = vmatprep.subr.bf16.mxu0 0
    %2603 = vmatpush1.bf16.msra.mxu0 0
    %2604 = vmatprep.subr.bf16.mxu0 0
    %2605 = vmatpush1.bf16.msra.mxu0 0
    %2606 = vmatprep.subr.bf16.mxu0 0
    %2607 = vmatpush1.bf16.msra.mxu0 0
    %2608 = vmatprep.subr.bf16.mxu0 0
    %2609 = vmatpush1.bf16.msra.mxu0 0
    %2610 = vmatprep.subr.bf16.mxu0 0
    %2611 = vmatpush1.bf16.msra.mxu0 0
    %2612 = vmatprep.subr.bf16.mxu0 0
    %2613 = vmatpush1.bf16.msra.mxu0 0
    %2614 = vmatprep.subr.bf16.mxu0 0
    %2615 = vmatpush1.bf16.msra.mxu0 0
    %2616 = vmatprep.subr.bf16.mxu0 0
    %2617 = vmatpush1.bf16.msra.mxu0 0
    %2618 = vmatprep.subr.bf16.mxu0 0
    %2619 = vmatpush1.bf16.msra.mxu0 0
    %2620 = vmatprep.subr.bf16.mxu0 0
    %2621 = vmatpush1.bf16.msra.mxu0 0
    %2622 = vmatprep.subr.bf16.mxu0 0
    %2623 = vmatpush1.bf16.msra.mxu0 0
    %2624 = vmatprep.subr.bf16.mxu0 0
    %2625 = vmatpush1.bf16.msra.mxu0 0
    %2626 = vmatprep.subr.bf16.mxu0 0
    %2627 = vmatpush1.bf16.msra.mxu0 0
    %2628 = vmatprep.subr.bf16.mxu0 0
    %2629 = vmatpush1.bf16.msra.mxu0 0
    %2630 = vmatprep.subr.bf16.mxu0 0
    %2631 = vmatpush1.bf16.msra.mxu0 0
    %2632 = vmatprep.mubr.bf16.mxu0 0
    %2633 = vmatmul.mubr.bf16.gmra.mrb[0].mxu0 %v2598
    %v2634 = vpop.f32.mrb[0].mxu0
    %v2635 = vadd.f32 0.0, %v2634
    %v2636 = vpop.f32.mrb[0].mxu0
    %v2637 = vpop.f32.mrb[0].mxu0
    %v2638 = vadd.f32 0.0, %v2637
    %v2639 = vpop.f32.mrb[0].mxu0
    %2640 = vdwg.mxu0
    %2643 = vrot.lane.b32.xlu0 %v2635, 48
    %v2644 = vpop.permute.xlu0 %2643
    %2645 = vrot.lane.b32.xlu0 %v2638, 48
    %v2646 = vpop.permute.xlu0 %2645
    %2649 = vst.msk [vmem:[#allocation2 + $0x10] sm:$0xff] %vm2219, %v2644
    %2650 = vst.msk [vmem:[#allocation2 + $0x18] sm:$0xff] %vm2219, %v2646
    %v2651 = vld [vmem:[#allocation2] sm:$0xff]
    %v2652 = vld [vmem:[#allocation2 + $0x8] sm:$0xff]
    %v2653 = vld [vmem:[#allocation2 + $0x10] sm:$0xff]
    %v2654 = vld [vmem:[#allocation2 + $0x18] sm:$0xff]
    %v2655 = vld [vmem:[%s8] sm:$0x1]
    %v2657 = vlaneseq
    %v2658 = vshrl.u32 %v2657, 7
    %v2659 = vsub.s32 0, %v2658
    %v2660 = vrot.slane %v2655, %v2659
    %2661 = vrot.lane.b32.xlu0 %v2660, 64
    %v2662 = vpop.permute.xlu0 %2661
    %v2664 = vmul.f32 %v474, %v2662
    %v2665 = vmul.f32 %v476, %v2662
    %v2666 = vmul.f32 %v478, %v2662
    %v2667 = vmul.f32 %v480, %v2662
    %2672 = vrot.lane.b32.xlu0 %v2664, 64
    %v2673 = vpop.permute.xlu0 %2672
    %2674 = vrot.lane.b32.xlu0 %v2665, 64
    %v2675 = vpop.permute.xlu0 %2674
    %2676 = vrot.lane.b32.xlu0 %v2666, 64
    %v2677 = vpop.permute.xlu0 %2676
    %2678 = vrot.lane.b32.xlu0 %v2667, 64
    %v2679 = vpop.permute.xlu0 %2678
    %v2684 = vadd.f32 %v2651, %v2673
    %v2685 = vadd.f32 %v2652, %v2675
    %v2686 = vadd.f32 %v2653, %v2677
    %v2687 = vadd.f32 %v2654, %v2679
    %v2688 = vsub.f32 0.0, %v113
    %v2689 = vsub.f32 0.0, %v117
    %v2690 = vsub.f32 0.0, %v123
    %v2691 = vsub.f32 0.0, %v127
    %v2692 = vmul.f32 %v2688, 1.442695
    %v2693 = vpow.pop %v2692
    %v2694 = vmul.f32 %v2689, 1.442695
    %v2695 = vpow.pop %v2694
    %v2696 = vmul.f32 %v2690, 1.442695
    %v2697 = vpow.pop %v2696
    %v2698 = vmul.f32 %v2691, 1.442695
    %v2699 = vpow.pop %v2698
    %v2700 = vadd.f32 %v2693, 1.0
    %v2701 = vadd.f32 %v2695, 1.0
    %v2702 = vadd.f32 %v2697, 1.0
    %v2703 = vadd.f32 %v2699, 1.0
    %v2704 = vrcp.pop %v2700
    %v2705 = vmul.f32 1.0, %v2704
    %v2706 = vrcp.pop %v2701
    %v2707 = vmul.f32 1.0, %v2706
    %v2708 = vrcp.pop %v2702
    %v2709 = vmul.f32 1.0, %v2708
    %v2710 = vrcp.pop %v2703
    %v2711 = vmul.f32 1.0, %v2710
    %v2712 = vmul.f32 %v113, %v2705
    %v2713 = vmul.f32 %v117, %v2707
    %v2714 = vmul.f32 %v123, %v2709
    %v2715 = vmul.f32 %v127, %v2711
    %v2716 = vmul.f32 %v2684, %v2712
    %v2717 = vmul.f32 %v2685, %v2713
    %v2718 = vmul.f32 %v2686, %v2714
    %v2719 = vmul.f32 %v2687, %v2715
    %v2720 = vmul.f32 %v2716, %v2716
    %v2721 = vmul.f32 %v2717, %v2717
    %v2722 = vmul.f32 %v2718, %v2718
    %v2723 = vmul.f32 %v2719, %v2719
    %vm2724 = vcmask 523264
    %v2725 = vsel %vm2724, %v2720, 0.0
    %2726 = vadd.xlane.f32.xlu0 %v2725
    %v2727 = vpop.xlane.xlu0 %2726
    %v2728 = vsel %vm2724, %v2721, 0.0
    %2729 = vadd.xlane.f32.xlu0 %v2728
    %v2730 = vpop.xlane.xlu0 %2729
    %v2731 = vsel %vm2724, %v2722, 0.0
    %2732 = vadd.xlane.f32.xlu0 %v2731
    %v2733 = vpop.xlane.xlu0 %2732
    %v2734 = vsel %vm2724, %v2723, 0.0
    %2735 = vadd.xlane.f32.xlu0 %v2734
    %v2736 = vpop.xlane.xlu0 %2735
    %v2737 = vrcp.pop 64.0
    %v2738 = vmul.f32 %v2727, %v2737
    %v2739 = vmul.f32 %v2730, %v2737
    %v2740 = vmul.f32 %v2733, %v2737
    %v2741 = vmul.f32 %v2736, %v2737
    %v2742 = vadd.f32 %v2738, 1e-05
    %v2743 = vadd.f32 %v2739, 1e-05
    %v2744 = vadd.f32 %v2740, 1e-05
    %v2745 = vadd.f32 %v2741, 1e-05
    %v2746 = vrsqrt.pop %v2742
    %v2747 = vrsqrt.pop %v2743
    %v2748 = vrsqrt.pop %v2744
    %v2749 = vrsqrt.pop %v2745
    %v2750 = vmul.f32 %v2716, %v2746
    %v2751 = vmul.f32 %v2717, %v2747
    %v2752 = vmul.f32 %v2718, %v2748
    %v2753 = vmul.f32 %v2719, %v2749
    %v2754 = vld [vmem:[%s9] sm:$0x1]
    %v2756 = vlaneseq
    %v2757 = vshrl.u32 %v2756, 7
    %v2758 = vsub.s32 0, %v2757
    %v2759 = vrot.slane %v2754, %v2758
    %v2761 = vmul.f32 %v2750, %v2759
    %v2762 = vmul.f32 %v2751, %v2759
    %v2763 = vmul.f32 %v2752, %v2759
    %v2764 = vmul.f32 %v2753, %v2759
    %2765 = vst.msk [vmem:[#allocation3] sm:$0xff] %vm2724, %v2761
    %2766 = vst.msk [vmem:[#allocation3 + $0x8] sm:$0xff] %vm2724, %v2762
    %2767 = vst.msk [vmem:[#allocation3 + $0x10] sm:$0xff] %vm2724, %v2763
    %2768 = vst.msk [vmem:[#allocation3 + $0x18] sm:$0xff] %vm2724, %v2764
    // Predicated region
    $region42: #{tpu_custom_call.1} parent=1 // pred_check
      _
    $region43: #{tpu_custom_call.1} parent=1 // pred_check_branch
      %2770 = sbr.rel (0) target = $region45
    $region44: #{tpu_custom_call.1} parent=1 // pred_region
      %s2772 = ssub.s32 512, 512
      %2773 = vsyncadd [#allocation4], %s2772
      %s2774 = sshll.u32 [#allocation3], 4
      %s2775 = int_to_ptr.vmem [resolvable:$true] %s2774
      %2780 = dma.vmem_to_hbm [thread:$0]  %s2775, 512, %s10, [#allocation4], 128, 128, 8
    $region45: #{tpu_custom_call.1} parent=1 // pred_fallthru
      _
    // Predicated region
    $region46: #{tpu_custom_call.1} parent=1 // pred_check
      _
    $region47: #{tpu_custom_call.1} parent=1 // pred_check_branch
      %2782 = sbr.rel (0) target = $region49
    $region48: #{tpu_custom_call.1} parent=1 // pred_region
      %2783 = dma.done [#allocation4], 512
    $region49: #{tpu_custom_call.1} parent=1 // pred_fallthru
      _
    %2784 = vsyncpa [#allocation4], 1

</llo_original>
